<compile_context>
chip_gen: v7x
topology: tpu7x:2x2x1
jax: 0.10.0
libtpu: 0.0.40
codegen_flags: <defaults>
</compile_context>

<pallas_src>
import functools
import numpy as np

import jax
import jax.numpy as jnp
from jax.experimental import pallas as pl
from jax.experimental.pallas import tpu as pltpu


# ----------------------------- Pallas kernels ------------------------------

def _conv_t_kernel(w_ref, b_ref, p_ref, o_ref):
    """(Cout, K)bf16 @ (K, M)bf16 -> f32; + bias; ReLU; cast.  Lane-dense out."""
    acc = jnp.dot(w_ref[...], p_ref[...], preferred_element_type=jnp.float32)
    o_ref[...] = jnp.maximum(acc + b_ref[...], 0.0).astype(o_ref.dtype)


def _conv_t_pool_kernel(w_ref, b_ref, p_ref, o_ref, *, inv_m):
    """Last conv layer: matmul + bias + ReLU, then fused global average pool."""
    acc = jnp.dot(w_ref[...], p_ref[...], preferred_element_type=jnp.float32)
    act = jnp.maximum(acc + b_ref[...], 0.0)                      # (Cout, M) f32
    o_ref[...] = jnp.sum(act, axis=1, keepdims=True) * inv_m      # (Cout, 1)


def conv_transposed(patches, w_t, b_col, out_dtype=jnp.bfloat16):
    """patches: (N, K, M) bf16; w_t: (Cout, K) bf16; b_col: (Cout, 1) f32.
    Returns (N, Cout, M) activations.  One grid step per image (whole-M tile)."""
    n, k, m = patches.shape
    cout = w_t.shape[0]
    return pl.pallas_call(
        _conv_t_kernel,
        out_shape=jax.ShapeDtypeStruct((n, cout, m), out_dtype),
        grid=(n,),
        in_specs=[
            pl.BlockSpec((cout, k), lambda i: (0, 0)),       # weights resident
            pl.BlockSpec((cout, 1), lambda i: (0, 0)),       # bias resident
            pl.BlockSpec((None, k, m), lambda i: (i, 0, 0)),
        ],
        out_specs=pl.BlockSpec((None, cout, m), lambda i: (i, 0, 0)),
        compiler_params=pltpu.CompilerParams(
            dimension_semantics=("parallel",)),
    )(w_t, b_col, patches)


def conv_transposed_pool(patches, w_t, b_col):
    """Same as conv_transposed but fuses the global avg pool: -> (N, Cout, 1) f32."""
    n, k, m = patches.shape
    cout = w_t.shape[0]
    kernel = functools.partial(_conv_t_pool_kernel, inv_m=1.0 / m)
    return pl.pallas_call(
        kernel,
        out_shape=jax.ShapeDtypeStruct((n, cout, 1), jnp.float32),
        grid=(n,),
        in_specs=[
            pl.BlockSpec((cout, k), lambda i: (0, 0)),
            pl.BlockSpec((cout, 1), lambda i: (0, 0)),
            pl.BlockSpec((None, k, m), lambda i: (i, 0, 0)),
        ],
        out_specs=pl.BlockSpec((None, cout, 1), lambda i: (i, 0, 0)),
        compiler_params=pltpu.CompilerParams(
            dimension_semantics=("parallel",)),
    )(w_t, b_col, patches)


def _head_kernel(x_ref, w1_ref, b1_ref, w2_ref, b2_ref, o_ref, *, n_scales):
    """Linear(32,100) -> (Dropout=id) -> Linear(100,10) per scale; max over scales.

    Single grid step; the (small, static) scale loop is unrolled in-kernel so
    there is no cross-step output read-modify-write."""
    w1 = w1_ref[...]
    b1 = b1_ref[...]
    w2 = w2_ref[...]
    b2 = b2_ref[...]

    def scale_logits(s):
        h = jnp.dot(x_ref[s], w1, preferred_element_type=jnp.float32) + b1    # (B,100)
        return jnp.dot(h, w2, preferred_element_type=jnp.float32) + b2        # (B, 10)

    out = scale_logits(0)
    for s in range(1, n_scales):
        out = jnp.maximum(out, scale_logits(s))
    o_ref[...] = out


def head_linear_max(pooled, w1, b1, w2, b2):
    """pooled: (S, B, 32) f32 -> (B, 10): max over scales of classifier(linear(gap))."""
    s, b, c = pooled.shape
    h1 = w1.shape[1]
    nc = w2.shape[1]
    kernel = functools.partial(_head_kernel, n_scales=s)
    return pl.pallas_call(
        kernel,
        out_shape=jax.ShapeDtypeStruct((b, nc), jnp.float32),
        grid=(1,),
        in_specs=[
            pl.BlockSpec((s, b, c), lambda i: (0, 0, 0)),
            pl.BlockSpec((c, h1), lambda i: (0, 0)),
            pl.BlockSpec((1, h1), lambda i: (0, 0)),
            pl.BlockSpec((h1, nc), lambda i: (0, 0)),
            pl.BlockSpec((1, nc), lambda i: (0, 0)),
        ],
        out_specs=pl.BlockSpec((b, nc), lambda i: (0, 0)),
        compiler_params=pltpu.CompilerParams(
            dimension_semantics=("arbitrary",)),
    )(pooled, w1, b1.reshape(1, h1), w2, b2.reshape(1, nc))


# ------------------------------ JAX glue ops --------------------------------

def pad_to_size(a, size):
    """Matches the PyTorch pad_to_size (F.pad on last two dims, zeros)."""
    ph = size[0] - a.shape[-2]
    pw = size[1] - a.shape[-1]
    pt, pb = ph // 2, ph - ph // 2
    pleft, pright = pw // 2, pw - pw // 2
    return jnp.pad(a, ((0, 0), (0, 0), (pt, pb), (pleft, pright)))


def _center_crop(x, size):
    """torchvision.transforms.CenterCrop semantics (pads first if too small)."""
    h, w = x.shape[-2], x.shape[-1]
    if h < size or w < size:
        x = pad_to_size(x, (max(h, size), max(w, size)))
        h, w = x.shape[-2], x.shape[-1]
    top = int(round((h - size) / 2.0))
    left = int(round((w - size) / 2.0))
    return x[..., top:top + size, left:left + size]


def _resize_bilinear_nchw(x, out_h, out_w):
    """F.interpolate(mode='bilinear', align_corners=False) on NCHW."""
    n, c, h, w = x.shape

    def idx(out_size, in_size):
        scale = in_size / out_size
        d = jnp.arange(out_size, dtype=jnp.float32)
        s = jnp.maximum((d + 0.5) * scale - 0.5, 0.0)
        i0 = jnp.minimum(jnp.floor(s).astype(jnp.int32), in_size - 1)
        i1 = jnp.minimum(i0 + 1, in_size - 1)
        lam = s - i0.astype(jnp.float32)
        return i0, i1, lam

    r0, r1, lr = idx(out_h, h)
    c0, c1, lc = idx(out_w, w)
    xr = (x[:, :, r0, :] * (1.0 - lr)[None, None, :, None]
          + x[:, :, r1, :] * lr[None, None, :, None])
    out = xr[:, :, :, c0] * (1.0 - lc) + xr[:, :, :, c1] * lc
    return out


def make_ip(x, ip_scales, scale=4, base=112):
    """Image pyramid, each level padded/cropped back to (base, base)."""
    x = _center_crop(x, base)
    if ip_scales == 1:
        image_scales = [float(base)]
    elif ip_scales == 2:
        image_scales = [float(base), float(np.ceil(base * 2 ** (1 / scale)))]
    else:
        down = [np.ceil(base / 2 ** (i / scale))
                for i in range(int(np.ceil(ip_scales / 2)))]
        up = [np.ceil(base * 2 ** (i / scale))
              for i in range(1, int(np.ceil(ip_scales / 2)))]
        image_scales = down + up
    order = np.argsort(image_scales)[::-1]
    image_scales = [image_scales[i] for i in order]

    pyramid = []
    for i_s in image_scales:
        i_s = int(i_s)
        img = jnp.clip(_resize_bilinear_nchw(x, i_s, i_s), 0.0, 1.0)
        if i_s <= base:
            img = pad_to_size(img, (base, base))
        else:
            img = _center_crop(img, base)
        pyramid.append(img)
    return pyramid


def im2col_chw(x, k, stride):
    """x: (N, C, H, W) -> (N, k*k*C, Ho*Wo); K index = (ky*k + kx)*C + ci.
    Output spatial positions (lane axis) are row-major over (Ho, Wo)."""
    n, c, h, w = x.shape
    ho = (h - k) // stride + 1
    wo = (w - k) // stride + 1
    cols = []
    for ky in range(k):
        for kx in range(k):
            cols.append(x[:, :, ky:ky + stride * (ho - 1) + 1:stride,
                          kx:kx + stride * (wo - 1) + 1:stride])
    patches = jnp.stack(cols, axis=1)                 # (N, k*k, C, Ho, Wo)
    return patches.reshape(n, k * k * c, ho * wo), ho, wo


def fold_conv_bn(w, b, gamma, beta, mean, var, eps=1e-3):
    """Fold eval-mode BatchNorm into the conv; return transposed-matmul weight.

    Returns w_t (Cout, k*k*Cin) bf16 with K ordering (ky, kx, ci), matching
    im2col_chw, and bias column (Cout, 1) f32.
    """
    scale = gamma / jnp.sqrt(var + eps)
    w_f = w * scale[:, None, None, None]              # (Cout, Cin, KH, KW)
    b_f = (b - mean) * scale + beta
    cout, cin, kh, kw = w.shape
    w_t = jnp.transpose(w_f, (0, 2, 3, 1)).reshape(cout, kh * kw * cin)
    return w_t.astype(jnp.bfloat16), b_f.reshape(cout, 1).astype(jnp.float32)


# ---------------------------- parameter setup -------------------------------

def init_params(key):
    keys = jax.random.split(key, 16)

    def conv_init(kw, kb, cout, cin, k=3):
        w = jax.random.normal(kw, (cout, cin, k, k), jnp.float32) / np.sqrt(cin * k * k)
        b = 0.01 * jax.random.normal(kb, (cout,), jnp.float32)
        return w, b

    def bn_init(kk, c):
        k1, k2, k3, k4 = jax.random.split(kk, 4)
        gamma = 1.0 + 0.1 * jax.random.normal(k1, (c,), jnp.float32)
        beta = 0.05 * jax.random.normal(k2, (c,), jnp.float32)
        mean = 0.05 * jax.random.normal(k3, (c,), jnp.float32)
        var = jax.random.uniform(k4, (c,), jnp.float32, minval=0.5, maxval=1.5)
        return gamma, beta, mean, var

    # conv_bn_relu_seq: (1->16, s1), (16->16, s2), (16->32, s1), (32->32, s2)
    layer_cfg = [(1, 16, 1), (16, 16, 2), (16, 32, 1), (32, 32, 2)]
    conv_layers = []
    for li, (cin, cout, stride) in enumerate(layer_cfg):
        w, b = conv_init(keys[2 * li], keys[2 * li + 1], cout, cin)
        gamma, beta, mean, var = bn_init(keys[8 + li], cout)
        w_t, b_col = fold_conv_bn(w, b, gamma, beta, mean, var, eps=1e-3)
        conv_layers.append((w_t, b_col, stride))

    # linear_layer: Linear(32, 100); classifier: Linear(100, 10)  (torch stores (out, in))
    w1_t = jax.random.normal(keys[12], (100, 32), jnp.float32) / np.sqrt(32.0)
    b1 = 0.01 * jax.random.normal(keys[13], (100,), jnp.float32)
    w2_t = jax.random.normal(keys[14], (10, 100), jnp.float32) / np.sqrt(100.0)
    b2 = 0.01 * jax.random.normal(keys[15], (10,), jnp.float32)

    return {
        "conv_layers": conv_layers,
        "w1": jnp.transpose(w1_t), "b1": b1,   # (32, 100)
        "w2": jnp.transpose(w2_t), "b2": b2,   # (100, 10)
    }


# ------------------------------- forward ------------------------------------

def fov_max_forward(x, params, ip_scales=5):
    """x: (B, C, H, W) float32 in [0, 1].  Returns (logits (B, 10), [], 0.0)."""
    if x.shape[1] == 3:
        x = x[:, 0:1]

    pyramid = make_ip(x, ip_scales)                        # list of (B, 1, 112, 112)
    s = len(pyramid)
    b = x.shape[0]
    feats = jnp.stack(pyramid, axis=0).reshape(s * b, 1, 112, 112)   # NCHW, s-major
    feats = feats.astype(jnp.bfloat16)

    layers = params["conv_layers"]
    pooled = None
    for li, (w_t, b_col, stride) in enumerate(layers):
        patches, ho, wo = im2col_chw(feats, 3, stride)     # (S*B, K, Ho*Wo) bf16
        if li < len(layers) - 1:
            out = conv_transposed(patches, w_t, b_col)     # (S*B, Cout, Ho*Wo) bf16
            feats = out.reshape(s * b, w_t.shape[0], ho, wo)
        else:
            pooled = conv_transposed_pool(patches, w_t, b_col)   # (S*B, 32, 1) f32

    pooled = pooled.reshape(s, b, -1)                      # (S, B, 32)
    logits = head_linear_max(pooled, params["w1"], params["b1"],
                             params["w2"], params["b2"])
    max_scale_index = []
    correct_scale_loss = 0.0
    return logits, max_scale_index, correct_scale_loss


# --------------------------------- main --------------------------------------

if __name__ == "__main__":
    key = jax.random.PRNGKey(0)
    kx, kp = jax.random.split(key)

    # Grayscale image batch (NCHW); make_ip center-crops it to 112x112.
    x = jax.random.uniform(kx, (2, 1, 128, 128), dtype=jnp.float32)
    params = init_params(kp)

    # Small pyramid (ip_scales=5 -> 5 levels) to keep the demo light.
    logits, max_scale_index, correct_scale_loss = fov_max_forward(x, params, ip_scales=5)
    logits = jax.block_until_ready(logits)

    assert logits.shape == (2, 10) and logits.dtype == jnp.float32
    assert bool(jnp.all(jnp.isfinite(logits)))
    print("KERNEL_OK")
</pallas_src>

<mosaic_0001>
module attributes {stable_mosaic.version = 11 : i64} {
  func.func @_conv_t_kernel(%arg0: i32, %arg1: memref<16x9xbf16, #tpu.memory_space<vmem>>, %arg2: memref<16x1xf32, #tpu.memory_space<vmem>>, %arg3: memref<1x9x12100xbf16, #tpu.memory_space<vmem>>, %arg4: memref<1x16x12100xbf16, #tpu.memory_space<vmem>>) attributes {dimension_semantics = [#tpu.dimension_semantics<parallel>], iteration_bounds = array<i64: 10>, scalar_prefetch = 0 : i64, scratch_operands = 0 : i64, tpu.core_type = #tpu.core_type<tc>, window_params = [{pipeline_mode = #tpu.pipeline_mode<synchronous>, transform_indices = @transform_0, window_bounds = array<i64: 16, 9>}, {pipeline_mode = #tpu.pipeline_mode<synchronous>, transform_indices = @transform_1, window_bounds = array<i64: 16, 1>}, {transform_indices = @transform_2, window_bounds = array<i64: 1, 9, 12100>}, {transform_indices = @transform_3, window_bounds = array<i64: 1, 16, 12100>}]} {
    %c0 = arith.constant 0 : index
    %c0_0 = arith.constant 0 : index
    %0 = vector.load %arg1[%c0, %c0_0] : memref<16x9xbf16, #tpu.memory_space<vmem>>, vector<16x9xbf16>
    %c0_1 = arith.constant 0 : index
    %c0_2 = arith.constant 0 : index
    %c0_3 = arith.constant 0 : index
    %1 = vector.load %arg3[%c0_1, %c0_2, %c0_3] : memref<1x9x12100xbf16, #tpu.memory_space<vmem>>, vector<1x9x12100xbf16>
    %2 = vector.shape_cast %1 : vector<1x9x12100xbf16> to vector<9x12100xbf16>
    %cst = arith.constant dense<0.000000e+00> : vector<16x12100xf32>
    %3 = tpu.matmul %0, %2, %cst {dimension_numbers = #tpu.dot_dimension_numbers<[1], [0], [0], [1], [0, 0, 1, 1], [], []>} : vector<16x9xbf16>, vector<9x12100xbf16>, vector<16x12100xf32> -> vector<16x12100xf32>
    %c0_4 = arith.constant 0 : index
    %c0_5 = arith.constant 0 : index
    %4 = vector.load %arg2[%c0_4, %c0_5] : memref<16x1xf32, #tpu.memory_space<vmem>>, vector<16x1xf32>
    %5 = vector.broadcast %4 : vector<16x1xf32> to vector<16x12100xf32>
    %6 = arith.addf %3, %5 : vector<16x12100xf32>
    %cst_6 = arith.constant 0.000000e+00 : f32
    %7 = vector.broadcast %cst_6 : f32 to vector<16x12100xf32>
    %8 = arith.maximumf %6, %7 : vector<16x12100xf32>
    %9 = arith.truncf %8 : vector<16x12100xf32> to vector<16x12100xbf16>
    %c0_7 = arith.constant 0 : index
    %c0_8 = arith.constant 0 : index
    %c0_9 = arith.constant 0 : index
    %10 = vector.load %arg4[%c0_7, %c0_8, %c0_9] : memref<1x16x12100xbf16, #tpu.memory_space<vmem>>, vector<1x16x12100xbf16>
    %11 = vector.shape_cast %10 : vector<1x16x12100xbf16> to vector<16x12100xbf16>
    %12 = vector.shape_cast %9 : vector<16x12100xbf16> to vector<1x16x12100xbf16>
    tpu.vector_store %arg4[%c0_7, %c0_8, %c0_9], %12 {strides = array<i32>} : memref<1x16x12100xbf16, #tpu.memory_space<vmem>>, vector<1x16x12100xbf16>,
    return
  }
  func.func @transform_0(%arg0: i32) -> (i32, i32) {
    %c0_i32 = arith.constant 0 : i32
    %c0_i32_0 = arith.constant 0 : i32
    %c0_i32_1 = arith.constant 0 : i32
    return %c0_i32, %c0_i32_0 : i32, i32
  }
  func.func @transform_1(%arg0: i32) -> (i32, i32) {
    %c0_i32 = arith.constant 0 : i32
    %c0_i32_0 = arith.constant 0 : i32
    %c0_i32_1 = arith.constant 0 : i32
    return %c0_i32, %c0_i32_0 : i32, i32
  }
  func.func @transform_2(%arg0: i32) -> (i32, i32, i32) {
    %c0_i32 = arith.constant 0 : i32
    %c0_i32_0 = arith.constant 0 : i32
    %c0_i32_1 = arith.constant 0 : i32
    return %arg0, %c0_i32, %c0_i32_0 : i32, i32, i32
  }
  func.func @transform_3(%arg0: i32) -> (i32, i32, i32) {
    %c0_i32 = arith.constant 0 : i32
    %c0_i32_0 = arith.constant 0 : i32
    %c0_i32_1 = arith.constant 0 : i32
    return %arg0, %c0_i32, %c0_i32_0 : i32, i32, i32
  }
}

</mosaic_0001>

<llo_original>
// kernel: tpu_custom_call.1
$region0: #{tpu_custom_call.1}
  #allocation0 [shape = 'u32[]', space=smem, size = 0x4, offset = 0x4, fixed_abs, tag = 'smem constant byte address 0x4 - core index']
  #allocation1 [shape = 'u32[144,128]{1,0:T(1,128)}', space=vmem, size = 0x12000, scoped, tag = 'internal scratch']
  %s0 = inlined_call_operand.vmem [shape: bf16[16,9], index: 0, kind: input, shape index: {}]
  %s1 = inlined_call_operand.vmem [shape: f32[16,1], index: 1, kind: input, shape index: {}]
  %s2 = inlined_call_operand.vmem [shape: bf16[10,9,12100], index: 2, kind: input, shape index: {}]
  %s3 = inlined_call_operand.hbm [shape: bf16[10,16,12100], index: 3, kind: output, shape index: {}]
  %s4 = sld [smem:[#allocation0]]
  $region45: #{tpu_custom_call.1} parent=0
    _
  %s6 = ssub.s32 1, %s4
  %s7 = scalar_select 0, %s6, %s4
  $region1: #{tpu_custom_call.1} parent=0
    #allocation2 [shape = 'u8[778240]{0}', space=vmem, size = 0xbe000, scoped, tag = 'output window, operand 0']
    #allocation3 [shape = 's32[2]{0}', space=sflag, size = 0x8, scoped, tag = 'scoped memory for tpu_custom_call.1']
    %8 = vsyncpa [#allocation3], 0
    %s9 = scalar_lea.sflag [#allocation3], 1
    %10 = vsyncpa %s9, 0
    loop: start=0, step=1, limit=12
    $region2: #{tpu_custom_call.1} parent=1 // loop_pre_header
      _
    $region3: #{tpu_custom_call.1} parent=1 // loop_header
      %s12 = sphi 0, %s16
      %p13 = scmp.ge.s32.totalorder %s12, 12
      %s20 = sphi 0, %s20
      %s22 = sphi 0, %s20
      %s23 = sphi 0, %s22
      %s37 = sphi 0, %s23
      %s41 = sphi 0, %s41
      %s43 = sphi 0, %s41
      %s44 = sphi 0, %s43
      %s58 = sphi 0, %s44
      %s64 = sphi 0, %s66
      %s67 = sphi 0, %s64
      %s68 = sphi 0, %s67
      %s84 = sphi 0, %s68
      %s90 = sphi 0, %s92
      %s93 = sphi 0, %s90
      %s94 = sphi 0, %s93
      %s110 = sphi 0, %s94
    $region4: #{tpu_custom_call.1} parent=1 // loop_header_branch
      %15 = sbr.rel (%p13) target = $region8
    $region5: #{tpu_custom_call.1} parent=1 // loop_body
      %s17 = ssub.s32 %s12, 1
      %s18 = ssub.s32 %s12, 2
      %s19 = sadd.s32 %s12, 1
      %s21 = sadd.s32 %s20, 1
      %p24 = scmp.eq.s32.totalorder %s12, 9
      %p25 = scmp.ne.s32.totalorder %s20, %s22
      %p26 = scmp.eq.s32.totalorder %s12, 0
      %p27 = por %p25, %p26
      %p28 = scmp.ne.s32.totalorder %s20, %s22
      %p29 = scmp.eq.s32.totalorder %s17, 9
      %p30 = por %p28, %p29
      %p31 = scmp.ne.s32.totalorder %s22, %s23
      %p32 = scmp.eq.s32.totalorder %s17, 0
      %p33 = por %p31, %p32
      %p34 = scmp.ne.s32.totalorder %s22, %s23
      %p35 = scmp.eq.s32.totalorder %s18, 9
      %p36 = por %p34, %p35
      %p38 = scmp.ne.s32.totalorder %s23, %s37
      %p39 = scmp.eq.s32.totalorder %s18, 0
      %p40 = por %p38, %p39
      %s42 = sadd.s32 %s41, 1
      %p45 = scmp.eq.s32.totalorder %s12, 9
      %p46 = scmp.ne.s32.totalorder %s41, %s43
      %p47 = scmp.eq.s32.totalorder %s12, 0
      %p48 = por %p46, %p47
      %p49 = scmp.ne.s32.totalorder %s41, %s43
      %p50 = scmp.eq.s32.totalorder %s17, 9
      %p51 = por %p49, %p50
      %p52 = scmp.ne.s32.totalorder %s43, %s44
      %p53 = scmp.eq.s32.totalorder %s17, 0
      %p54 = por %p52, %p53
      %p55 = scmp.ne.s32.totalorder %s43, %s44
      %p56 = scmp.eq.s32.totalorder %s18, 9
      %p57 = por %p55, %p56
      %p59 = scmp.ne.s32.totalorder %s44, %s58
      %p60 = scmp.eq.s32.totalorder %s18, 0
      %p61 = por %p59, %p60
      %s62 = ssub.s32 %s12, %s19
      %p63 = scmp.eq.s32.totalorder %s62, 0
      %s65 = sadd.s32 %s64, 1
      %s66 = scalar_select %p63, %s64, %s65
      %p69 = pneg %p63
      %p70 = scmp.eq.s32.totalorder %s12, 9
      %p71 = por %p69, %p70
      %p72 = scmp.ne.s32.totalorder %s64, %s67
      %p73 = scmp.eq.s32.totalorder %s12, 0
      %p74 = por %p72, %p73
      %p75 = scmp.ne.s32.totalorder %s64, %s67
      %p76 = scmp.eq.s32.totalorder %s17, 9
      %p77 = por %p75, %p76
      %p78 = scmp.ne.s32.totalorder %s67, %s68
      %p79 = scmp.eq.s32.totalorder %s17, 0
      %p80 = por %p78, %p79
      %p81 = scmp.ne.s32.totalorder %s67, %s68
      %p82 = scmp.eq.s32.totalorder %s18, 9
      %p83 = por %p81, %p82
      %p85 = scmp.ne.s32.totalorder %s68, %s84
      %p86 = scmp.eq.s32.totalorder %s18, 0
      %p87 = por %p85, %p86
      %s88 = ssub.s32 %s12, %s19
      %p89 = scmp.eq.s32.totalorder %s88, 0
      %s91 = sadd.s32 %s90, 1
      %s92 = scalar_select %p89, %s90, %s91
      %p95 = pneg %p89
      %p96 = scmp.eq.s32.totalorder %s12, 9
      %p97 = por %p95, %p96
      %p98 = scmp.ne.s32.totalorder %s90, %s93
      %p99 = scmp.eq.s32.totalorder %s12, 0
      %p100 = por %p98, %p99
      %p101 = scmp.ne.s32.totalorder %s90, %s93
      %p102 = scmp.eq.s32.totalorder %s17, 9
      %p103 = por %p101, %p102
      %p104 = scmp.ne.s32.totalorder %s93, %s94
      %p105 = scmp.eq.s32.totalorder %s17, 0
      %p106 = por %p104, %p105
      %p107 = scmp.ne.s32.totalorder %s93, %s94
      %p108 = scmp.eq.s32.totalorder %s18, 9
      %p109 = por %p107, %p108
      %p111 = scmp.ne.s32.totalorder %s94, %s110
      %p112 = scmp.eq.s32.totalorder %s18, 0
      %p113 = por %p111, %p112
      %p114 = scmp.le.s32.totalorder 1, %s12
      %p115 = scmp.lt.s32.totalorder %s12, 11
      %p116 = pnand %p114, %p115
      %p117 = pneg %p116
      // Predicated region
      $region9: #{tpu_custom_call.1} parent=5 // pred_check
        _
      $region10: #{tpu_custom_call.1} parent=5 // pred_check_branch
        %119 = sbr.rel (%p116) target = $region12
      $region11: #{tpu_custom_call.1} parent=5 // pred_region
        %s120 = ssub.s32 %s12, 1
        // Predicated region
        $region13: #{tpu_custom_call.1} parent=11 // pred_check
          %p121 = pneg %p33
        $region14: #{tpu_custom_call.1} parent=11 // pred_check_branch
          %123 = sbr.rel (%p121) target = $region16
        $region15: #{tpu_custom_call.1} parent=11 // pred_region
          _
        $region16: #{tpu_custom_call.1} parent=11 // pred_fallthru
          _
        // Predicated region
        $region17: #{tpu_custom_call.1} parent=11 // pred_check
          %p124 = pneg %p54
        $region18: #{tpu_custom_call.1} parent=11 // pred_check_branch
          %126 = sbr.rel (%p124) target = $region20
        $region19: #{tpu_custom_call.1} parent=11 // pred_region
          _
        $region20: #{tpu_custom_call.1} parent=11 // pred_fallthru
          _
      $region12: #{tpu_custom_call.1} parent=5 // pred_fallthru
        _
      %p127 = scmp.lt.s32.totalorder %s12, 10
      // Predicated region
      $region21: #{tpu_custom_call.1} parent=5 // pred_check
        %p128 = pneg %p127
      $region22: #{tpu_custom_call.1} parent=5 // pred_check_branch
        %130 = sbr.rel (%p128) target = $region24
      $region23: #{tpu_custom_call.1} parent=5 // pred_region
        // Predicated region
        $region25: #{tpu_custom_call.1} parent=23 // pred_check
          %p131 = pneg %p74
        $region26: #{tpu_custom_call.1} parent=23 // pred_check_branch
          %133 = sbr.rel (%p131) target = $region28
        $region27: #{tpu_custom_call.1} parent=23 // pred_region
          %p134 = scmp.lt.s32.totalorder %s12, 9
          %s135 = scalar_select %p134, %s12, 9
          %s136 = smul.addr %s135, 190
          %s137 = smul.addr %s136, 4
          %s138 = scalar_lea.vmem %s2, %s137
        $region28: #{tpu_custom_call.1} parent=23 // pred_fallthru
          _
      $region24: #{tpu_custom_call.1} parent=5 // pred_fallthru
        _
      %p139 = scmp.le.s32.totalorder 1, %s12
      %p140 = scmp.lt.s32.totalorder %s12, 11
      %p141 = pnand %p139, %p140
      %p142 = pneg %p141
      // Predicated region
      $region29: #{tpu_custom_call.1} parent=5 // pred_check
        _
      $region30: #{tpu_custom_call.1} parent=5 // pred_check_branch
        %144 = sbr.rel (%p141) target = $region32
      $region31: #{tpu_custom_call.1} parent=5 // pred_region
        %s145 = ssub.s32 %s12, 1
        %p146 = pneg %p33
        %p147 = pneg %p30
        %p148 = pneg %p54
        %p149 = pneg %p51
        %p150 = scmp.lt.s32.totalorder %s17, 9
        %s151 = scalar_select %p150, %s17, 9
        %s152 = smul.addr %s151, 190
        %s153 = smul.addr %s152, 4
        %s154 = scalar_lea.vmem %s2, %s153
        %p155 = pneg %p80
        %p156 = pneg %p77
        %p157 = pneg %p106
        %p158 = pneg %p103
        %s159 = sand.u32 %s93, 1
        %s160 = scalar_lea.sflag [#allocation3], %s159
        %s161 = sand.u32 %s93, 1
        %s162 = smul.addr %s161, 760
        %s163 = scalar_lea.vmem [#allocation2], %s162
        %p164 = scmp.lt.s32.totalorder %s17, 9
        %s165 = scalar_select %p164, %s17, 9
        %s166 = smul.addr %s165, 190
        %s167 = smul.addr %s166, 4
        %s168 = scalar_lea.vmem %s2, %s167
        %v170 = vld [vmem:[%s0] sm:$0xf]
        %v171 = vld [vmem:[%s0 + $0x4] sm:$0xf]
        %v172 = vld [vmem:[%s168] sm:$0xff]
        %v173 = vld [vmem:[%s168 + $0x8] sm:$0xff]
        %v174 = vld [vmem:[%s168 + $0x10] sm:$0xff]
        %v175 = vld [vmem:[%s168 + $0x18] sm:$0xff]
        %v176 = vld [vmem:[%s168 + $0x20] sm:$0xff]
        %v177 = vld [vmem:[%s168 + $0x28] sm:$0xff]
        %v178 = vld [vmem:[%s168 + $0x30] sm:$0xff]
        %v179 = vld [vmem:[%s168 + $0x38] sm:$0xff]
        %v180 = vld [vmem:[%s168 + $0x40] sm:$0xff]
        %v181 = vld [vmem:[%s168 + $0x48] sm:$0xff]
        %v182 = vld [vmem:[%s168 + $0x50] sm:$0xff]
        %v183 = vld [vmem:[%s168 + $0x58] sm:$0xff]
        %v184 = vld [vmem:[%s168 + $0x60] sm:$0xff]
        %v185 = vld [vmem:[%s168 + $0x68] sm:$0xff]
        %v186 = vld [vmem:[%s168 + $0x70] sm:$0xff]
        %v187 = vld [vmem:[%s168 + $0x78] sm:$0xff]
        %v188 = vld [vmem:[%s168 + $0x80] sm:$0xff]
        %v189 = vld [vmem:[%s168 + $0x88] sm:$0xff]
        %v190 = vld [vmem:[%s168 + $0x90] sm:$0xff]
        %v191 = vld [vmem:[%s168 + $0x98] sm:$0xff]
        %v192 = vld [vmem:[%s168 + $0xa0] sm:$0xff]
        %v193 = vld [vmem:[%s168 + $0xa8] sm:$0xff]
        %v194 = vld [vmem:[%s168 + $0xb0] sm:$0xff]
        %v195 = vld [vmem:[%s168 + $0xb8] sm:$0xff]
        %v196 = vld [vmem:[%s168 + $0xc0] sm:$0xff]
        %v197 = vld [vmem:[%s168 + $0xc8] sm:$0xff]
        %v198 = vld [vmem:[%s168 + $0xd0] sm:$0xff]
        %v199 = vld [vmem:[%s168 + $0xd8] sm:$0xff]
        %v200 = vld [vmem:[%s168 + $0xe0] sm:$0xff]
        %v201 = vld [vmem:[%s168 + $0xe8] sm:$0xff]
        %v202 = vld [vmem:[%s168 + $0xf0] sm:$0xff]
        %v203 = vld [vmem:[%s168 + $0xf8] sm:$0xff]
        %v204 = vld [vmem:[%s168 + $0x100] sm:$0xff]
        %v205 = vld [vmem:[%s168 + $0x108] sm:$0xff]
        %v206 = vld [vmem:[%s168 + $0x110] sm:$0xff]
        %v207 = vld [vmem:[%s168 + $0x118] sm:$0xff]
        %v208 = vld [vmem:[%s168 + $0x120] sm:$0xff]
        %v209 = vld [vmem:[%s168 + $0x128] sm:$0xff]
        %v210 = vld [vmem:[%s168 + $0x130] sm:$0xff]
        %v211 = vld [vmem:[%s168 + $0x138] sm:$0xff]
        %v212 = vld [vmem:[%s168 + $0x140] sm:$0xff]
        %v213 = vld [vmem:[%s168 + $0x148] sm:$0xff]
        %v214 = vld [vmem:[%s168 + $0x150] sm:$0xff]
        %v215 = vld [vmem:[%s168 + $0x158] sm:$0xff]
        %v216 = vld [vmem:[%s168 + $0x160] sm:$0xff]
        %v217 = vld [vmem:[%s168 + $0x168] sm:$0xff]
        %v218 = vld [vmem:[%s168 + $0x170] sm:$0xff]
        %v219 = vld [vmem:[%s168 + $0x178] sm:$0xf]
        %v220 = vld [vmem:[%s168 + $0x17c] sm:$0x11]
        %v221 = vld [vmem:[%s168 + $0x184] sm:$0x11]
        %v222 = vld [vmem:[%s168 + $0x18c] sm:$0x11]
        %v223 = vld [vmem:[%s168 + $0x194] sm:$0x11]
        %v224 = vld [vmem:[%s168 + $0x19c] sm:$0x11]
        %v225 = vld [vmem:[%s168 + $0x1a4] sm:$0x11]
        %v226 = vld [vmem:[%s168 + $0x1ac] sm:$0x11]
        %v227 = vld [vmem:[%s168 + $0x1b4] sm:$0x11]
        %v228 = vld [vmem:[%s168 + $0x1bc] sm:$0x11]
        %v229 = vld [vmem:[%s168 + $0x1c4] sm:$0x11]
        %v230 = vld [vmem:[%s168 + $0x1cc] sm:$0x11]
        %v231 = vld [vmem:[%s168 + $0x1d4] sm:$0x11]
        %v232 = vld [vmem:[%s168 + $0x1dc] sm:$0x11]
        %v233 = vld [vmem:[%s168 + $0x1e4] sm:$0x11]
        %v234 = vld [vmem:[%s168 + $0x1ec] sm:$0x11]
        %v235 = vld [vmem:[%s168 + $0x1f4] sm:$0x11]
        %v236 = vld [vmem:[%s168 + $0x1fc] sm:$0x11]
        %v237 = vld [vmem:[%s168 + $0x204] sm:$0x11]
        %v238 = vld [vmem:[%s168 + $0x20c] sm:$0x11]
        %v239 = vld [vmem:[%s168 + $0x214] sm:$0x11]
        %v240 = vld [vmem:[%s168 + $0x21c] sm:$0x11]
        %v241 = vld [vmem:[%s168 + $0x224] sm:$0x11]
        %v242 = vld [vmem:[%s168 + $0x22c] sm:$0x11]
        %v243 = vld [vmem:[%s168 + $0x234] sm:$0x11]
        %v244 = vld [vmem:[%s168 + $0x23c] sm:$0x11]
        %v245 = vld [vmem:[%s168 + $0x244] sm:$0x11]
        %v246 = vld [vmem:[%s168 + $0x24c] sm:$0x11]
        %v247 = vld [vmem:[%s168 + $0x254] sm:$0x11]
        %v248 = vld [vmem:[%s168 + $0x25c] sm:$0x11]
        %v249 = vld [vmem:[%s168 + $0x264] sm:$0x11]
        %v250 = vld [vmem:[%s168 + $0x26c] sm:$0x11]
        %v251 = vld [vmem:[%s168 + $0x274] sm:$0x11]
        %v252 = vld [vmem:[%s168 + $0x27c] sm:$0x11]
        %v253 = vld [vmem:[%s168 + $0x284] sm:$0x11]
        %v254 = vld [vmem:[%s168 + $0x28c] sm:$0x11]
        %v255 = vld [vmem:[%s168 + $0x294] sm:$0x11]
        %v256 = vld [vmem:[%s168 + $0x29c] sm:$0x11]
        %v257 = vld [vmem:[%s168 + $0x2a4] sm:$0x11]
        %v258 = vld [vmem:[%s168 + $0x2ac] sm:$0x11]
        %v259 = vld [vmem:[%s168 + $0x2b4] sm:$0x11]
        %v260 = vld [vmem:[%s168 + $0x2bc] sm:$0x11]
        %v261 = vld [vmem:[%s168 + $0x2c4] sm:$0x11]
        %v262 = vld [vmem:[%s168 + $0x2cc] sm:$0x11]
        %v263 = vld [vmem:[%s168 + $0x2d4] sm:$0x11]
        %v264 = vld [vmem:[%s168 + $0x2dc] sm:$0x11]
        %v265 = vld [vmem:[%s168 + $0x2e4] sm:$0x11]
        %v266 = vld [vmem:[%s168 + $0x2ec] sm:$0x11]
        %v267 = vld [vmem:[%s168 + $0x2f4] sm:$0x1]
        %v268 = vld [vmem:[%s1] sm:$0xff]
        %v269 = vld [vmem:[%s1 + $0x8] sm:$0xff]
        %271 = vset.pattern.permute.xlu0 0
        %272 = vperm.xlu0 %271, %v268
        %v273 = vpop.permute.xlu0 %272
        %276 = vset.pattern.permute.xlu0 0
        %277 = vperm.xlu0 %276, %v269
        %v278 = vpop.permute.xlu0 %277
        %v282 = vunpack.c.l.b16 %v170
        %v283 = vunpack.c.l.b16 %v171
        %v284 = vpack.c.b16 %v283, %v282
        %v381 = vunpack.c.l.b16 %v172
        %v382 = vunpack.c.h.b16 %v172
        %v383 = vunpack.c.l.b16 %v173
        %v384 = vunpack.c.h.b16 %v173
        %v385 = vunpack.c.l.b16 %v174
        %v386 = vunpack.c.h.b16 %v174
        %v387 = vunpack.c.l.b16 %v175
        %v388 = vunpack.c.h.b16 %v175
        %v389 = vunpack.c.l.b16 %v176
        %v390 = vunpack.c.h.b16 %v176
        %v391 = vunpack.c.l.b16 %v177
        %v392 = vunpack.c.h.b16 %v177
        %v393 = vunpack.c.l.b16 %v178
        %v394 = vunpack.c.h.b16 %v178
        %v395 = vunpack.c.l.b16 %v179
        %v396 = vunpack.c.h.b16 %v179
        %v397 = vunpack.c.l.b16 %v180
        %v398 = vunpack.c.h.b16 %v180
        %v399 = vunpack.c.l.b16 %v181
        %v400 = vunpack.c.h.b16 %v181
        %v401 = vunpack.c.l.b16 %v182
        %v402 = vunpack.c.h.b16 %v182
        %v403 = vunpack.c.l.b16 %v183
        %v404 = vunpack.c.h.b16 %v183
        %v405 = vunpack.c.l.b16 %v184
        %v406 = vunpack.c.h.b16 %v184
        %v407 = vunpack.c.l.b16 %v185
        %v408 = vunpack.c.h.b16 %v185
        %v409 = vunpack.c.l.b16 %v186
        %v410 = vunpack.c.h.b16 %v186
        %v411 = vunpack.c.l.b16 %v187
        %v412 = vunpack.c.h.b16 %v187
        %v413 = vunpack.c.l.b16 %v188
        %v414 = vunpack.c.h.b16 %v188
        %v415 = vunpack.c.l.b16 %v189
        %v416 = vunpack.c.h.b16 %v189
        %v417 = vunpack.c.l.b16 %v190
        %v418 = vunpack.c.h.b16 %v190
        %v419 = vunpack.c.l.b16 %v191
        %v420 = vunpack.c.h.b16 %v191
        %v421 = vunpack.c.l.b16 %v192
        %v422 = vunpack.c.h.b16 %v192
        %v423 = vunpack.c.l.b16 %v193
        %v424 = vunpack.c.h.b16 %v193
        %v425 = vunpack.c.l.b16 %v194
        %v426 = vunpack.c.h.b16 %v194
        %v427 = vunpack.c.l.b16 %v195
        %v428 = vunpack.c.h.b16 %v195
        %v429 = vunpack.c.l.b16 %v196
        %v430 = vunpack.c.h.b16 %v196
        %v431 = vunpack.c.l.b16 %v197
        %v432 = vunpack.c.h.b16 %v197
        %v433 = vunpack.c.l.b16 %v198
        %v434 = vunpack.c.h.b16 %v198
        %v435 = vunpack.c.l.b16 %v199
        %v436 = vunpack.c.h.b16 %v199
        %v437 = vunpack.c.l.b16 %v200
        %v438 = vunpack.c.h.b16 %v200
        %v439 = vunpack.c.l.b16 %v201
        %v440 = vunpack.c.h.b16 %v201
        %v441 = vunpack.c.l.b16 %v202
        %v442 = vunpack.c.h.b16 %v202
        %v443 = vunpack.c.l.b16 %v203
        %v444 = vunpack.c.h.b16 %v203
        %v445 = vunpack.c.l.b16 %v204
        %v446 = vunpack.c.h.b16 %v204
        %v447 = vunpack.c.l.b16 %v205
        %v448 = vunpack.c.h.b16 %v205
        %v449 = vunpack.c.l.b16 %v206
        %v450 = vunpack.c.h.b16 %v206
        %v451 = vunpack.c.l.b16 %v207
        %v452 = vunpack.c.h.b16 %v207
        %v453 = vunpack.c.l.b16 %v208
        %v454 = vunpack.c.h.b16 %v208
        %v455 = vunpack.c.l.b16 %v209
        %v456 = vunpack.c.h.b16 %v209
        %v457 = vunpack.c.l.b16 %v210
        %v458 = vunpack.c.h.b16 %v210
        %v459 = vunpack.c.l.b16 %v211
        %v460 = vunpack.c.h.b16 %v211
        %v461 = vunpack.c.l.b16 %v212
        %v462 = vunpack.c.h.b16 %v212
        %v463 = vunpack.c.l.b16 %v213
        %v464 = vunpack.c.h.b16 %v213
        %v465 = vunpack.c.l.b16 %v214
        %v466 = vunpack.c.h.b16 %v214
        %v467 = vunpack.c.l.b16 %v215
        %v468 = vunpack.c.h.b16 %v215
        %v469 = vunpack.c.l.b16 %v216
        %v470 = vunpack.c.h.b16 %v216
        %v471 = vunpack.c.l.b16 %v217
        %v472 = vunpack.c.h.b16 %v217
        %v473 = vunpack.c.l.b16 %v218
        %v474 = vunpack.c.h.b16 %v218
        %v475 = vunpack.c.l.b16 %v219
        %v476 = vunpack.c.l.b16 %v220
        %v477 = vunpack.c.h.b16 %v220
        %v478 = vunpack.c.l.b16 %v221
        %v479 = vunpack.c.h.b16 %v221
        %v480 = vunpack.c.l.b16 %v222
        %v481 = vunpack.c.h.b16 %v222
        %v482 = vunpack.c.l.b16 %v223
        %v483 = vunpack.c.h.b16 %v223
        %v484 = vunpack.c.l.b16 %v224
        %v485 = vunpack.c.h.b16 %v224
        %v486 = vunpack.c.l.b16 %v225
        %v487 = vunpack.c.h.b16 %v225
        %v488 = vunpack.c.l.b16 %v226
        %v489 = vunpack.c.h.b16 %v226
        %v490 = vunpack.c.l.b16 %v227
        %v491 = vunpack.c.h.b16 %v227
        %v492 = vunpack.c.l.b16 %v228
        %v493 = vunpack.c.h.b16 %v228
        %v494 = vunpack.c.l.b16 %v229
        %v495 = vunpack.c.h.b16 %v229
        %v496 = vunpack.c.l.b16 %v230
        %v497 = vunpack.c.h.b16 %v230
        %v498 = vunpack.c.l.b16 %v231
        %v499 = vunpack.c.h.b16 %v231
        %v500 = vunpack.c.l.b16 %v232
        %v501 = vunpack.c.h.b16 %v232
        %v502 = vunpack.c.l.b16 %v233
        %v503 = vunpack.c.h.b16 %v233
        %v504 = vunpack.c.l.b16 %v234
        %v505 = vunpack.c.h.b16 %v234
        %v506 = vunpack.c.l.b16 %v235
        %v507 = vunpack.c.h.b16 %v235
        %v508 = vunpack.c.l.b16 %v236
        %v509 = vunpack.c.h.b16 %v236
        %v510 = vunpack.c.l.b16 %v237
        %v511 = vunpack.c.h.b16 %v237
        %v512 = vunpack.c.l.b16 %v238
        %v513 = vunpack.c.h.b16 %v238
        %v514 = vunpack.c.l.b16 %v239
        %v515 = vunpack.c.h.b16 %v239
        %v516 = vunpack.c.l.b16 %v240
        %v517 = vunpack.c.h.b16 %v240
        %v518 = vunpack.c.l.b16 %v241
        %v519 = vunpack.c.h.b16 %v241
        %v520 = vunpack.c.l.b16 %v242
        %v521 = vunpack.c.h.b16 %v242
        %v522 = vunpack.c.l.b16 %v243
        %v523 = vunpack.c.h.b16 %v243
        %v524 = vunpack.c.l.b16 %v244
        %v525 = vunpack.c.h.b16 %v244
        %v526 = vunpack.c.l.b16 %v245
        %v527 = vunpack.c.h.b16 %v245
        %v528 = vunpack.c.l.b16 %v246
        %v529 = vunpack.c.h.b16 %v246
        %v530 = vunpack.c.l.b16 %v247
        %v531 = vunpack.c.h.b16 %v247
        %v532 = vunpack.c.l.b16 %v248
        %v533 = vunpack.c.h.b16 %v248
        %v534 = vunpack.c.l.b16 %v249
        %v535 = vunpack.c.h.b16 %v249
        %v536 = vunpack.c.l.b16 %v250
        %v537 = vunpack.c.h.b16 %v250
        %v538 = vunpack.c.l.b16 %v251
        %v539 = vunpack.c.h.b16 %v251
        %v540 = vunpack.c.l.b16 %v252
        %v541 = vunpack.c.h.b16 %v252
        %v542 = vunpack.c.l.b16 %v253
        %v543 = vunpack.c.h.b16 %v253
        %v544 = vunpack.c.l.b16 %v254
        %v545 = vunpack.c.h.b16 %v254
        %v546 = vunpack.c.l.b16 %v255
        %v547 = vunpack.c.h.b16 %v255
        %v548 = vunpack.c.l.b16 %v256
        %v549 = vunpack.c.h.b16 %v256
        %v550 = vunpack.c.l.b16 %v257
        %v551 = vunpack.c.h.b16 %v257
        %v552 = vunpack.c.l.b16 %v258
        %v553 = vunpack.c.h.b16 %v258
        %v554 = vunpack.c.l.b16 %v259
        %v555 = vunpack.c.h.b16 %v259
        %v556 = vunpack.c.l.b16 %v260
        %v557 = vunpack.c.h.b16 %v260
        %v558 = vunpack.c.l.b16 %v261
        %v559 = vunpack.c.h.b16 %v261
        %v560 = vunpack.c.l.b16 %v262
        %v561 = vunpack.c.h.b16 %v262
        %v562 = vunpack.c.l.b16 %v263
        %v563 = vunpack.c.h.b16 %v263
        %v564 = vunpack.c.l.b16 %v264
        %v565 = vunpack.c.h.b16 %v264
        %v566 = vunpack.c.l.b16 %v265
        %v567 = vunpack.c.h.b16 %v265
        %v568 = vunpack.c.l.b16 %v266
        %v569 = vunpack.c.h.b16 %v266
        %v570 = vunpack.c.l.b16 %v267
        %v571 = vpack.c.b16 %v476, %v381
        %v572 = vpack.c.b16 %v477, %v382
        %v573 = vpack.c.b16 %v478, %v383
        %v574 = vpack.c.b16 %v479, %v384
        %v575 = vpack.c.b16 %v480, %v385
        %v576 = vpack.c.b16 %v481, %v386
        %v577 = vpack.c.b16 %v482, %v387
        %v578 = vpack.c.b16 %v483, %v388
        %v579 = vpack.c.b16 %v484, %v389
        %v580 = vpack.c.b16 %v485, %v390
        %v581 = vpack.c.b16 %v486, %v391
        %v582 = vpack.c.b16 %v487, %v392
        %v583 = vpack.c.b16 %v488, %v393
        %v584 = vpack.c.b16 %v489, %v394
        %v585 = vpack.c.b16 %v490, %v395
        %v586 = vpack.c.b16 %v491, %v396
        %v587 = vpack.c.b16 %v492, %v397
        %v588 = vpack.c.b16 %v493, %v398
        %v589 = vpack.c.b16 %v494, %v399
        %v590 = vpack.c.b16 %v495, %v400
        %v591 = vpack.c.b16 %v496, %v401
        %v592 = vpack.c.b16 %v497, %v402
        %v593 = vpack.c.b16 %v498, %v403
        %v594 = vpack.c.b16 %v499, %v404
        %v595 = vpack.c.b16 %v500, %v405
        %v596 = vpack.c.b16 %v501, %v406
        %v597 = vpack.c.b16 %v502, %v407
        %v598 = vpack.c.b16 %v503, %v408
        %v599 = vpack.c.b16 %v504, %v409
        %v600 = vpack.c.b16 %v505, %v410
        %v601 = vpack.c.b16 %v506, %v411
        %v602 = vpack.c.b16 %v507, %v412
        %v603 = vpack.c.b16 %v508, %v413
        %v604 = vpack.c.b16 %v509, %v414
        %v605 = vpack.c.b16 %v510, %v415
        %v606 = vpack.c.b16 %v511, %v416
        %v607 = vpack.c.b16 %v512, %v417
        %v608 = vpack.c.b16 %v513, %v418
        %v609 = vpack.c.b16 %v514, %v419
        %v610 = vpack.c.b16 %v515, %v420
        %v611 = vpack.c.b16 %v516, %v421
        %v612 = vpack.c.b16 %v517, %v422
        %v613 = vpack.c.b16 %v518, %v423
        %v614 = vpack.c.b16 %v519, %v424
        %v615 = vpack.c.b16 %v520, %v425
        %v616 = vpack.c.b16 %v521, %v426
        %v617 = vpack.c.b16 %v522, %v427
        %v618 = vpack.c.b16 %v523, %v428
        %v619 = vpack.c.b16 %v524, %v429
        %v620 = vpack.c.b16 %v525, %v430
        %v621 = vpack.c.b16 %v526, %v431
        %v622 = vpack.c.b16 %v527, %v432
        %v623 = vpack.c.b16 %v528, %v433
        %v624 = vpack.c.b16 %v529, %v434
        %v625 = vpack.c.b16 %v530, %v435
        %v626 = vpack.c.b16 %v531, %v436
        %v627 = vpack.c.b16 %v532, %v437
        %v628 = vpack.c.b16 %v533, %v438
        %v629 = vpack.c.b16 %v534, %v439
        %v630 = vpack.c.b16 %v535, %v440
        %v631 = vpack.c.b16 %v536, %v441
        %v632 = vpack.c.b16 %v537, %v442
        %v633 = vpack.c.b16 %v538, %v443
        %v634 = vpack.c.b16 %v539, %v444
        %v635 = vpack.c.b16 %v540, %v445
        %v636 = vpack.c.b16 %v541, %v446
        %v637 = vpack.c.b16 %v542, %v447
        %v638 = vpack.c.b16 %v543, %v448
        %v639 = vpack.c.b16 %v544, %v449
        %v640 = vpack.c.b16 %v545, %v450
        %v641 = vpack.c.b16 %v546, %v451
        %v642 = vpack.c.b16 %v547, %v452
        %v643 = vpack.c.b16 %v548, %v453
        %v644 = vpack.c.b16 %v549, %v454
        %v645 = vpack.c.b16 %v550, %v455
        %v646 = vpack.c.b16 %v551, %v456
        %v647 = vpack.c.b16 %v552, %v457
        %v648 = vpack.c.b16 %v553, %v458
        %v649 = vpack.c.b16 %v554, %v459
        %v650 = vpack.c.b16 %v555, %v460
        %v651 = vpack.c.b16 %v556, %v461
        %v652 = vpack.c.b16 %v557, %v462
        %v653 = vpack.c.b16 %v558, %v463
        %v654 = vpack.c.b16 %v559, %v464
        %v655 = vpack.c.b16 %v560, %v465
        %v656 = vpack.c.b16 %v561, %v466
        %v657 = vpack.c.b16 %v562, %v467
        %v658 = vpack.c.b16 %v563, %v468
        %v659 = vpack.c.b16 %v564, %v469
        %v660 = vpack.c.b16 %v565, %v470
        %v661 = vpack.c.b16 %v566, %v471
        %v662 = vpack.c.b16 %v567, %v472
        %v663 = vpack.c.b16 %v568, %v473
        %v664 = vpack.c.b16 %v569, %v474
        %v665 = vpack.c.b16 %v570, %v475
        %vm666 = vcmask 72704
        %v668 = vsel %vm666, %v284, 0
        %vm670 = vcmask 1043456
        %vm671 = vcmask 1044480
        %v672 = vsel %vm670, 4294967295, 65535
        %v673 = vsel %vm671, %v672, 0
        %v675 = vand.u32 %v571, %v673
        %v678 = vand.u32 %v572, %v673
        %v681 = vand.u32 %v573, %v673
        %v684 = vand.u32 %v574, %v673
        %v687 = vand.u32 %v575, %v673
        %v690 = vand.u32 %v576, %v673
        %v693 = vand.u32 %v577, %v673
        %v696 = vand.u32 %v578, %v673
        %v699 = vand.u32 %v579, %v673
        %v702 = vand.u32 %v580, %v673
        %v705 = vand.u32 %v581, %v673
        %v708 = vand.u32 %v582, %v673
        %v711 = vand.u32 %v583, %v673
        %v714 = vand.u32 %v584, %v673
        %v717 = vand.u32 %v585, %v673
        %v720 = vand.u32 %v586, %v673
        %v723 = vand.u32 %v587, %v673
        %v726 = vand.u32 %v588, %v673
        %v729 = vand.u32 %v589, %v673
        %v732 = vand.u32 %v590, %v673
        %v735 = vand.u32 %v591, %v673
        %v738 = vand.u32 %v592, %v673
        %v741 = vand.u32 %v593, %v673
        %v744 = vand.u32 %v594, %v673
        %v747 = vand.u32 %v595, %v673
        %v750 = vand.u32 %v596, %v673
        %v753 = vand.u32 %v597, %v673
        %v756 = vand.u32 %v598, %v673
        %v759 = vand.u32 %v599, %v673
        %v762 = vand.u32 %v600, %v673
        %v765 = vand.u32 %v601, %v673
        %v768 = vand.u32 %v602, %v673
        %v771 = vand.u32 %v603, %v673
        %v774 = vand.u32 %v604, %v673
        %v777 = vand.u32 %v605, %v673
        %v780 = vand.u32 %v606, %v673
        %v783 = vand.u32 %v607, %v673
        %v786 = vand.u32 %v608, %v673
        %v789 = vand.u32 %v609, %v673
        %v792 = vand.u32 %v610, %v673
        %v795 = vand.u32 %v611, %v673
        %v798 = vand.u32 %v612, %v673
        %v801 = vand.u32 %v613, %v673
        %v804 = vand.u32 %v614, %v673
        %v807 = vand.u32 %v615, %v673
        %v810 = vand.u32 %v616, %v673
        %v813 = vand.u32 %v617, %v673
        %v816 = vand.u32 %v618, %v673
        %v819 = vand.u32 %v619, %v673
        %v822 = vand.u32 %v620, %v673
        %v825 = vand.u32 %v621, %v673
        %v828 = vand.u32 %v622, %v673
        %v831 = vand.u32 %v623, %v673
        %v834 = vand.u32 %v624, %v673
        %v837 = vand.u32 %v625, %v673
        %v840 = vand.u32 %v626, %v673
        %v843 = vand.u32 %v627, %v673
        %v846 = vand.u32 %v628, %v673
        %v849 = vand.u32 %v629, %v673
        %v852 = vand.u32 %v630, %v673
        %v855 = vand.u32 %v631, %v673
        %v858 = vand.u32 %v632, %v673
        %v861 = vand.u32 %v633, %v673
        %v864 = vand.u32 %v634, %v673
        %v867 = vand.u32 %v635, %v673
        %v870 = vand.u32 %v636, %v673
        %v873 = vand.u32 %v637, %v673
        %v876 = vand.u32 %v638, %v673
        %v879 = vand.u32 %v639, %v673
        %v882 = vand.u32 %v640, %v673
        %v885 = vand.u32 %v641, %v673
        %v888 = vand.u32 %v642, %v673
        %v891 = vand.u32 %v643, %v673
        %v894 = vand.u32 %v644, %v673
        %v897 = vand.u32 %v645, %v673
        %v900 = vand.u32 %v646, %v673
        %v903 = vand.u32 %v647, %v673
        %v906 = vand.u32 %v648, %v673
        %v909 = vand.u32 %v649, %v673
        %v912 = vand.u32 %v650, %v673
        %v915 = vand.u32 %v651, %v673
        %v918 = vand.u32 %v652, %v673
        %v921 = vand.u32 %v653, %v673
        %v924 = vand.u32 %v654, %v673
        %v927 = vand.u32 %v655, %v673
        %v930 = vand.u32 %v656, %v673
        %v933 = vand.u32 %v657, %v673
        %v936 = vand.u32 %v658, %v673
        %v939 = vand.u32 %v659, %v673
        %v942 = vand.u32 %v660, %v673
        %v945 = vand.u32 %v661, %v673
        %v948 = vand.u32 %v662, %v673
        %v951 = vand.u32 %v663, %v673
        %v954 = vand.u32 %v664, %v673
        %v957 = vand.u32 %v665, %v673
        %959 = vmatprep.subr.bf16.mxu0 %v678
        %960 = vmatpush1.bf16.msra.mxu0 %v675
        %961 = vmatprep.subr.bf16.mxu0 0
        %962 = vmatpush1.bf16.msra.mxu0 0
        %963 = vmatprep.subr.bf16.mxu0 0
        %964 = vmatpush1.bf16.msra.mxu0 0
        %965 = vmatprep.subr.bf16.mxu0 0
        %966 = vmatpush1.bf16.msra.mxu0 0
        %967 = vmatprep.subr.bf16.mxu0 0
        %968 = vmatpush1.bf16.msra.mxu0 0
        %969 = vmatprep.subr.bf16.mxu0 0
        %970 = vmatpush1.bf16.msra.mxu0 0
        %971 = vmatprep.subr.bf16.mxu0 0
        %972 = vmatpush1.bf16.msra.mxu0 0
        %973 = vmatprep.subr.bf16.mxu0 0
        %974 = vmatpush1.bf16.msra.mxu0 0
        %975 = vmatprep.subr.bf16.mxu0 0
        %976 = vmatpush1.bf16.msra.mxu0 0
        %977 = vmatprep.subr.bf16.mxu0 0
        %978 = vmatpush1.bf16.msra.mxu0 0
        %979 = vmatprep.subr.bf16.mxu0 0
        %980 = vmatpush1.bf16.msra.mxu0 0
        %981 = vmatprep.subr.bf16.mxu0 0
        %982 = vmatpush1.bf16.msra.mxu0 0
        %983 = vmatprep.subr.bf16.mxu0 0
        %984 = vmatpush1.bf16.msra.mxu0 0
        %985 = vmatprep.subr.bf16.mxu0 0
        %986 = vmatpush1.bf16.msra.mxu0 0
        %987 = vmatprep.subr.bf16.mxu0 0
        %988 = vmatpush1.bf16.msra.mxu0 0
        %989 = vmatprep.subr.bf16.mxu0 0
        %990 = vmatpush1.bf16.msra.mxu0 0
        %991 = vmatprep.mubr.bf16.mxu0 0
        %992 = vmatmul.mubr.bf16.gmra.mrb[0].mxu0 %v668
        %v993 = vpop.f32.mrb[0].mxu0
        %v994 = vadd.f32 %v273, %v993
        %v995 = vpop.f32.mrb[0].mxu0
        %v996 = vadd.f32 %v273, %v995
        %v997 = vpop.f32.mrb[0].mxu0
        %v998 = vadd.f32 %v278, %v997
        %v999 = vpop.f32.mrb[0].mxu0
        %v1000 = vadd.f32 %v278, %v999
        %1001 = vdwg.mxu0
        %1002 = vmatprep.subr.bf16.mxu0 %v684
        %1003 = vmatpush1.bf16.msra.mxu0 %v681
        %1004 = vmatprep.subr.bf16.mxu0 0
        %1005 = vmatpush1.bf16.msra.mxu0 0
        %1006 = vmatprep.subr.bf16.mxu0 0
        %1007 = vmatpush1.bf16.msra.mxu0 0
        %1008 = vmatprep.subr.bf16.mxu0 0
        %1009 = vmatpush1.bf16.msra.mxu0 0
        %1010 = vmatprep.subr.bf16.mxu0 0
        %1011 = vmatpush1.bf16.msra.mxu0 0
        %1012 = vmatprep.subr.bf16.mxu0 0
        %1013 = vmatpush1.bf16.msra.mxu0 0
        %1014 = vmatprep.subr.bf16.mxu0 0
        %1015 = vmatpush1.bf16.msra.mxu0 0
        %1016 = vmatprep.subr.bf16.mxu0 0
        %1017 = vmatpush1.bf16.msra.mxu0 0
        %1018 = vmatprep.subr.bf16.mxu0 0
        %1019 = vmatpush1.bf16.msra.mxu0 0
        %1020 = vmatprep.subr.bf16.mxu0 0
        %1021 = vmatpush1.bf16.msra.mxu0 0
        %1022 = vmatprep.subr.bf16.mxu0 0
        %1023 = vmatpush1.bf16.msra.mxu0 0
        %1024 = vmatprep.subr.bf16.mxu0 0
        %1025 = vmatpush1.bf16.msra.mxu0 0
        %1026 = vmatprep.subr.bf16.mxu0 0
        %1027 = vmatpush1.bf16.msra.mxu0 0
        %1028 = vmatprep.subr.bf16.mxu0 0
        %1029 = vmatpush1.bf16.msra.mxu0 0
        %1030 = vmatprep.subr.bf16.mxu0 0
        %1031 = vmatpush1.bf16.msra.mxu0 0
        %1032 = vmatprep.subr.bf16.mxu0 0
        %1033 = vmatpush1.bf16.msra.mxu0 0
        %1034 = vmatprep.mubr.bf16.mxu0 0
        %1035 = vmatmul.mubr.bf16.gmra.mrb[0].mxu0 %v668
        %v1036 = vpop.f32.mrb[0].mxu0
        %v1037 = vadd.f32 %v273, %v1036
        %v1038 = vpop.f32.mrb[0].mxu0
        %v1039 = vadd.f32 %v273, %v1038
        %v1040 = vpop.f32.mrb[0].mxu0
        %v1041 = vadd.f32 %v278, %v1040
        %v1042 = vpop.f32.mrb[0].mxu0
        %v1043 = vadd.f32 %v278, %v1042
        %1044 = vdwg.mxu0
        %1045 = vmatprep.subr.bf16.mxu0 %v690
        %1046 = vmatpush1.bf16.msra.mxu0 %v687
        %1047 = vmatprep.subr.bf16.mxu0 0
        %1048 = vmatpush1.bf16.msra.mxu0 0
        %1049 = vmatprep.subr.bf16.mxu0 0
        %1050 = vmatpush1.bf16.msra.mxu0 0
        %1051 = vmatprep.subr.bf16.mxu0 0
        %1052 = vmatpush1.bf16.msra.mxu0 0
        %1053 = vmatprep.subr.bf16.mxu0 0
        %1054 = vmatpush1.bf16.msra.mxu0 0
        %1055 = vmatprep.subr.bf16.mxu0 0
        %1056 = vmatpush1.bf16.msra.mxu0 0
        %1057 = vmatprep.subr.bf16.mxu0 0
        %1058 = vmatpush1.bf16.msra.mxu0 0
        %1059 = vmatprep.subr.bf16.mxu0 0
        %1060 = vmatpush1.bf16.msra.mxu0 0
        %1061 = vmatprep.subr.bf16.mxu0 0
        %1062 = vmatpush1.bf16.msra.mxu0 0
        %1063 = vmatprep.subr.bf16.mxu0 0
        %1064 = vmatpush1.bf16.msra.mxu0 0
        %1065 = vmatprep.subr.bf16.mxu0 0
        %1066 = vmatpush1.bf16.msra.mxu0 0
        %1067 = vmatprep.subr.bf16.mxu0 0
        %1068 = vmatpush1.bf16.msra.mxu0 0
        %1069 = vmatprep.subr.bf16.mxu0 0
        %1070 = vmatpush1.bf16.msra.mxu0 0
        %1071 = vmatprep.subr.bf16.mxu0 0
        %1072 = vmatpush1.bf16.msra.mxu0 0
        %1073 = vmatprep.subr.bf16.mxu0 0
        %1074 = vmatpush1.bf16.msra.mxu0 0
        %1075 = vmatprep.subr.bf16.mxu0 0
        %1076 = vmatpush1.bf16.msra.mxu0 0
        %1077 = vmatprep.mubr.bf16.mxu0 0
        %1078 = vmatmul.mubr.bf16.gmra.mrb[0].mxu0 %v668
        %v1079 = vpop.f32.mrb[0].mxu0
        %v1080 = vadd.f32 %v273, %v1079
        %v1081 = vpop.f32.mrb[0].mxu0
        %v1082 = vadd.f32 %v273, %v1081
        %v1083 = vpop.f32.mrb[0].mxu0
        %v1084 = vadd.f32 %v278, %v1083
        %v1085 = vpop.f32.mrb[0].mxu0
        %v1086 = vadd.f32 %v278, %v1085
        %1087 = vdwg.mxu0
        %1088 = vmatprep.subr.bf16.mxu0 %v696
        %1089 = vmatpush1.bf16.msra.mxu0 %v693
        %1090 = vmatprep.subr.bf16.mxu0 0
        %1091 = vmatpush1.bf16.msra.mxu0 0
        %1092 = vmatprep.subr.bf16.mxu0 0
        %1093 = vmatpush1.bf16.msra.mxu0 0
        %1094 = vmatprep.subr.bf16.mxu0 0
        %1095 = vmatpush1.bf16.msra.mxu0 0
        %1096 = vmatprep.subr.bf16.mxu0 0
        %1097 = vmatpush1.bf16.msra.mxu0 0
        %1098 = vmatprep.subr.bf16.mxu0 0
        %1099 = vmatpush1.bf16.msra.mxu0 0
        %1100 = vmatprep.subr.bf16.mxu0 0
        %1101 = vmatpush1.bf16.msra.mxu0 0
        %1102 = vmatprep.subr.bf16.mxu0 0
        %1103 = vmatpush1.bf16.msra.mxu0 0
        %1104 = vmatprep.subr.bf16.mxu0 0
        %1105 = vmatpush1.bf16.msra.mxu0 0
        %1106 = vmatprep.subr.bf16.mxu0 0
        %1107 = vmatpush1.bf16.msra.mxu0 0
        %1108 = vmatprep.subr.bf16.mxu0 0
        %1109 = vmatpush1.bf16.msra.mxu0 0
        %1110 = vmatprep.subr.bf16.mxu0 0
        %1111 = vmatpush1.bf16.msra.mxu0 0
        %1112 = vmatprep.subr.bf16.mxu0 0
        %1113 = vmatpush1.bf16.msra.mxu0 0
        %1114 = vmatprep.subr.bf16.mxu0 0
        %1115 = vmatpush1.bf16.msra.mxu0 0
        %1116 = vmatprep.subr.bf16.mxu0 0
        %1117 = vmatpush1.bf16.msra.mxu0 0
        %1118 = vmatprep.subr.bf16.mxu0 0
        %1119 = vmatpush1.bf16.msra.mxu0 0
        %1120 = vmatprep.mubr.bf16.mxu0 0
        %1121 = vmatmul.mubr.bf16.gmra.mrb[0].mxu0 %v668
        %v1122 = vpop.f32.mrb[0].mxu0
        %v1123 = vadd.f32 %v273, %v1122
        %v1124 = vpop.f32.mrb[0].mxu0
        %v1125 = vadd.f32 %v273, %v1124
        %v1126 = vpop.f32.mrb[0].mxu0
        %v1127 = vadd.f32 %v278, %v1126
        %v1128 = vpop.f32.mrb[0].mxu0
        %v1129 = vadd.f32 %v278, %v1128
        %1130 = vdwg.mxu0
        %1131 = vmatprep.subr.bf16.mxu0 %v702
        %1132 = vmatpush1.bf16.msra.mxu0 %v699
        %1133 = vmatprep.subr.bf16.mxu0 0
        %1134 = vmatpush1.bf16.msra.mxu0 0
        %1135 = vmatprep.subr.bf16.mxu0 0
        %1136 = vmatpush1.bf16.msra.mxu0 0
        %1137 = vmatprep.subr.bf16.mxu0 0
        %1138 = vmatpush1.bf16.msra.mxu0 0
        %1139 = vmatprep.subr.bf16.mxu0 0
        %1140 = vmatpush1.bf16.msra.mxu0 0
        %1141 = vmatprep.subr.bf16.mxu0 0
        %1142 = vmatpush1.bf16.msra.mxu0 0
        %1143 = vmatprep.subr.bf16.mxu0 0
        %1144 = vmatpush1.bf16.msra.mxu0 0
        %1145 = vmatprep.subr.bf16.mxu0 0
        %1146 = vmatpush1.bf16.msra.mxu0 0
        %1147 = vmatprep.subr.bf16.mxu0 0
        %1148 = vmatpush1.bf16.msra.mxu0 0
        %1149 = vmatprep.subr.bf16.mxu0 0
        %1150 = vmatpush1.bf16.msra.mxu0 0
        %1151 = vmatprep.subr.bf16.mxu0 0
        %1152 = vmatpush1.bf16.msra.mxu0 0
        %1153 = vmatprep.subr.bf16.mxu0 0
        %1154 = vmatpush1.bf16.msra.mxu0 0
        %1155 = vmatprep.subr.bf16.mxu0 0
        %1156 = vmatpush1.bf16.msra.mxu0 0
        %1157 = vmatprep.subr.bf16.mxu0 0
        %1158 = vmatpush1.bf16.msra.mxu0 0
        %1159 = vmatprep.subr.bf16.mxu0 0
        %1160 = vmatpush1.bf16.msra.mxu0 0
        %1161 = vmatprep.subr.bf16.mxu0 0
        %1162 = vmatpush1.bf16.msra.mxu0 0
        %1163 = vmatprep.mubr.bf16.mxu0 0
        %1164 = vmatmul.mubr.bf16.gmra.mrb[0].mxu0 %v668
        %v1165 = vpop.f32.mrb[0].mxu0
        %v1166 = vadd.f32 %v273, %v1165
        %v1167 = vpop.f32.mrb[0].mxu0
        %v1168 = vadd.f32 %v273, %v1167
        %v1169 = vpop.f32.mrb[0].mxu0
        %v1170 = vadd.f32 %v278, %v1169
        %v1171 = vpop.f32.mrb[0].mxu0
        %v1172 = vadd.f32 %v278, %v1171
        %1173 = vdwg.mxu0
        %1174 = vmatprep.subr.bf16.mxu0 %v708
        %1175 = vmatpush1.bf16.msra.mxu0 %v705
        %1176 = vmatprep.subr.bf16.mxu0 0
        %1177 = vmatpush1.bf16.msra.mxu0 0
        %1178 = vmatprep.subr.bf16.mxu0 0
        %1179 = vmatpush1.bf16.msra.mxu0 0
        %1180 = vmatprep.subr.bf16.mxu0 0
        %1181 = vmatpush1.bf16.msra.mxu0 0
        %1182 = vmatprep.subr.bf16.mxu0 0
        %1183 = vmatpush1.bf16.msra.mxu0 0
        %1184 = vmatprep.subr.bf16.mxu0 0
        %1185 = vmatpush1.bf16.msra.mxu0 0
        %1186 = vmatprep.subr.bf16.mxu0 0
        %1187 = vmatpush1.bf16.msra.mxu0 0
        %1188 = vmatprep.subr.bf16.mxu0 0
        %1189 = vmatpush1.bf16.msra.mxu0 0
        %1190 = vmatprep.subr.bf16.mxu0 0
        %1191 = vmatpush1.bf16.msra.mxu0 0
        %1192 = vmatprep.subr.bf16.mxu0 0
        %1193 = vmatpush1.bf16.msra.mxu0 0
        %1194 = vmatprep.subr.bf16.mxu0 0
        %1195 = vmatpush1.bf16.msra.mxu0 0
        %1196 = vmatprep.subr.bf16.mxu0 0
        %1197 = vmatpush1.bf16.msra.mxu0 0
        %1198 = vmatprep.subr.bf16.mxu0 0
        %1199 = vmatpush1.bf16.msra.mxu0 0
        %1200 = vmatprep.subr.bf16.mxu0 0
        %1201 = vmatpush1.bf16.msra.mxu0 0
        %1202 = vmatprep.subr.bf16.mxu0 0
        %1203 = vmatpush1.bf16.msra.mxu0 0
        %1204 = vmatprep.subr.bf16.mxu0 0
        %1205 = vmatpush1.bf16.msra.mxu0 0
        %1206 = vmatprep.mubr.bf16.mxu0 0
        %1207 = vmatmul.mubr.bf16.gmra.mrb[0].mxu0 %v668
        %v1208 = vpop.f32.mrb[0].mxu0
        %v1209 = vadd.f32 %v273, %v1208
        %v1210 = vpop.f32.mrb[0].mxu0
        %v1211 = vadd.f32 %v273, %v1210
        %v1212 = vpop.f32.mrb[0].mxu0
        %v1213 = vadd.f32 %v278, %v1212
        %v1214 = vpop.f32.mrb[0].mxu0
        %v1215 = vadd.f32 %v278, %v1214
        %1216 = vdwg.mxu0
        %1217 = vmatprep.subr.bf16.mxu0 %v714
        %1218 = vmatpush1.bf16.msra.mxu0 %v711
        %1219 = vmatprep.subr.bf16.mxu0 0
        %1220 = vmatpush1.bf16.msra.mxu0 0
        %1221 = vmatprep.subr.bf16.mxu0 0
        %1222 = vmatpush1.bf16.msra.mxu0 0
        %1223 = vmatprep.subr.bf16.mxu0 0
        %1224 = vmatpush1.bf16.msra.mxu0 0
        %1225 = vmatprep.subr.bf16.mxu0 0
        %1226 = vmatpush1.bf16.msra.mxu0 0
        %1227 = vmatprep.subr.bf16.mxu0 0
        %1228 = vmatpush1.bf16.msra.mxu0 0
        %1229 = vmatprep.subr.bf16.mxu0 0
        %1230 = vmatpush1.bf16.msra.mxu0 0
        %1231 = vmatprep.subr.bf16.mxu0 0
        %1232 = vmatpush1.bf16.msra.mxu0 0
        %1233 = vmatprep.subr.bf16.mxu0 0
        %1234 = vmatpush1.bf16.msra.mxu0 0
        %1235 = vmatprep.subr.bf16.mxu0 0
        %1236 = vmatpush1.bf16.msra.mxu0 0
        %1237 = vmatprep.subr.bf16.mxu0 0
        %1238 = vmatpush1.bf16.msra.mxu0 0
        %1239 = vmatprep.subr.bf16.mxu0 0
        %1240 = vmatpush1.bf16.msra.mxu0 0
        %1241 = vmatprep.subr.bf16.mxu0 0
        %1242 = vmatpush1.bf16.msra.mxu0 0
        %1243 = vmatprep.subr.bf16.mxu0 0
        %1244 = vmatpush1.bf16.msra.mxu0 0
        %1245 = vmatprep.subr.bf16.mxu0 0
        %1246 = vmatpush1.bf16.msra.mxu0 0
        %1247 = vmatprep.subr.bf16.mxu0 0
        %1248 = vmatpush1.bf16.msra.mxu0 0
        %1249 = vmatprep.mubr.bf16.mxu0 0
        %1250 = vmatmul.mubr.bf16.gmra.mrb[0].mxu0 %v668
        %v1251 = vpop.f32.mrb[0].mxu0
        %v1252 = vadd.f32 %v273, %v1251
        %v1253 = vpop.f32.mrb[0].mxu0
        %v1254 = vadd.f32 %v273, %v1253
        %v1255 = vpop.f32.mrb[0].mxu0
        %v1256 = vadd.f32 %v278, %v1255
        %v1257 = vpop.f32.mrb[0].mxu0
        %v1258 = vadd.f32 %v278, %v1257
        %1259 = vdwg.mxu0
        %1260 = vmatprep.subr.bf16.mxu0 %v720
        %1261 = vmatpush1.bf16.msra.mxu0 %v717
        %1262 = vmatprep.subr.bf16.mxu0 0
        %1263 = vmatpush1.bf16.msra.mxu0 0
        %1264 = vmatprep.subr.bf16.mxu0 0
        %1265 = vmatpush1.bf16.msra.mxu0 0
        %1266 = vmatprep.subr.bf16.mxu0 0
        %1267 = vmatpush1.bf16.msra.mxu0 0
        %1268 = vmatprep.subr.bf16.mxu0 0
        %1269 = vmatpush1.bf16.msra.mxu0 0
        %1270 = vmatprep.subr.bf16.mxu0 0
        %1271 = vmatpush1.bf16.msra.mxu0 0
        %1272 = vmatprep.subr.bf16.mxu0 0
        %1273 = vmatpush1.bf16.msra.mxu0 0
        %1274 = vmatprep.subr.bf16.mxu0 0
        %1275 = vmatpush1.bf16.msra.mxu0 0
        %1276 = vmatprep.subr.bf16.mxu0 0
        %1277 = vmatpush1.bf16.msra.mxu0 0
        %1278 = vmatprep.subr.bf16.mxu0 0
        %1279 = vmatpush1.bf16.msra.mxu0 0
        %1280 = vmatprep.subr.bf16.mxu0 0
        %1281 = vmatpush1.bf16.msra.mxu0 0
        %1282 = vmatprep.subr.bf16.mxu0 0
        %1283 = vmatpush1.bf16.msra.mxu0 0
        %1284 = vmatprep.subr.bf16.mxu0 0
        %1285 = vmatpush1.bf16.msra.mxu0 0
        %1286 = vmatprep.subr.bf16.mxu0 0
        %1287 = vmatpush1.bf16.msra.mxu0 0
        %1288 = vmatprep.subr.bf16.mxu0 0
        %1289 = vmatpush1.bf16.msra.mxu0 0
        %1290 = vmatprep.subr.bf16.mxu0 0
        %1291 = vmatpush1.bf16.msra.mxu0 0
        %1292 = vmatprep.mubr.bf16.mxu0 0
        %1293 = vmatmul.mubr.bf16.gmra.mrb[0].mxu0 %v668
        %v1294 = vpop.f32.mrb[0].mxu0
        %v1295 = vadd.f32 %v273, %v1294
        %v1296 = vpop.f32.mrb[0].mxu0
        %v1297 = vadd.f32 %v273, %v1296
        %v1298 = vpop.f32.mrb[0].mxu0
        %v1299 = vadd.f32 %v278, %v1298
        %v1300 = vpop.f32.mrb[0].mxu0
        %v1301 = vadd.f32 %v278, %v1300
        %1302 = vdwg.mxu0
        %1303 = vmatprep.subr.bf16.mxu0 %v726
        %1304 = vmatpush1.bf16.msra.mxu0 %v723
        %1305 = vmatprep.subr.bf16.mxu0 0
        %1306 = vmatpush1.bf16.msra.mxu0 0
        %1307 = vmatprep.subr.bf16.mxu0 0
        %1308 = vmatpush1.bf16.msra.mxu0 0
        %1309 = vmatprep.subr.bf16.mxu0 0
        %1310 = vmatpush1.bf16.msra.mxu0 0
        %1311 = vmatprep.subr.bf16.mxu0 0
        %1312 = vmatpush1.bf16.msra.mxu0 0
        %1313 = vmatprep.subr.bf16.mxu0 0
        %1314 = vmatpush1.bf16.msra.mxu0 0
        %1315 = vmatprep.subr.bf16.mxu0 0
        %1316 = vmatpush1.bf16.msra.mxu0 0
        %1317 = vmatprep.subr.bf16.mxu0 0
        %1318 = vmatpush1.bf16.msra.mxu0 0
        %1319 = vmatprep.subr.bf16.mxu0 0
        %1320 = vmatpush1.bf16.msra.mxu0 0
        %1321 = vmatprep.subr.bf16.mxu0 0
        %1322 = vmatpush1.bf16.msra.mxu0 0
        %1323 = vmatprep.subr.bf16.mxu0 0
        %1324 = vmatpush1.bf16.msra.mxu0 0
        %1325 = vmatprep.subr.bf16.mxu0 0
        %1326 = vmatpush1.bf16.msra.mxu0 0
        %1327 = vmatprep.subr.bf16.mxu0 0
        %1328 = vmatpush1.bf16.msra.mxu0 0
        %1329 = vmatprep.subr.bf16.mxu0 0
        %1330 = vmatpush1.bf16.msra.mxu0 0
        %1331 = vmatprep.subr.bf16.mxu0 0
        %1332 = vmatpush1.bf16.msra.mxu0 0
        %1333 = vmatprep.subr.bf16.mxu0 0
        %1334 = vmatpush1.bf16.msra.mxu0 0
        %1335 = vmatprep.mubr.bf16.mxu0 0
        %1336 = vmatmul.mubr.bf16.gmra.mrb[0].mxu0 %v668
        %v1337 = vpop.f32.mrb[0].mxu0
        %v1338 = vadd.f32 %v273, %v1337
        %v1339 = vpop.f32.mrb[0].mxu0
        %v1340 = vadd.f32 %v273, %v1339
        %v1341 = vpop.f32.mrb[0].mxu0
        %v1342 = vadd.f32 %v278, %v1341
        %v1343 = vpop.f32.mrb[0].mxu0
        %v1344 = vadd.f32 %v278, %v1343
        %1345 = vdwg.mxu0
        %1346 = vmatprep.subr.bf16.mxu0 %v732
        %1347 = vmatpush1.bf16.msra.mxu0 %v729
        %1348 = vmatprep.subr.bf16.mxu0 0
        %1349 = vmatpush1.bf16.msra.mxu0 0
        %1350 = vmatprep.subr.bf16.mxu0 0
        %1351 = vmatpush1.bf16.msra.mxu0 0
        %1352 = vmatprep.subr.bf16.mxu0 0
        %1353 = vmatpush1.bf16.msra.mxu0 0
        %1354 = vmatprep.subr.bf16.mxu0 0
        %1355 = vmatpush1.bf16.msra.mxu0 0
        %1356 = vmatprep.subr.bf16.mxu0 0
        %1357 = vmatpush1.bf16.msra.mxu0 0
        %1358 = vmatprep.subr.bf16.mxu0 0
        %1359 = vmatpush1.bf16.msra.mxu0 0
        %1360 = vmatprep.subr.bf16.mxu0 0
        %1361 = vmatpush1.bf16.msra.mxu0 0
        %1362 = vmatprep.subr.bf16.mxu0 0
        %1363 = vmatpush1.bf16.msra.mxu0 0
        %1364 = vmatprep.subr.bf16.mxu0 0
        %1365 = vmatpush1.bf16.msra.mxu0 0
        %1366 = vmatprep.subr.bf16.mxu0 0
        %1367 = vmatpush1.bf16.msra.mxu0 0
        %1368 = vmatprep.subr.bf16.mxu0 0
        %1369 = vmatpush1.bf16.msra.mxu0 0
        %1370 = vmatprep.subr.bf16.mxu0 0
        %1371 = vmatpush1.bf16.msra.mxu0 0
        %1372 = vmatprep.subr.bf16.mxu0 0
        %1373 = vmatpush1.bf16.msra.mxu0 0
        %1374 = vmatprep.subr.bf16.mxu0 0
        %1375 = vmatpush1.bf16.msra.mxu0 0
        %1376 = vmatprep.subr.bf16.mxu0 0
        %1377 = vmatpush1.bf16.msra.mxu0 0
        %1378 = vmatprep.mubr.bf16.mxu0 0
        %1379 = vmatmul.mubr.bf16.gmra.mrb[0].mxu0 %v668
        %v1380 = vpop.f32.mrb[0].mxu0
        %v1381 = vadd.f32 %v273, %v1380
        %v1382 = vpop.f32.mrb[0].mxu0
        %v1383 = vadd.f32 %v273, %v1382
        %v1384 = vpop.f32.mrb[0].mxu0
        %v1385 = vadd.f32 %v278, %v1384
        %v1386 = vpop.f32.mrb[0].mxu0
        %v1387 = vadd.f32 %v278, %v1386
        %1388 = vdwg.mxu0
        %1389 = vmatprep.subr.bf16.mxu0 %v738
        %1390 = vmatpush1.bf16.msra.mxu0 %v735
        %1391 = vmatprep.subr.bf16.mxu0 0
        %1392 = vmatpush1.bf16.msra.mxu0 0
        %1393 = vmatprep.subr.bf16.mxu0 0
        %1394 = vmatpush1.bf16.msra.mxu0 0
        %1395 = vmatprep.subr.bf16.mxu0 0
        %1396 = vmatpush1.bf16.msra.mxu0 0
        %1397 = vmatprep.subr.bf16.mxu0 0
        %1398 = vmatpush1.bf16.msra.mxu0 0
        %1399 = vmatprep.subr.bf16.mxu0 0
        %1400 = vmatpush1.bf16.msra.mxu0 0
        %1401 = vmatprep.subr.bf16.mxu0 0
        %1402 = vmatpush1.bf16.msra.mxu0 0
        %1403 = vmatprep.subr.bf16.mxu0 0
        %1404 = vmatpush1.bf16.msra.mxu0 0
        %1405 = vmatprep.subr.bf16.mxu0 0
        %1406 = vmatpush1.bf16.msra.mxu0 0
        %1407 = vmatprep.subr.bf16.mxu0 0
        %1408 = vmatpush1.bf16.msra.mxu0 0
        %1409 = vmatprep.subr.bf16.mxu0 0
        %1410 = vmatpush1.bf16.msra.mxu0 0
        %1411 = vmatprep.subr.bf16.mxu0 0
        %1412 = vmatpush1.bf16.msra.mxu0 0
        %1413 = vmatprep.subr.bf16.mxu0 0
        %1414 = vmatpush1.bf16.msra.mxu0 0
        %1415 = vmatprep.subr.bf16.mxu0 0
        %1416 = vmatpush1.bf16.msra.mxu0 0
        %1417 = vmatprep.subr.bf16.mxu0 0
        %1418 = vmatpush1.bf16.msra.mxu0 0
        %1419 = vmatprep.subr.bf16.mxu0 0
        %1420 = vmatpush1.bf16.msra.mxu0 0
        %1421 = vmatprep.mubr.bf16.mxu0 0
        %1422 = vmatmul.mubr.bf16.gmra.mrb[0].mxu0 %v668
        %v1423 = vpop.f32.mrb[0].mxu0
        %v1424 = vadd.f32 %v273, %v1423
        %v1425 = vpop.f32.mrb[0].mxu0
        %v1426 = vadd.f32 %v273, %v1425
        %v1427 = vpop.f32.mrb[0].mxu0
        %v1428 = vadd.f32 %v278, %v1427
        %v1429 = vpop.f32.mrb[0].mxu0
        %v1430 = vadd.f32 %v278, %v1429
        %1431 = vdwg.mxu0
        %1432 = vmatprep.subr.bf16.mxu0 %v744
        %1433 = vmatpush1.bf16.msra.mxu0 %v741
        %1434 = vmatprep.subr.bf16.mxu0 0
        %1435 = vmatpush1.bf16.msra.mxu0 0
        %1436 = vmatprep.subr.bf16.mxu0 0
        %1437 = vmatpush1.bf16.msra.mxu0 0
        %1438 = vmatprep.subr.bf16.mxu0 0
        %1439 = vmatpush1.bf16.msra.mxu0 0
        %1440 = vmatprep.subr.bf16.mxu0 0
        %1441 = vmatpush1.bf16.msra.mxu0 0
        %1442 = vmatprep.subr.bf16.mxu0 0
        %1443 = vmatpush1.bf16.msra.mxu0 0
        %1444 = vmatprep.subr.bf16.mxu0 0
        %1445 = vmatpush1.bf16.msra.mxu0 0
        %1446 = vmatprep.subr.bf16.mxu0 0
        %1447 = vmatpush1.bf16.msra.mxu0 0
        %1448 = vmatprep.subr.bf16.mxu0 0
        %1449 = vmatpush1.bf16.msra.mxu0 0
        %1450 = vmatprep.subr.bf16.mxu0 0
        %1451 = vmatpush1.bf16.msra.mxu0 0
        %1452 = vmatprep.subr.bf16.mxu0 0
        %1453 = vmatpush1.bf16.msra.mxu0 0
        %1454 = vmatprep.subr.bf16.mxu0 0
        %1455 = vmatpush1.bf16.msra.mxu0 0
        %1456 = vmatprep.subr.bf16.mxu0 0
        %1457 = vmatpush1.bf16.msra.mxu0 0
        %1458 = vmatprep.subr.bf16.mxu0 0
        %1459 = vmatpush1.bf16.msra.mxu0 0
        %1460 = vmatprep.subr.bf16.mxu0 0
        %1461 = vmatpush1.bf16.msra.mxu0 0
        %1462 = vmatprep.subr.bf16.mxu0 0
        %1463 = vmatpush1.bf16.msra.mxu0 0
        %1464 = vmatprep.mubr.bf16.mxu0 0
        %1465 = vmatmul.mubr.bf16.gmra.mrb[0].mxu0 %v668
        %v1466 = vpop.f32.mrb[0].mxu0
        %v1467 = vadd.f32 %v273, %v1466
        %v1468 = vpop.f32.mrb[0].mxu0
        %v1469 = vadd.f32 %v273, %v1468
        %v1470 = vpop.f32.mrb[0].mxu0
        %v1471 = vadd.f32 %v278, %v1470
        %v1472 = vpop.f32.mrb[0].mxu0
        %v1473 = vadd.f32 %v278, %v1472
        %1474 = vdwg.mxu0
        %1475 = vmatprep.subr.bf16.mxu0 %v750
        %1476 = vmatpush1.bf16.msra.mxu0 %v747
        %1477 = vmatprep.subr.bf16.mxu0 0
        %1478 = vmatpush1.bf16.msra.mxu0 0
        %1479 = vmatprep.subr.bf16.mxu0 0
        %1480 = vmatpush1.bf16.msra.mxu0 0
        %1481 = vmatprep.subr.bf16.mxu0 0
        %1482 = vmatpush1.bf16.msra.mxu0 0
        %1483 = vmatprep.subr.bf16.mxu0 0
        %1484 = vmatpush1.bf16.msra.mxu0 0
        %1485 = vmatprep.subr.bf16.mxu0 0
        %1486 = vmatpush1.bf16.msra.mxu0 0
        %1487 = vmatprep.subr.bf16.mxu0 0
        %1488 = vmatpush1.bf16.msra.mxu0 0
        %1489 = vmatprep.subr.bf16.mxu0 0
        %1490 = vmatpush1.bf16.msra.mxu0 0
        %1491 = vmatprep.subr.bf16.mxu0 0
        %1492 = vmatpush1.bf16.msra.mxu0 0
        %1493 = vmatprep.subr.bf16.mxu0 0
        %1494 = vmatpush1.bf16.msra.mxu0 0
        %1495 = vmatprep.subr.bf16.mxu0 0
        %1496 = vmatpush1.bf16.msra.mxu0 0
        %1497 = vmatprep.subr.bf16.mxu0 0
        %1498 = vmatpush1.bf16.msra.mxu0 0
        %1499 = vmatprep.subr.bf16.mxu0 0
        %1500 = vmatpush1.bf16.msra.mxu0 0
        %1501 = vmatprep.subr.bf16.mxu0 0
        %1502 = vmatpush1.bf16.msra.mxu0 0
        %1503 = vmatprep.subr.bf16.mxu0 0
        %1504 = vmatpush1.bf16.msra.mxu0 0
        %1505 = vmatprep.subr.bf16.mxu0 0
        %1506 = vmatpush1.bf16.msra.mxu0 0
        %1507 = vmatprep.mubr.bf16.mxu0 0
        %1508 = vmatmul.mubr.bf16.gmra.mrb[0].mxu0 %v668
        %v1509 = vpop.f32.mrb[0].mxu0
        %v1510 = vadd.f32 %v273, %v1509
        %v1511 = vpop.f32.mrb[0].mxu0
        %v1512 = vadd.f32 %v273, %v1511
        %v1513 = vpop.f32.mrb[0].mxu0
        %v1514 = vadd.f32 %v278, %v1513
        %v1515 = vpop.f32.mrb[0].mxu0
        %v1516 = vadd.f32 %v278, %v1515
        %1517 = vdwg.mxu0
        %1518 = vmatprep.subr.bf16.mxu0 %v756
        %1519 = vmatpush1.bf16.msra.mxu0 %v753
        %1520 = vmatprep.subr.bf16.mxu0 0
        %1521 = vmatpush1.bf16.msra.mxu0 0
        %1522 = vmatprep.subr.bf16.mxu0 0
        %1523 = vmatpush1.bf16.msra.mxu0 0
        %1524 = vmatprep.subr.bf16.mxu0 0
        %1525 = vmatpush1.bf16.msra.mxu0 0
        %1526 = vmatprep.subr.bf16.mxu0 0
        %1527 = vmatpush1.bf16.msra.mxu0 0
        %1528 = vmatprep.subr.bf16.mxu0 0
        %1529 = vmatpush1.bf16.msra.mxu0 0
        %1530 = vmatprep.subr.bf16.mxu0 0
        %1531 = vmatpush1.bf16.msra.mxu0 0
        %1532 = vmatprep.subr.bf16.mxu0 0
        %1533 = vmatpush1.bf16.msra.mxu0 0
        %1534 = vmatprep.subr.bf16.mxu0 0
        %1535 = vmatpush1.bf16.msra.mxu0 0
        %1536 = vmatprep.subr.bf16.mxu0 0
        %1537 = vmatpush1.bf16.msra.mxu0 0
        %1538 = vmatprep.subr.bf16.mxu0 0
        %1539 = vmatpush1.bf16.msra.mxu0 0
        %1540 = vmatprep.subr.bf16.mxu0 0
        %1541 = vmatpush1.bf16.msra.mxu0 0
        %1542 = vmatprep.subr.bf16.mxu0 0
        %1543 = vmatpush1.bf16.msra.mxu0 0
        %1544 = vmatprep.subr.bf16.mxu0 0
        %1545 = vmatpush1.bf16.msra.mxu0 0
        %1546 = vmatprep.subr.bf16.mxu0 0
        %1547 = vmatpush1.bf16.msra.mxu0 0
        %1548 = vmatprep.subr.bf16.mxu0 0
        %1549 = vmatpush1.bf16.msra.mxu0 0
        %1550 = vmatprep.mubr.bf16.mxu0 0
        %1551 = vmatmul.mubr.bf16.gmra.mrb[0].mxu0 %v668
        %v1552 = vpop.f32.mrb[0].mxu0
        %v1553 = vadd.f32 %v273, %v1552
        %v1554 = vpop.f32.mrb[0].mxu0
        %v1555 = vadd.f32 %v273, %v1554
        %v1556 = vpop.f32.mrb[0].mxu0
        %v1557 = vadd.f32 %v278, %v1556
        %v1558 = vpop.f32.mrb[0].mxu0
        %v1559 = vadd.f32 %v278, %v1558
        %1560 = vdwg.mxu0
        %1561 = vmatprep.subr.bf16.mxu0 %v762
        %1562 = vmatpush1.bf16.msra.mxu0 %v759
        %1563 = vmatprep.subr.bf16.mxu0 0
        %1564 = vmatpush1.bf16.msra.mxu0 0
        %1565 = vmatprep.subr.bf16.mxu0 0
        %1566 = vmatpush1.bf16.msra.mxu0 0
        %1567 = vmatprep.subr.bf16.mxu0 0
        %1568 = vmatpush1.bf16.msra.mxu0 0
        %1569 = vmatprep.subr.bf16.mxu0 0
        %1570 = vmatpush1.bf16.msra.mxu0 0
        %1571 = vmatprep.subr.bf16.mxu0 0
        %1572 = vmatpush1.bf16.msra.mxu0 0
        %1573 = vmatprep.subr.bf16.mxu0 0
        %1574 = vmatpush1.bf16.msra.mxu0 0
        %1575 = vmatprep.subr.bf16.mxu0 0
        %1576 = vmatpush1.bf16.msra.mxu0 0
        %1577 = vmatprep.subr.bf16.mxu0 0
        %1578 = vmatpush1.bf16.msra.mxu0 0
        %1579 = vmatprep.subr.bf16.mxu0 0
        %1580 = vmatpush1.bf16.msra.mxu0 0
        %1581 = vmatprep.subr.bf16.mxu0 0
        %1582 = vmatpush1.bf16.msra.mxu0 0
        %1583 = vmatprep.subr.bf16.mxu0 0
        %1584 = vmatpush1.bf16.msra.mxu0 0
        %1585 = vmatprep.subr.bf16.mxu0 0
        %1586 = vmatpush1.bf16.msra.mxu0 0
        %1587 = vmatprep.subr.bf16.mxu0 0
        %1588 = vmatpush1.bf16.msra.mxu0 0
        %1589 = vmatprep.subr.bf16.mxu0 0
        %1590 = vmatpush1.bf16.msra.mxu0 0
        %1591 = vmatprep.subr.bf16.mxu0 0
        %1592 = vmatpush1.bf16.msra.mxu0 0
        %1593 = vmatprep.mubr.bf16.mxu0 0
        %1594 = vmatmul.mubr.bf16.gmra.mrb[0].mxu0 %v668
        %v1595 = vpop.f32.mrb[0].mxu0
        %v1596 = vadd.f32 %v273, %v1595
        %v1597 = vpop.f32.mrb[0].mxu0
        %v1598 = vadd.f32 %v273, %v1597
        %v1599 = vpop.f32.mrb[0].mxu0
        %v1600 = vadd.f32 %v278, %v1599
        %v1601 = vpop.f32.mrb[0].mxu0
        %v1602 = vadd.f32 %v278, %v1601
        %1603 = vdwg.mxu0
        %1604 = vmatprep.subr.bf16.mxu0 %v768
        %1605 = vmatpush1.bf16.msra.mxu0 %v765
        %1606 = vmatprep.subr.bf16.mxu0 0
        %1607 = vmatpush1.bf16.msra.mxu0 0
        %1608 = vmatprep.subr.bf16.mxu0 0
        %1609 = vmatpush1.bf16.msra.mxu0 0
        %1610 = vmatprep.subr.bf16.mxu0 0
        %1611 = vmatpush1.bf16.msra.mxu0 0
        %1612 = vmatprep.subr.bf16.mxu0 0
        %1613 = vmatpush1.bf16.msra.mxu0 0
        %1614 = vmatprep.subr.bf16.mxu0 0
        %1615 = vmatpush1.bf16.msra.mxu0 0
        %1616 = vmatprep.subr.bf16.mxu0 0
        %1617 = vmatpush1.bf16.msra.mxu0 0
        %1618 = vmatprep.subr.bf16.mxu0 0
        %1619 = vmatpush1.bf16.msra.mxu0 0
        %1620 = vmatprep.subr.bf16.mxu0 0
        %1621 = vmatpush1.bf16.msra.mxu0 0
        %1622 = vmatprep.subr.bf16.mxu0 0
        %1623 = vmatpush1.bf16.msra.mxu0 0
        %1624 = vmatprep.subr.bf16.mxu0 0
        %1625 = vmatpush1.bf16.msra.mxu0 0
        %1626 = vmatprep.subr.bf16.mxu0 0
        %1627 = vmatpush1.bf16.msra.mxu0 0
        %1628 = vmatprep.subr.bf16.mxu0 0
        %1629 = vmatpush1.bf16.msra.mxu0 0
        %1630 = vmatprep.subr.bf16.mxu0 0
        %1631 = vmatpush1.bf16.msra.mxu0 0
        %1632 = vmatprep.subr.bf16.mxu0 0
        %1633 = vmatpush1.bf16.msra.mxu0 0
        %1634 = vmatprep.subr.bf16.mxu0 0
        %1635 = vmatpush1.bf16.msra.mxu0 0
        %1636 = vmatprep.mubr.bf16.mxu0 0
        %1637 = vmatmul.mubr.bf16.gmra.mrb[0].mxu0 %v668
        %v1638 = vpop.f32.mrb[0].mxu0
        %v1639 = vadd.f32 %v273, %v1638
        %v1640 = vpop.f32.mrb[0].mxu0
        %v1641 = vadd.f32 %v273, %v1640
        %v1642 = vpop.f32.mrb[0].mxu0
        %v1643 = vadd.f32 %v278, %v1642
        %v1644 = vpop.f32.mrb[0].mxu0
        %v1645 = vadd.f32 %v278, %v1644
        %1646 = vdwg.mxu0
        %1647 = vmatprep.subr.bf16.mxu0 %v774
        %1648 = vmatpush1.bf16.msra.mxu0 %v771
        %1649 = vmatprep.subr.bf16.mxu0 0
        %1650 = vmatpush1.bf16.msra.mxu0 0
        %1651 = vmatprep.subr.bf16.mxu0 0
        %1652 = vmatpush1.bf16.msra.mxu0 0
        %1653 = vmatprep.subr.bf16.mxu0 0
        %1654 = vmatpush1.bf16.msra.mxu0 0
        %1655 = vmatprep.subr.bf16.mxu0 0
        %1656 = vmatpush1.bf16.msra.mxu0 0
        %1657 = vmatprep.subr.bf16.mxu0 0
        %1658 = vmatpush1.bf16.msra.mxu0 0
        %1659 = vmatprep.subr.bf16.mxu0 0
        %1660 = vmatpush1.bf16.msra.mxu0 0
        %1661 = vmatprep.subr.bf16.mxu0 0
        %1662 = vmatpush1.bf16.msra.mxu0 0
        %1663 = vmatprep.subr.bf16.mxu0 0
        %1664 = vmatpush1.bf16.msra.mxu0 0
        %1665 = vmatprep.subr.bf16.mxu0 0
        %1666 = vmatpush1.bf16.msra.mxu0 0
        %1667 = vmatprep.subr.bf16.mxu0 0
        %1668 = vmatpush1.bf16.msra.mxu0 0
        %1669 = vmatprep.subr.bf16.mxu0 0
        %1670 = vmatpush1.bf16.msra.mxu0 0
        %1671 = vmatprep.subr.bf16.mxu0 0
        %1672 = vmatpush1.bf16.msra.mxu0 0
        %1673 = vmatprep.subr.bf16.mxu0 0
        %1674 = vmatpush1.bf16.msra.mxu0 0
        %1675 = vmatprep.subr.bf16.mxu0 0
        %1676 = vmatpush1.bf16.msra.mxu0 0
        %1677 = vmatprep.subr.bf16.mxu0 0
        %1678 = vmatpush1.bf16.msra.mxu0 0
        %1679 = vmatprep.mubr.bf16.mxu0 0
        %1680 = vmatmul.mubr.bf16.gmra.mrb[0].mxu0 %v668
        %v1681 = vpop.f32.mrb[0].mxu0
        %v1682 = vadd.f32 %v273, %v1681
        %v1683 = vpop.f32.mrb[0].mxu0
        %v1684 = vadd.f32 %v273, %v1683
        %v1685 = vpop.f32.mrb[0].mxu0
        %v1686 = vadd.f32 %v278, %v1685
        %v1687 = vpop.f32.mrb[0].mxu0
        %v1688 = vadd.f32 %v278, %v1687
        %1689 = vdwg.mxu0
        %1690 = vmatprep.subr.bf16.mxu0 %v780
        %1691 = vmatpush1.bf16.msra.mxu0 %v777
        %1692 = vmatprep.subr.bf16.mxu0 0
        %1693 = vmatpush1.bf16.msra.mxu0 0
        %1694 = vmatprep.subr.bf16.mxu0 0
        %1695 = vmatpush1.bf16.msra.mxu0 0
        %1696 = vmatprep.subr.bf16.mxu0 0
        %1697 = vmatpush1.bf16.msra.mxu0 0
        %1698 = vmatprep.subr.bf16.mxu0 0
        %1699 = vmatpush1.bf16.msra.mxu0 0
        %1700 = vmatprep.subr.bf16.mxu0 0
        %1701 = vmatpush1.bf16.msra.mxu0 0
        %1702 = vmatprep.subr.bf16.mxu0 0
        %1703 = vmatpush1.bf16.msra.mxu0 0
        %1704 = vmatprep.subr.bf16.mxu0 0
        %1705 = vmatpush1.bf16.msra.mxu0 0
        %1706 = vmatprep.subr.bf16.mxu0 0
        %1707 = vmatpush1.bf16.msra.mxu0 0
        %1708 = vmatprep.subr.bf16.mxu0 0
        %1709 = vmatpush1.bf16.msra.mxu0 0
        %1710 = vmatprep.subr.bf16.mxu0 0
        %1711 = vmatpush1.bf16.msra.mxu0 0
        %1712 = vmatprep.subr.bf16.mxu0 0
        %1713 = vmatpush1.bf16.msra.mxu0 0
        %1714 = vmatprep.subr.bf16.mxu0 0
        %1715 = vmatpush1.bf16.msra.mxu0 0
        %1716 = vmatprep.subr.bf16.mxu0 0
        %1717 = vmatpush1.bf16.msra.mxu0 0
        %1718 = vmatprep.subr.bf16.mxu0 0
        %1719 = vmatpush1.bf16.msra.mxu0 0
        %1720 = vmatprep.subr.bf16.mxu0 0
        %1721 = vmatpush1.bf16.msra.mxu0 0
        %1722 = vmatprep.mubr.bf16.mxu0 0
        %1723 = vmatmul.mubr.bf16.gmra.mrb[0].mxu0 %v668
        %v1724 = vpop.f32.mrb[0].mxu0
        %v1725 = vadd.f32 %v273, %v1724
        %v1726 = vpop.f32.mrb[0].mxu0
        %v1727 = vadd.f32 %v273, %v1726
        %v1728 = vpop.f32.mrb[0].mxu0
        %v1729 = vadd.f32 %v278, %v1728
        %v1730 = vpop.f32.mrb[0].mxu0
        %v1731 = vadd.f32 %v278, %v1730
        %1732 = vdwg.mxu0
        %1733 = vmatprep.subr.bf16.mxu0 %v786
        %1734 = vmatpush1.bf16.msra.mxu0 %v783
        %1735 = vmatprep.subr.bf16.mxu0 0
        %1736 = vmatpush1.bf16.msra.mxu0 0
        %1737 = vmatprep.subr.bf16.mxu0 0
        %1738 = vmatpush1.bf16.msra.mxu0 0
        %1739 = vmatprep.subr.bf16.mxu0 0
        %1740 = vmatpush1.bf16.msra.mxu0 0
        %1741 = vmatprep.subr.bf16.mxu0 0
        %1742 = vmatpush1.bf16.msra.mxu0 0
        %1743 = vmatprep.subr.bf16.mxu0 0
        %1744 = vmatpush1.bf16.msra.mxu0 0
        %1745 = vmatprep.subr.bf16.mxu0 0
        %1746 = vmatpush1.bf16.msra.mxu0 0
        %1747 = vmatprep.subr.bf16.mxu0 0
        %1748 = vmatpush1.bf16.msra.mxu0 0
        %1749 = vmatprep.subr.bf16.mxu0 0
        %1750 = vmatpush1.bf16.msra.mxu0 0
        %1751 = vmatprep.subr.bf16.mxu0 0
        %1752 = vmatpush1.bf16.msra.mxu0 0
        %1753 = vmatprep.subr.bf16.mxu0 0
        %1754 = vmatpush1.bf16.msra.mxu0 0
        %1755 = vmatprep.subr.bf16.mxu0 0
        %1756 = vmatpush1.bf16.msra.mxu0 0
        %1757 = vmatprep.subr.bf16.mxu0 0
        %1758 = vmatpush1.bf16.msra.mxu0 0
        %1759 = vmatprep.subr.bf16.mxu0 0
        %1760 = vmatpush1.bf16.msra.mxu0 0
        %1761 = vmatprep.subr.bf16.mxu0 0
        %1762 = vmatpush1.bf16.msra.mxu0 0
        %1763 = vmatprep.subr.bf16.mxu0 0
        %1764 = vmatpush1.bf16.msra.mxu0 0
        %1765 = vmatprep.mubr.bf16.mxu0 0
        %1766 = vmatmul.mubr.bf16.gmra.mrb[0].mxu0 %v668
        %v1767 = vpop.f32.mrb[0].mxu0
        %v1768 = vadd.f32 %v273, %v1767
        %v1769 = vpop.f32.mrb[0].mxu0
        %v1770 = vadd.f32 %v273, %v1769
        %v1771 = vpop.f32.mrb[0].mxu0
        %v1772 = vadd.f32 %v278, %v1771
        %v1773 = vpop.f32.mrb[0].mxu0
        %v1774 = vadd.f32 %v278, %v1773
        %1775 = vdwg.mxu0
        %1776 = vmatprep.subr.bf16.mxu0 %v792
        %1777 = vmatpush1.bf16.msra.mxu0 %v789
        %1778 = vmatprep.subr.bf16.mxu0 0
        %1779 = vmatpush1.bf16.msra.mxu0 0
        %1780 = vmatprep.subr.bf16.mxu0 0
        %1781 = vmatpush1.bf16.msra.mxu0 0
        %1782 = vmatprep.subr.bf16.mxu0 0
        %1783 = vmatpush1.bf16.msra.mxu0 0
        %1784 = vmatprep.subr.bf16.mxu0 0
        %1785 = vmatpush1.bf16.msra.mxu0 0
        %1786 = vmatprep.subr.bf16.mxu0 0
        %1787 = vmatpush1.bf16.msra.mxu0 0
        %1788 = vmatprep.subr.bf16.mxu0 0
        %1789 = vmatpush1.bf16.msra.mxu0 0
        %1790 = vmatprep.subr.bf16.mxu0 0
        %1791 = vmatpush1.bf16.msra.mxu0 0
        %1792 = vmatprep.subr.bf16.mxu0 0
        %1793 = vmatpush1.bf16.msra.mxu0 0
        %1794 = vmatprep.subr.bf16.mxu0 0
        %1795 = vmatpush1.bf16.msra.mxu0 0
        %1796 = vmatprep.subr.bf16.mxu0 0
        %1797 = vmatpush1.bf16.msra.mxu0 0
        %1798 = vmatprep.subr.bf16.mxu0 0
        %1799 = vmatpush1.bf16.msra.mxu0 0
        %1800 = vmatprep.subr.bf16.mxu0 0
        %1801 = vmatpush1.bf16.msra.mxu0 0
        %1802 = vmatprep.subr.bf16.mxu0 0
        %1803 = vmatpush1.bf16.msra.mxu0 0
        %1804 = vmatprep.subr.bf16.mxu0 0
        %1805 = vmatpush1.bf16.msra.mxu0 0
        %1806 = vmatprep.subr.bf16.mxu0 0
        %1807 = vmatpush1.bf16.msra.mxu0 0
        %1808 = vmatprep.mubr.bf16.mxu0 0
        %1809 = vmatmul.mubr.bf16.gmra.mrb[0].mxu0 %v668
        %v1810 = vpop.f32.mrb[0].mxu0
        %v1811 = vadd.f32 %v273, %v1810
        %v1812 = vpop.f32.mrb[0].mxu0
        %v1813 = vadd.f32 %v273, %v1812
        %v1814 = vpop.f32.mrb[0].mxu0
        %v1815 = vadd.f32 %v278, %v1814
        %v1816 = vpop.f32.mrb[0].mxu0
        %v1817 = vadd.f32 %v278, %v1816
        %1818 = vdwg.mxu0
        %1819 = vmatprep.subr.bf16.mxu0 %v798
        %1820 = vmatpush1.bf16.msra.mxu0 %v795
        %1821 = vmatprep.subr.bf16.mxu0 0
        %1822 = vmatpush1.bf16.msra.mxu0 0
        %1823 = vmatprep.subr.bf16.mxu0 0
        %1824 = vmatpush1.bf16.msra.mxu0 0
        %1825 = vmatprep.subr.bf16.mxu0 0
        %1826 = vmatpush1.bf16.msra.mxu0 0
        %1827 = vmatprep.subr.bf16.mxu0 0
        %1828 = vmatpush1.bf16.msra.mxu0 0
        %1829 = vmatprep.subr.bf16.mxu0 0
        %1830 = vmatpush1.bf16.msra.mxu0 0
        %1831 = vmatprep.subr.bf16.mxu0 0
        %1832 = vmatpush1.bf16.msra.mxu0 0
        %1833 = vmatprep.subr.bf16.mxu0 0
        %1834 = vmatpush1.bf16.msra.mxu0 0
        %1835 = vmatprep.subr.bf16.mxu0 0
        %1836 = vmatpush1.bf16.msra.mxu0 0
        %1837 = vmatprep.subr.bf16.mxu0 0
        %1838 = vmatpush1.bf16.msra.mxu0 0
        %1839 = vmatprep.subr.bf16.mxu0 0
        %1840 = vmatpush1.bf16.msra.mxu0 0
        %1841 = vmatprep.subr.bf16.mxu0 0
        %1842 = vmatpush1.bf16.msra.mxu0 0
        %1843 = vmatprep.subr.bf16.mxu0 0
        %1844 = vmatpush1.bf16.msra.mxu0 0
        %1845 = vmatprep.subr.bf16.mxu0 0
        %1846 = vmatpush1.bf16.msra.mxu0 0
        %1847 = vmatprep.subr.bf16.mxu0 0
        %1848 = vmatpush1.bf16.msra.mxu0 0
        %1849 = vmatprep.subr.bf16.mxu0 0
        %1850 = vmatpush1.bf16.msra.mxu0 0
        %1851 = vmatprep.mubr.bf16.mxu0 0
        %1852 = vmatmul.mubr.bf16.gmra.mrb[0].mxu0 %v668
        %v1853 = vpop.f32.mrb[0].mxu0
        %v1854 = vadd.f32 %v273, %v1853
        %v1855 = vpop.f32.mrb[0].mxu0
        %v1856 = vadd.f32 %v273, %v1855
        %v1857 = vpop.f32.mrb[0].mxu0
        %v1858 = vadd.f32 %v278, %v1857
        %v1859 = vpop.f32.mrb[0].mxu0
        %v1860 = vadd.f32 %v278, %v1859
        %1861 = vdwg.mxu0
        %1862 = vmatprep.subr.bf16.mxu0 %v804
        %1863 = vmatpush1.bf16.msra.mxu0 %v801
        %1864 = vmatprep.subr.bf16.mxu0 0
        %1865 = vmatpush1.bf16.msra.mxu0 0
        %1866 = vmatprep.subr.bf16.mxu0 0
        %1867 = vmatpush1.bf16.msra.mxu0 0
        %1868 = vmatprep.subr.bf16.mxu0 0
        %1869 = vmatpush1.bf16.msra.mxu0 0
        %1870 = vmatprep.subr.bf16.mxu0 0
        %1871 = vmatpush1.bf16.msra.mxu0 0
        %1872 = vmatprep.subr.bf16.mxu0 0
        %1873 = vmatpush1.bf16.msra.mxu0 0
        %1874 = vmatprep.subr.bf16.mxu0 0
        %1875 = vmatpush1.bf16.msra.mxu0 0
        %1876 = vmatprep.subr.bf16.mxu0 0
        %1877 = vmatpush1.bf16.msra.mxu0 0
        %1878 = vmatprep.subr.bf16.mxu0 0
        %1879 = vmatpush1.bf16.msra.mxu0 0
        %1880 = vmatprep.subr.bf16.mxu0 0
        %1881 = vmatpush1.bf16.msra.mxu0 0
        %1882 = vmatprep.subr.bf16.mxu0 0
        %1883 = vmatpush1.bf16.msra.mxu0 0
        %1884 = vmatprep.subr.bf16.mxu0 0
        %1885 = vmatpush1.bf16.msra.mxu0 0
        %1886 = vmatprep.subr.bf16.mxu0 0
        %1887 = vmatpush1.bf16.msra.mxu0 0
        %1888 = vmatprep.subr.bf16.mxu0 0
        %1889 = vmatpush1.bf16.msra.mxu0 0
        %1890 = vmatprep.subr.bf16.mxu0 0
        %1891 = vmatpush1.bf16.msra.mxu0 0
        %1892 = vmatprep.subr.bf16.mxu0 0
        %1893 = vmatpush1.bf16.msra.mxu0 0
        %1894 = vmatprep.mubr.bf16.mxu0 0
        %1895 = vmatmul.mubr.bf16.gmra.mrb[0].mxu0 %v668
        %v1896 = vpop.f32.mrb[0].mxu0
        %v1897 = vadd.f32 %v273, %v1896
        %v1898 = vpop.f32.mrb[0].mxu0
        %v1899 = vadd.f32 %v273, %v1898
        %v1900 = vpop.f32.mrb[0].mxu0
        %v1901 = vadd.f32 %v278, %v1900
        %v1902 = vpop.f32.mrb[0].mxu0
        %v1903 = vadd.f32 %v278, %v1902
        %1904 = vdwg.mxu0
        %1905 = vmatprep.subr.bf16.mxu0 %v810
        %1906 = vmatpush1.bf16.msra.mxu0 %v807
        %1907 = vmatprep.subr.bf16.mxu0 0
        %1908 = vmatpush1.bf16.msra.mxu0 0
        %1909 = vmatprep.subr.bf16.mxu0 0
        %1910 = vmatpush1.bf16.msra.mxu0 0
        %1911 = vmatprep.subr.bf16.mxu0 0
        %1912 = vmatpush1.bf16.msra.mxu0 0
        %1913 = vmatprep.subr.bf16.mxu0 0
        %1914 = vmatpush1.bf16.msra.mxu0 0
        %1915 = vmatprep.subr.bf16.mxu0 0
        %1916 = vmatpush1.bf16.msra.mxu0 0
        %1917 = vmatprep.subr.bf16.mxu0 0
        %1918 = vmatpush1.bf16.msra.mxu0 0
        %1919 = vmatprep.subr.bf16.mxu0 0
        %1920 = vmatpush1.bf16.msra.mxu0 0
        %1921 = vmatprep.subr.bf16.mxu0 0
        %1922 = vmatpush1.bf16.msra.mxu0 0
        %1923 = vmatprep.subr.bf16.mxu0 0
        %1924 = vmatpush1.bf16.msra.mxu0 0
        %1925 = vmatprep.subr.bf16.mxu0 0
        %1926 = vmatpush1.bf16.msra.mxu0 0
        %1927 = vmatprep.subr.bf16.mxu0 0
        %1928 = vmatpush1.bf16.msra.mxu0 0
        %1929 = vmatprep.subr.bf16.mxu0 0
        %1930 = vmatpush1.bf16.msra.mxu0 0
        %1931 = vmatprep.subr.bf16.mxu0 0
        %1932 = vmatpush1.bf16.msra.mxu0 0
        %1933 = vmatprep.subr.bf16.mxu0 0
        %1934 = vmatpush1.bf16.msra.mxu0 0
        %1935 = vmatprep.subr.bf16.mxu0 0
        %1936 = vmatpush1.bf16.msra.mxu0 0
        %1937 = vmatprep.mubr.bf16.mxu0 0
        %1938 = vmatmul.mubr.bf16.gmra.mrb[0].mxu0 %v668
        %v1939 = vpop.f32.mrb[0].mxu0
        %v1940 = vadd.f32 %v273, %v1939
        %v1941 = vpop.f32.mrb[0].mxu0
        %v1942 = vadd.f32 %v273, %v1941
        %v1943 = vpop.f32.mrb[0].mxu0
        %v1944 = vadd.f32 %v278, %v1943
        %v1945 = vpop.f32.mrb[0].mxu0
        %v1946 = vadd.f32 %v278, %v1945
        %1947 = vdwg.mxu0
        %1948 = vmatprep.subr.bf16.mxu0 %v816
        %1949 = vmatpush1.bf16.msra.mxu0 %v813
        %1950 = vmatprep.subr.bf16.mxu0 0
        %1951 = vmatpush1.bf16.msra.mxu0 0
        %1952 = vmatprep.subr.bf16.mxu0 0
        %1953 = vmatpush1.bf16.msra.mxu0 0
        %1954 = vmatprep.subr.bf16.mxu0 0
        %1955 = vmatpush1.bf16.msra.mxu0 0
        %1956 = vmatprep.subr.bf16.mxu0 0
        %1957 = vmatpush1.bf16.msra.mxu0 0
        %1958 = vmatprep.subr.bf16.mxu0 0
        %1959 = vmatpush1.bf16.msra.mxu0 0
        %1960 = vmatprep.subr.bf16.mxu0 0
        %1961 = vmatpush1.bf16.msra.mxu0 0
        %1962 = vmatprep.subr.bf16.mxu0 0
        %1963 = vmatpush1.bf16.msra.mxu0 0
        %1964 = vmatprep.subr.bf16.mxu0 0
        %1965 = vmatpush1.bf16.msra.mxu0 0
        %1966 = vmatprep.subr.bf16.mxu0 0
        %1967 = vmatpush1.bf16.msra.mxu0 0
        %1968 = vmatprep.subr.bf16.mxu0 0
        %1969 = vmatpush1.bf16.msra.mxu0 0
        %1970 = vmatprep.subr.bf16.mxu0 0
        %1971 = vmatpush1.bf16.msra.mxu0 0
        %1972 = vmatprep.subr.bf16.mxu0 0
        %1973 = vmatpush1.bf16.msra.mxu0 0
        %1974 = vmatprep.subr.bf16.mxu0 0
        %1975 = vmatpush1.bf16.msra.mxu0 0
        %1976 = vmatprep.subr.bf16.mxu0 0
        %1977 = vmatpush1.bf16.msra.mxu0 0
        %1978 = vmatprep.subr.bf16.mxu0 0
        %1979 = vmatpush1.bf16.msra.mxu0 0
        %1980 = vmatprep.mubr.bf16.mxu0 0
        %1981 = vmatmul.mubr.bf16.gmra.mrb[0].mxu0 %v668
        %v1982 = vpop.f32.mrb[0].mxu0
        %v1983 = vadd.f32 %v273, %v1982
        %v1984 = vpop.f32.mrb[0].mxu0
        %v1985 = vadd.f32 %v273, %v1984
        %v1986 = vpop.f32.mrb[0].mxu0
        %v1987 = vadd.f32 %v278, %v1986
        %v1988 = vpop.f32.mrb[0].mxu0
        %v1989 = vadd.f32 %v278, %v1988
        %1990 = vdwg.mxu0
        %1991 = vmatprep.subr.bf16.mxu0 %v822
        %1992 = vmatpush1.bf16.msra.mxu0 %v819
        %1993 = vmatprep.subr.bf16.mxu0 0
        %1994 = vmatpush1.bf16.msra.mxu0 0
        %1995 = vmatprep.subr.bf16.mxu0 0
        %1996 = vmatpush1.bf16.msra.mxu0 0
        %1997 = vmatprep.subr.bf16.mxu0 0
        %1998 = vmatpush1.bf16.msra.mxu0 0
        %1999 = vmatprep.subr.bf16.mxu0 0
        %2000 = vmatpush1.bf16.msra.mxu0 0
        %2001 = vmatprep.subr.bf16.mxu0 0
        %2002 = vmatpush1.bf16.msra.mxu0 0
        %2003 = vmatprep.subr.bf16.mxu0 0
        %2004 = vmatpush1.bf16.msra.mxu0 0
        %2005 = vmatprep.subr.bf16.mxu0 0
        %2006 = vmatpush1.bf16.msra.mxu0 0
        %2007 = vmatprep.subr.bf16.mxu0 0
        %2008 = vmatpush1.bf16.msra.mxu0 0
        %2009 = vmatprep.subr.bf16.mxu0 0
        %2010 = vmatpush1.bf16.msra.mxu0 0
        %2011 = vmatprep.subr.bf16.mxu0 0
        %2012 = vmatpush1.bf16.msra.mxu0 0
        %2013 = vmatprep.subr.bf16.mxu0 0
        %2014 = vmatpush1.bf16.msra.mxu0 0
        %2015 = vmatprep.subr.bf16.mxu0 0
        %2016 = vmatpush1.bf16.msra.mxu0 0
        %2017 = vmatprep.subr.bf16.mxu0 0
        %2018 = vmatpush1.bf16.msra.mxu0 0
        %2019 = vmatprep.subr.bf16.mxu0 0
        %2020 = vmatpush1.bf16.msra.mxu0 0
        %2021 = vmatprep.subr.bf16.mxu0 0
        %2022 = vmatpush1.bf16.msra.mxu0 0
        %2023 = vmatprep.mubr.bf16.mxu0 0
        %2024 = vmatmul.mubr.bf16.gmra.mrb[0].mxu0 %v668
        %v2025 = vpop.f32.mrb[0].mxu0
        %v2026 = vadd.f32 %v273, %v2025
        %v2027 = vpop.f32.mrb[0].mxu0
        %v2028 = vadd.f32 %v273, %v2027
        %v2029 = vpop.f32.mrb[0].mxu0
        %v2030 = vadd.f32 %v278, %v2029
        %v2031 = vpop.f32.mrb[0].mxu0
        %v2032 = vadd.f32 %v278, %v2031
        %2033 = vdwg.mxu0
        %2034 = vmatprep.subr.bf16.mxu0 %v828
        %2035 = vmatpush1.bf16.msra.mxu0 %v825
        %2036 = vmatprep.subr.bf16.mxu0 0
        %2037 = vmatpush1.bf16.msra.mxu0 0
        %2038 = vmatprep.subr.bf16.mxu0 0
        %2039 = vmatpush1.bf16.msra.mxu0 0
        %2040 = vmatprep.subr.bf16.mxu0 0
        %2041 = vmatpush1.bf16.msra.mxu0 0
        %2042 = vmatprep.subr.bf16.mxu0 0
        %2043 = vmatpush1.bf16.msra.mxu0 0
        %2044 = vmatprep.subr.bf16.mxu0 0
        %2045 = vmatpush1.bf16.msra.mxu0 0
        %2046 = vmatprep.subr.bf16.mxu0 0
        %2047 = vmatpush1.bf16.msra.mxu0 0
        %2048 = vmatprep.subr.bf16.mxu0 0
        %2049 = vmatpush1.bf16.msra.mxu0 0
        %2050 = vmatprep.subr.bf16.mxu0 0
        %2051 = vmatpush1.bf16.msra.mxu0 0
        %2052 = vmatprep.subr.bf16.mxu0 0
        %2053 = vmatpush1.bf16.msra.mxu0 0
        %2054 = vmatprep.subr.bf16.mxu0 0
        %2055 = vmatpush1.bf16.msra.mxu0 0
        %2056 = vmatprep.subr.bf16.mxu0 0
        %2057 = vmatpush1.bf16.msra.mxu0 0
        %2058 = vmatprep.subr.bf16.mxu0 0
        %2059 = vmatpush1.bf16.msra.mxu0 0
        %2060 = vmatprep.subr.bf16.mxu0 0
        %2061 = vmatpush1.bf16.msra.mxu0 0
        %2062 = vmatprep.subr.bf16.mxu0 0
        %2063 = vmatpush1.bf16.msra.mxu0 0
        %2064 = vmatprep.subr.bf16.mxu0 0
        %2065 = vmatpush1.bf16.msra.mxu0 0
        %2066 = vmatprep.mubr.bf16.mxu0 0
        %2067 = vmatmul.mubr.bf16.gmra.mrb[0].mxu0 %v668
        %v2068 = vpop.f32.mrb[0].mxu0
        %v2069 = vadd.f32 %v273, %v2068
        %v2070 = vpop.f32.mrb[0].mxu0
        %v2071 = vadd.f32 %v273, %v2070
        %v2072 = vpop.f32.mrb[0].mxu0
        %v2073 = vadd.f32 %v278, %v2072
        %v2074 = vpop.f32.mrb[0].mxu0
        %v2075 = vadd.f32 %v278, %v2074
        %2076 = vdwg.mxu0
        %2077 = vmatprep.subr.bf16.mxu0 %v834
        %2078 = vmatpush1.bf16.msra.mxu0 %v831
        %2079 = vmatprep.subr.bf16.mxu0 0
        %2080 = vmatpush1.bf16.msra.mxu0 0
        %2081 = vmatprep.subr.bf16.mxu0 0
        %2082 = vmatpush1.bf16.msra.mxu0 0
        %2083 = vmatprep.subr.bf16.mxu0 0
        %2084 = vmatpush1.bf16.msra.mxu0 0
        %2085 = vmatprep.subr.bf16.mxu0 0
        %2086 = vmatpush1.bf16.msra.mxu0 0
        %2087 = vmatprep.subr.bf16.mxu0 0
        %2088 = vmatpush1.bf16.msra.mxu0 0
        %2089 = vmatprep.subr.bf16.mxu0 0
        %2090 = vmatpush1.bf16.msra.mxu0 0
        %2091 = vmatprep.subr.bf16.mxu0 0
        %2092 = vmatpush1.bf16.msra.mxu0 0
        %2093 = vmatprep.subr.bf16.mxu0 0
        %2094 = vmatpush1.bf16.msra.mxu0 0
        %2095 = vmatprep.subr.bf16.mxu0 0
        %2096 = vmatpush1.bf16.msra.mxu0 0
        %2097 = vmatprep.subr.bf16.mxu0 0
        %2098 = vmatpush1.bf16.msra.mxu0 0
        %2099 = vmatprep.subr.bf16.mxu0 0
        %2100 = vmatpush1.bf16.msra.mxu0 0
        %2101 = vmatprep.subr.bf16.mxu0 0
        %2102 = vmatpush1.bf16.msra.mxu0 0
        %2103 = vmatprep.subr.bf16.mxu0 0
        %2104 = vmatpush1.bf16.msra.mxu0 0
        %2105 = vmatprep.subr.bf16.mxu0 0
        %2106 = vmatpush1.bf16.msra.mxu0 0
        %2107 = vmatprep.subr.bf16.mxu0 0
        %2108 = vmatpush1.bf16.msra.mxu0 0
        %2109 = vmatprep.mubr.bf16.mxu0 0
        %2110 = vmatmul.mubr.bf16.gmra.mrb[0].mxu0 %v668
        %v2111 = vpop.f32.mrb[0].mxu0
        %v2112 = vadd.f32 %v273, %v2111
        %v2113 = vpop.f32.mrb[0].mxu0
        %v2114 = vadd.f32 %v273, %v2113
        %v2115 = vpop.f32.mrb[0].mxu0
        %v2116 = vadd.f32 %v278, %v2115
        %v2117 = vpop.f32.mrb[0].mxu0
        %v2118 = vadd.f32 %v278, %v2117
        %2119 = vdwg.mxu0
        %2120 = vmatprep.subr.bf16.mxu0 %v840
        %2121 = vmatpush1.bf16.msra.mxu0 %v837
        %2122 = vmatprep.subr.bf16.mxu0 0
        %2123 = vmatpush1.bf16.msra.mxu0 0
        %2124 = vmatprep.subr.bf16.mxu0 0
        %2125 = vmatpush1.bf16.msra.mxu0 0
        %2126 = vmatprep.subr.bf16.mxu0 0
        %2127 = vmatpush1.bf16.msra.mxu0 0
        %2128 = vmatprep.subr.bf16.mxu0 0
        %2129 = vmatpush1.bf16.msra.mxu0 0
        %2130 = vmatprep.subr.bf16.mxu0 0
        %2131 = vmatpush1.bf16.msra.mxu0 0
        %2132 = vmatprep.subr.bf16.mxu0 0
        %2133 = vmatpush1.bf16.msra.mxu0 0
        %2134 = vmatprep.subr.bf16.mxu0 0
        %2135 = vmatpush1.bf16.msra.mxu0 0
        %2136 = vmatprep.subr.bf16.mxu0 0
        %2137 = vmatpush1.bf16.msra.mxu0 0
        %2138 = vmatprep.subr.bf16.mxu0 0
        %2139 = vmatpush1.bf16.msra.mxu0 0
        %2140 = vmatprep.subr.bf16.mxu0 0
        %2141 = vmatpush1.bf16.msra.mxu0 0
        %2142 = vmatprep.subr.bf16.mxu0 0
        %2143 = vmatpush1.bf16.msra.mxu0 0
        %2144 = vmatprep.subr.bf16.mxu0 0
        %2145 = vmatpush1.bf16.msra.mxu0 0
        %2146 = vmatprep.subr.bf16.mxu0 0
        %2147 = vmatpush1.bf16.msra.mxu0 0
        %2148 = vmatprep.subr.bf16.mxu0 0
        %2149 = vmatpush1.bf16.msra.mxu0 0
        %2150 = vmatprep.subr.bf16.mxu0 0
        %2151 = vmatpush1.bf16.msra.mxu0 0
        %2152 = vmatprep.mubr.bf16.mxu0 0
        %2153 = vmatmul.mubr.bf16.gmra.mrb[0].mxu0 %v668
        %v2154 = vpop.f32.mrb[0].mxu0
        %v2155 = vadd.f32 %v273, %v2154
        %v2156 = vpop.f32.mrb[0].mxu0
        %v2157 = vadd.f32 %v273, %v2156
        %v2158 = vpop.f32.mrb[0].mxu0
        %v2159 = vadd.f32 %v278, %v2158
        %v2160 = vpop.f32.mrb[0].mxu0
        %v2161 = vadd.f32 %v278, %v2160
        %2162 = vdwg.mxu0
        %2163 = vmatprep.subr.bf16.mxu0 %v846
        %2164 = vmatpush1.bf16.msra.mxu0 %v843
        %2165 = vmatprep.subr.bf16.mxu0 0
        %2166 = vmatpush1.bf16.msra.mxu0 0
        %2167 = vmatprep.subr.bf16.mxu0 0
        %2168 = vmatpush1.bf16.msra.mxu0 0
        %2169 = vmatprep.subr.bf16.mxu0 0
        %2170 = vmatpush1.bf16.msra.mxu0 0
        %2171 = vmatprep.subr.bf16.mxu0 0
        %2172 = vmatpush1.bf16.msra.mxu0 0
        %2173 = vmatprep.subr.bf16.mxu0 0
        %2174 = vmatpush1.bf16.msra.mxu0 0
        %2175 = vmatprep.subr.bf16.mxu0 0
        %2176 = vmatpush1.bf16.msra.mxu0 0
        %2177 = vmatprep.subr.bf16.mxu0 0
        %2178 = vmatpush1.bf16.msra.mxu0 0
        %2179 = vmatprep.subr.bf16.mxu0 0
        %2180 = vmatpush1.bf16.msra.mxu0 0
        %2181 = vmatprep.subr.bf16.mxu0 0
        %2182 = vmatpush1.bf16.msra.mxu0 0
        %2183 = vmatprep.subr.bf16.mxu0 0
        %2184 = vmatpush1.bf16.msra.mxu0 0
        %2185 = vmatprep.subr.bf16.mxu0 0
        %2186 = vmatpush1.bf16.msra.mxu0 0
        %2187 = vmatprep.subr.bf16.mxu0 0
        %2188 = vmatpush1.bf16.msra.mxu0 0
        %2189 = vmatprep.subr.bf16.mxu0 0
        %2190 = vmatpush1.bf16.msra.mxu0 0
        %2191 = vmatprep.subr.bf16.mxu0 0
        %2192 = vmatpush1.bf16.msra.mxu0 0
        %2193 = vmatprep.subr.bf16.mxu0 0
        %2194 = vmatpush1.bf16.msra.mxu0 0
        %2195 = vmatprep.mubr.bf16.mxu0 0
        %2196 = vmatmul.mubr.bf16.gmra.mrb[0].mxu0 %v668
        %v2197 = vpop.f32.mrb[0].mxu0
        %v2198 = vadd.f32 %v273, %v2197
        %v2199 = vpop.f32.mrb[0].mxu0
        %v2200 = vadd.f32 %v273, %v2199
        %v2201 = vpop.f32.mrb[0].mxu0
        %v2202 = vadd.f32 %v278, %v2201
        %v2203 = vpop.f32.mrb[0].mxu0
        %v2204 = vadd.f32 %v278, %v2203
        %2205 = vdwg.mxu0
        %2206 = vmatprep.subr.bf16.mxu0 %v852
        %2207 = vmatpush1.bf16.msra.mxu0 %v849
        %2208 = vmatprep.subr.bf16.mxu0 0
        %2209 = vmatpush1.bf16.msra.mxu0 0
        %2210 = vmatprep.subr.bf16.mxu0 0
        %2211 = vmatpush1.bf16.msra.mxu0 0
        %2212 = vmatprep.subr.bf16.mxu0 0
        %2213 = vmatpush1.bf16.msra.mxu0 0
        %2214 = vmatprep.subr.bf16.mxu0 0
        %2215 = vmatpush1.bf16.msra.mxu0 0
        %2216 = vmatprep.subr.bf16.mxu0 0
        %2217 = vmatpush1.bf16.msra.mxu0 0
        %2218 = vmatprep.subr.bf16.mxu0 0
        %2219 = vmatpush1.bf16.msra.mxu0 0
        %2220 = vmatprep.subr.bf16.mxu0 0
        %2221 = vmatpush1.bf16.msra.mxu0 0
        %2222 = vmatprep.subr.bf16.mxu0 0
        %2223 = vmatpush1.bf16.msra.mxu0 0
        %2224 = vmatprep.subr.bf16.mxu0 0
        %2225 = vmatpush1.bf16.msra.mxu0 0
        %2226 = vmatprep.subr.bf16.mxu0 0
        %2227 = vmatpush1.bf16.msra.mxu0 0
        %2228 = vmatprep.subr.bf16.mxu0 0
        %2229 = vmatpush1.bf16.msra.mxu0 0
        %2230 = vmatprep.subr.bf16.mxu0 0
        %2231 = vmatpush1.bf16.msra.mxu0 0
        %2232 = vmatprep.subr.bf16.mxu0 0
        %2233 = vmatpush1.bf16.msra.mxu0 0
        %2234 = vmatprep.subr.bf16.mxu0 0
        %2235 = vmatpush1.bf16.msra.mxu0 0
        %2236 = vmatprep.subr.bf16.mxu0 0
        %2237 = vmatpush1.bf16.msra.mxu0 0
        %2238 = vmatprep.mubr.bf16.mxu0 0
        %2239 = vmatmul.mubr.bf16.gmra.mrb[0].mxu0 %v668
        %v2240 = vpop.f32.mrb[0].mxu0
        %v2241 = vadd.f32 %v273, %v2240
        %v2242 = vpop.f32.mrb[0].mxu0
        %v2243 = vadd.f32 %v273, %v2242
        %v2244 = vpop.f32.mrb[0].mxu0
        %v2245 = vadd.f32 %v278, %v2244
        %v2246 = vpop.f32.mrb[0].mxu0
        %v2247 = vadd.f32 %v278, %v2246
        %2248 = vdwg.mxu0
        %2249 = vmatprep.subr.bf16.mxu0 %v858
        %2250 = vmatpush1.bf16.msra.mxu0 %v855
        %2251 = vmatprep.subr.bf16.mxu0 0
        %2252 = vmatpush1.bf16.msra.mxu0 0
        %2253 = vmatprep.subr.bf16.mxu0 0
        %2254 = vmatpush1.bf16.msra.mxu0 0
        %2255 = vmatprep.subr.bf16.mxu0 0
        %2256 = vmatpush1.bf16.msra.mxu0 0
        %2257 = vmatprep.subr.bf16.mxu0 0
        %2258 = vmatpush1.bf16.msra.mxu0 0
        %2259 = vmatprep.subr.bf16.mxu0 0
        %2260 = vmatpush1.bf16.msra.mxu0 0
        %2261 = vmatprep.subr.bf16.mxu0 0
        %2262 = vmatpush1.bf16.msra.mxu0 0
        %2263 = vmatprep.subr.bf16.mxu0 0
        %2264 = vmatpush1.bf16.msra.mxu0 0
        %2265 = vmatprep.subr.bf16.mxu0 0
        %2266 = vmatpush1.bf16.msra.mxu0 0
        %2267 = vmatprep.subr.bf16.mxu0 0
        %2268 = vmatpush1.bf16.msra.mxu0 0
        %2269 = vmatprep.subr.bf16.mxu0 0
        %2270 = vmatpush1.bf16.msra.mxu0 0
        %2271 = vmatprep.subr.bf16.mxu0 0
        %2272 = vmatpush1.bf16.msra.mxu0 0
        %2273 = vmatprep.subr.bf16.mxu0 0
        %2274 = vmatpush1.bf16.msra.mxu0 0
        %2275 = vmatprep.subr.bf16.mxu0 0
        %2276 = vmatpush1.bf16.msra.mxu0 0
        %2277 = vmatprep.subr.bf16.mxu0 0
        %2278 = vmatpush1.bf16.msra.mxu0 0
        %2279 = vmatprep.subr.bf16.mxu0 0
        %2280 = vmatpush1.bf16.msra.mxu0 0
        %2281 = vmatprep.mubr.bf16.mxu0 0
        %2282 = vmatmul.mubr.bf16.gmra.mrb[0].mxu0 %v668
        %v2283 = vpop.f32.mrb[0].mxu0
        %v2284 = vadd.f32 %v273, %v2283
        %v2285 = vpop.f32.mrb[0].mxu0
        %v2286 = vadd.f32 %v273, %v2285
        %v2287 = vpop.f32.mrb[0].mxu0
        %v2288 = vadd.f32 %v278, %v2287
        %v2289 = vpop.f32.mrb[0].mxu0
        %v2290 = vadd.f32 %v278, %v2289
        %2291 = vdwg.mxu0
        %2292 = vmatprep.subr.bf16.mxu0 %v864
        %2293 = vmatpush1.bf16.msra.mxu0 %v861
        %2294 = vmatprep.subr.bf16.mxu0 0
        %2295 = vmatpush1.bf16.msra.mxu0 0
        %2296 = vmatprep.subr.bf16.mxu0 0
        %2297 = vmatpush1.bf16.msra.mxu0 0
        %2298 = vmatprep.subr.bf16.mxu0 0
        %2299 = vmatpush1.bf16.msra.mxu0 0
        %2300 = vmatprep.subr.bf16.mxu0 0
        %2301 = vmatpush1.bf16.msra.mxu0 0
        %2302 = vmatprep.subr.bf16.mxu0 0
        %2303 = vmatpush1.bf16.msra.mxu0 0
        %2304 = vmatprep.subr.bf16.mxu0 0
        %2305 = vmatpush1.bf16.msra.mxu0 0
        %2306 = vmatprep.subr.bf16.mxu0 0
        %2307 = vmatpush1.bf16.msra.mxu0 0
        %2308 = vmatprep.subr.bf16.mxu0 0
        %2309 = vmatpush1.bf16.msra.mxu0 0
        %2310 = vmatprep.subr.bf16.mxu0 0
        %2311 = vmatpush1.bf16.msra.mxu0 0
        %2312 = vmatprep.subr.bf16.mxu0 0
        %2313 = vmatpush1.bf16.msra.mxu0 0
        %2314 = vmatprep.subr.bf16.mxu0 0
        %2315 = vmatpush1.bf16.msra.mxu0 0
        %2316 = vmatprep.subr.bf16.mxu0 0
        %2317 = vmatpush1.bf16.msra.mxu0 0
        %2318 = vmatprep.subr.bf16.mxu0 0
        %2319 = vmatpush1.bf16.msra.mxu0 0
        %2320 = vmatprep.subr.bf16.mxu0 0
        %2321 = vmatpush1.bf16.msra.mxu0 0
        %2322 = vmatprep.subr.bf16.mxu0 0
        %2323 = vmatpush1.bf16.msra.mxu0 0
        %2324 = vmatprep.mubr.bf16.mxu0 0
        %2325 = vmatmul.mubr.bf16.gmra.mrb[0].mxu0 %v668
        %v2326 = vpop.f32.mrb[0].mxu0
        %v2327 = vadd.f32 %v273, %v2326
        %v2328 = vpop.f32.mrb[0].mxu0
        %v2329 = vadd.f32 %v273, %v2328
        %v2330 = vpop.f32.mrb[0].mxu0
        %v2331 = vadd.f32 %v278, %v2330
        %v2332 = vpop.f32.mrb[0].mxu0
        %v2333 = vadd.f32 %v278, %v2332
        %2334 = vdwg.mxu0
        %2335 = vmatprep.subr.bf16.mxu0 %v870
        %2336 = vmatpush1.bf16.msra.mxu0 %v867
        %2337 = vmatprep.subr.bf16.mxu0 0
        %2338 = vmatpush1.bf16.msra.mxu0 0
        %2339 = vmatprep.subr.bf16.mxu0 0
        %2340 = vmatpush1.bf16.msra.mxu0 0
        %2341 = vmatprep.subr.bf16.mxu0 0
        %2342 = vmatpush1.bf16.msra.mxu0 0
        %2343 = vmatprep.subr.bf16.mxu0 0
        %2344 = vmatpush1.bf16.msra.mxu0 0
        %2345 = vmatprep.subr.bf16.mxu0 0
        %2346 = vmatpush1.bf16.msra.mxu0 0
        %2347 = vmatprep.subr.bf16.mxu0 0
        %2348 = vmatpush1.bf16.msra.mxu0 0
        %2349 = vmatprep.subr.bf16.mxu0 0
        %2350 = vmatpush1.bf16.msra.mxu0 0
        %2351 = vmatprep.subr.bf16.mxu0 0
        %2352 = vmatpush1.bf16.msra.mxu0 0
        %2353 = vmatprep.subr.bf16.mxu0 0
        %2354 = vmatpush1.bf16.msra.mxu0 0
        %2355 = vmatprep.subr.bf16.mxu0 0
        %2356 = vmatpush1.bf16.msra.mxu0 0
        %2357 = vmatprep.subr.bf16.mxu0 0
        %2358 = vmatpush1.bf16.msra.mxu0 0
        %2359 = vmatprep.subr.bf16.mxu0 0
        %2360 = vmatpush1.bf16.msra.mxu0 0
        %2361 = vmatprep.subr.bf16.mxu0 0
        %2362 = vmatpush1.bf16.msra.mxu0 0
        %2363 = vmatprep.subr.bf16.mxu0 0
        %2364 = vmatpush1.bf16.msra.mxu0 0
        %2365 = vmatprep.subr.bf16.mxu0 0
        %2366 = vmatpush1.bf16.msra.mxu0 0
        %2367 = vmatprep.mubr.bf16.mxu0 0
        %2368 = vmatmul.mubr.bf16.gmra.mrb[0].mxu0 %v668
        %v2369 = vpop.f32.mrb[0].mxu0
        %v2370 = vadd.f32 %v273, %v2369
        %v2371 = vpop.f32.mrb[0].mxu0
        %v2372 = vadd.f32 %v273, %v2371
        %v2373 = vpop.f32.mrb[0].mxu0
        %v2374 = vadd.f32 %v278, %v2373
        %v2375 = vpop.f32.mrb[0].mxu0
        %v2376 = vadd.f32 %v278, %v2375
        %2377 = vdwg.mxu0
        %2378 = vmatprep.subr.bf16.mxu0 %v876
        %2379 = vmatpush1.bf16.msra.mxu0 %v873
        %2380 = vmatprep.subr.bf16.mxu0 0
        %2381 = vmatpush1.bf16.msra.mxu0 0
        %2382 = vmatprep.subr.bf16.mxu0 0
        %2383 = vmatpush1.bf16.msra.mxu0 0
        %2384 = vmatprep.subr.bf16.mxu0 0
        %2385 = vmatpush1.bf16.msra.mxu0 0
        %2386 = vmatprep.subr.bf16.mxu0 0
        %2387 = vmatpush1.bf16.msra.mxu0 0
        %2388 = vmatprep.subr.bf16.mxu0 0
        %2389 = vmatpush1.bf16.msra.mxu0 0
        %2390 = vmatprep.subr.bf16.mxu0 0
        %2391 = vmatpush1.bf16.msra.mxu0 0
        %2392 = vmatprep.subr.bf16.mxu0 0
        %2393 = vmatpush1.bf16.msra.mxu0 0
        %2394 = vmatprep.subr.bf16.mxu0 0
        %2395 = vmatpush1.bf16.msra.mxu0 0
        %2396 = vmatprep.subr.bf16.mxu0 0
        %2397 = vmatpush1.bf16.msra.mxu0 0
        %2398 = vmatprep.subr.bf16.mxu0 0
        %2399 = vmatpush1.bf16.msra.mxu0 0
        %2400 = vmatprep.subr.bf16.mxu0 0
        %2401 = vmatpush1.bf16.msra.mxu0 0
        %2402 = vmatprep.subr.bf16.mxu0 0
        %2403 = vmatpush1.bf16.msra.mxu0 0
        %2404 = vmatprep.subr.bf16.mxu0 0
        %2405 = vmatpush1.bf16.msra.mxu0 0
        %2406 = vmatprep.subr.bf16.mxu0 0
        %2407 = vmatpush1.bf16.msra.mxu0 0
        %2408 = vmatprep.subr.bf16.mxu0 0
        %2409 = vmatpush1.bf16.msra.mxu0 0
        %2410 = vmatprep.mubr.bf16.mxu0 0
        %2411 = vmatmul.mubr.bf16.gmra.mrb[0].mxu0 %v668
        %v2412 = vpop.f32.mrb[0].mxu0
        %v2413 = vadd.f32 %v273, %v2412
        %v2414 = vpop.f32.mrb[0].mxu0
        %v2415 = vadd.f32 %v273, %v2414
        %v2416 = vpop.f32.mrb[0].mxu0
        %v2417 = vadd.f32 %v278, %v2416
        %v2418 = vpop.f32.mrb[0].mxu0
        %v2419 = vadd.f32 %v278, %v2418
        %2420 = vdwg.mxu0
        %2421 = vmatprep.subr.bf16.mxu0 %v882
        %2422 = vmatpush1.bf16.msra.mxu0 %v879
        %2423 = vmatprep.subr.bf16.mxu0 0
        %2424 = vmatpush1.bf16.msra.mxu0 0
        %2425 = vmatprep.subr.bf16.mxu0 0
        %2426 = vmatpush1.bf16.msra.mxu0 0
        %2427 = vmatprep.subr.bf16.mxu0 0
        %2428 = vmatpush1.bf16.msra.mxu0 0
        %2429 = vmatprep.subr.bf16.mxu0 0
        %2430 = vmatpush1.bf16.msra.mxu0 0
        %2431 = vmatprep.subr.bf16.mxu0 0
        %2432 = vmatpush1.bf16.msra.mxu0 0
        %2433 = vmatprep.subr.bf16.mxu0 0
        %2434 = vmatpush1.bf16.msra.mxu0 0
        %2435 = vmatprep.subr.bf16.mxu0 0
        %2436 = vmatpush1.bf16.msra.mxu0 0
        %2437 = vmatprep.subr.bf16.mxu0 0
        %2438 = vmatpush1.bf16.msra.mxu0 0
        %2439 = vmatprep.subr.bf16.mxu0 0
        %2440 = vmatpush1.bf16.msra.mxu0 0
        %2441 = vmatprep.subr.bf16.mxu0 0
        %2442 = vmatpush1.bf16.msra.mxu0 0
        %2443 = vmatprep.subr.bf16.mxu0 0
        %2444 = vmatpush1.bf16.msra.mxu0 0
        %2445 = vmatprep.subr.bf16.mxu0 0
        %2446 = vmatpush1.bf16.msra.mxu0 0
        %2447 = vmatprep.subr.bf16.mxu0 0
        %2448 = vmatpush1.bf16.msra.mxu0 0
        %2449 = vmatprep.subr.bf16.mxu0 0
        %2450 = vmatpush1.bf16.msra.mxu0 0
        %2451 = vmatprep.subr.bf16.mxu0 0
        %2452 = vmatpush1.bf16.msra.mxu0 0
        %2453 = vmatprep.mubr.bf16.mxu0 0
        %2454 = vmatmul.mubr.bf16.gmra.mrb[0].mxu0 %v668
        %v2455 = vpop.f32.mrb[0].mxu0
        %v2456 = vadd.f32 %v273, %v2455
        %v2457 = vpop.f32.mrb[0].mxu0
        %v2458 = vadd.f32 %v273, %v2457
        %v2459 = vpop.f32.mrb[0].mxu0
        %v2460 = vadd.f32 %v278, %v2459
        %v2461 = vpop.f32.mrb[0].mxu0
        %v2462 = vadd.f32 %v278, %v2461
        %2463 = vdwg.mxu0
        %2464 = vmatprep.subr.bf16.mxu0 %v888
        %2465 = vmatpush1.bf16.msra.mxu0 %v885
        %2466 = vmatprep.subr.bf16.mxu0 0
        %2467 = vmatpush1.bf16.msra.mxu0 0
        %2468 = vmatprep.subr.bf16.mxu0 0
        %2469 = vmatpush1.bf16.msra.mxu0 0
        %2470 = vmatprep.subr.bf16.mxu0 0
        %2471 = vmatpush1.bf16.msra.mxu0 0
        %2472 = vmatprep.subr.bf16.mxu0 0
        %2473 = vmatpush1.bf16.msra.mxu0 0
        %2474 = vmatprep.subr.bf16.mxu0 0
        %2475 = vmatpush1.bf16.msra.mxu0 0
        %2476 = vmatprep.subr.bf16.mxu0 0
        %2477 = vmatpush1.bf16.msra.mxu0 0
        %2478 = vmatprep.subr.bf16.mxu0 0
        %2479 = vmatpush1.bf16.msra.mxu0 0
        %2480 = vmatprep.subr.bf16.mxu0 0
        %2481 = vmatpush1.bf16.msra.mxu0 0
        %2482 = vmatprep.subr.bf16.mxu0 0
        %2483 = vmatpush1.bf16.msra.mxu0 0
        %2484 = vmatprep.subr.bf16.mxu0 0
        %2485 = vmatpush1.bf16.msra.mxu0 0
        %2486 = vmatprep.subr.bf16.mxu0 0
        %2487 = vmatpush1.bf16.msra.mxu0 0
        %2488 = vmatprep.subr.bf16.mxu0 0
        %2489 = vmatpush1.bf16.msra.mxu0 0
        %2490 = vmatprep.subr.bf16.mxu0 0
        %2491 = vmatpush1.bf16.msra.mxu0 0
        %2492 = vmatprep.subr.bf16.mxu0 0
        %2493 = vmatpush1.bf16.msra.mxu0 0
        %2494 = vmatprep.subr.bf16.mxu0 0
        %2495 = vmatpush1.bf16.msra.mxu0 0
        %2496 = vmatprep.mubr.bf16.mxu0 0
        %2497 = vmatmul.mubr.bf16.gmra.mrb[0].mxu0 %v668
        %v2498 = vpop.f32.mrb[0].mxu0
        %v2499 = vadd.f32 %v273, %v2498
        %v2500 = vpop.f32.mrb[0].mxu0
        %v2501 = vadd.f32 %v273, %v2500
        %v2502 = vpop.f32.mrb[0].mxu0
        %v2503 = vadd.f32 %v278, %v2502
        %v2504 = vpop.f32.mrb[0].mxu0
        %v2505 = vadd.f32 %v278, %v2504
        %2506 = vdwg.mxu0
        %2507 = vmatprep.subr.bf16.mxu0 %v894
        %2508 = vmatpush1.bf16.msra.mxu0 %v891
        %2509 = vmatprep.subr.bf16.mxu0 0
        %2510 = vmatpush1.bf16.msra.mxu0 0
        %2511 = vmatprep.subr.bf16.mxu0 0
        %2512 = vmatpush1.bf16.msra.mxu0 0
        %2513 = vmatprep.subr.bf16.mxu0 0
        %2514 = vmatpush1.bf16.msra.mxu0 0
        %2515 = vmatprep.subr.bf16.mxu0 0
        %2516 = vmatpush1.bf16.msra.mxu0 0
        %2517 = vmatprep.subr.bf16.mxu0 0
        %2518 = vmatpush1.bf16.msra.mxu0 0
        %2519 = vmatprep.subr.bf16.mxu0 0
        %2520 = vmatpush1.bf16.msra.mxu0 0
        %2521 = vmatprep.subr.bf16.mxu0 0
        %2522 = vmatpush1.bf16.msra.mxu0 0
        %2523 = vmatprep.subr.bf16.mxu0 0
        %2524 = vmatpush1.bf16.msra.mxu0 0
        %2525 = vmatprep.subr.bf16.mxu0 0
        %2526 = vmatpush1.bf16.msra.mxu0 0
        %2527 = vmatprep.subr.bf16.mxu0 0
        %2528 = vmatpush1.bf16.msra.mxu0 0
        %2529 = vmatprep.subr.bf16.mxu0 0
        %2530 = vmatpush1.bf16.msra.mxu0 0
        %2531 = vmatprep.subr.bf16.mxu0 0
        %2532 = vmatpush1.bf16.msra.mxu0 0
        %2533 = vmatprep.subr.bf16.mxu0 0
        %2534 = vmatpush1.bf16.msra.mxu0 0
        %2535 = vmatprep.subr.bf16.mxu0 0
        %2536 = vmatpush1.bf16.msra.mxu0 0
        %2537 = vmatprep.subr.bf16.mxu0 0
        %2538 = vmatpush1.bf16.msra.mxu0 0
        %2539 = vmatprep.mubr.bf16.mxu0 0
        %2540 = vmatmul.mubr.bf16.gmra.mrb[0].mxu0 %v668
        %v2541 = vpop.f32.mrb[0].mxu0
        %v2542 = vadd.f32 %v273, %v2541
        %v2543 = vpop.f32.mrb[0].mxu0
        %v2544 = vadd.f32 %v273, %v2543
        %v2545 = vpop.f32.mrb[0].mxu0
        %v2546 = vadd.f32 %v278, %v2545
        %v2547 = vpop.f32.mrb[0].mxu0
        %v2548 = vadd.f32 %v278, %v2547
        %2549 = vdwg.mxu0
        %2550 = vmatprep.subr.bf16.mxu0 %v900
        %2551 = vmatpush1.bf16.msra.mxu0 %v897
        %2552 = vmatprep.subr.bf16.mxu0 0
        %2553 = vmatpush1.bf16.msra.mxu0 0
        %2554 = vmatprep.subr.bf16.mxu0 0
        %2555 = vmatpush1.bf16.msra.mxu0 0
        %2556 = vmatprep.subr.bf16.mxu0 0
        %2557 = vmatpush1.bf16.msra.mxu0 0
        %2558 = vmatprep.subr.bf16.mxu0 0
        %2559 = vmatpush1.bf16.msra.mxu0 0
        %2560 = vmatprep.subr.bf16.mxu0 0
        %2561 = vmatpush1.bf16.msra.mxu0 0
        %2562 = vmatprep.subr.bf16.mxu0 0
        %2563 = vmatpush1.bf16.msra.mxu0 0
        %2564 = vmatprep.subr.bf16.mxu0 0
        %2565 = vmatpush1.bf16.msra.mxu0 0
        %2566 = vmatprep.subr.bf16.mxu0 0
        %2567 = vmatpush1.bf16.msra.mxu0 0
        %2568 = vmatprep.subr.bf16.mxu0 0
        %2569 = vmatpush1.bf16.msra.mxu0 0
        %2570 = vmatprep.subr.bf16.mxu0 0
        %2571 = vmatpush1.bf16.msra.mxu0 0
        %2572 = vmatprep.subr.bf16.mxu0 0
        %2573 = vmatpush1.bf16.msra.mxu0 0
        %2574 = vmatprep.subr.bf16.mxu0 0
        %2575 = vmatpush1.bf16.msra.mxu0 0
        %2576 = vmatprep.subr.bf16.mxu0 0
        %2577 = vmatpush1.bf16.msra.mxu0 0
        %2578 = vmatprep.subr.bf16.mxu0 0
        %2579 = vmatpush1.bf16.msra.mxu0 0
        %2580 = vmatprep.subr.bf16.mxu0 0
        %2581 = vmatpush1.bf16.msra.mxu0 0
        %2582 = vmatprep.mubr.bf16.mxu0 0
        %2583 = vmatmul.mubr.bf16.gmra.mrb[0].mxu0 %v668
        %v2584 = vpop.f32.mrb[0].mxu0
        %v2585 = vadd.f32 %v273, %v2584
        %v2586 = vpop.f32.mrb[0].mxu0
        %v2587 = vadd.f32 %v273, %v2586
        %v2588 = vpop.f32.mrb[0].mxu0
        %v2589 = vadd.f32 %v278, %v2588
        %v2590 = vpop.f32.mrb[0].mxu0
        %v2591 = vadd.f32 %v278, %v2590
        %2592 = vdwg.mxu0
        %2593 = vmatprep.subr.bf16.mxu0 %v906
        %2594 = vmatpush1.bf16.msra.mxu0 %v903
        %2595 = vmatprep.subr.bf16.mxu0 0
        %2596 = vmatpush1.bf16.msra.mxu0 0
        %2597 = vmatprep.subr.bf16.mxu0 0
        %2598 = vmatpush1.bf16.msra.mxu0 0
        %2599 = vmatprep.subr.bf16.mxu0 0
        %2600 = vmatpush1.bf16.msra.mxu0 0
        %2601 = vmatprep.subr.bf16.mxu0 0
        %2602 = vmatpush1.bf16.msra.mxu0 0
        %2603 = vmatprep.subr.bf16.mxu0 0
        %2604 = vmatpush1.bf16.msra.mxu0 0
        %2605 = vmatprep.subr.bf16.mxu0 0
        %2606 = vmatpush1.bf16.msra.mxu0 0
        %2607 = vmatprep.subr.bf16.mxu0 0
        %2608 = vmatpush1.bf16.msra.mxu0 0
        %2609 = vmatprep.subr.bf16.mxu0 0
        %2610 = vmatpush1.bf16.msra.mxu0 0
        %2611 = vmatprep.subr.bf16.mxu0 0
        %2612 = vmatpush1.bf16.msra.mxu0 0
        %2613 = vmatprep.subr.bf16.mxu0 0
        %2614 = vmatpush1.bf16.msra.mxu0 0
        %2615 = vmatprep.subr.bf16.mxu0 0
        %2616 = vmatpush1.bf16.msra.mxu0 0
        %2617 = vmatprep.subr.bf16.mxu0 0
        %2618 = vmatpush1.bf16.msra.mxu0 0
        %2619 = vmatprep.subr.bf16.mxu0 0
        %2620 = vmatpush1.bf16.msra.mxu0 0
        %2621 = vmatprep.subr.bf16.mxu0 0
        %2622 = vmatpush1.bf16.msra.mxu0 0
        %2623 = vmatprep.subr.bf16.mxu0 0
        %2624 = vmatpush1.bf16.msra.mxu0 0
        %2625 = vmatprep.mubr.bf16.mxu0 0
        %2626 = vmatmul.mubr.bf16.gmra.mrb[0].mxu0 %v668
        %v2627 = vpop.f32.mrb[0].mxu0
        %v2628 = vadd.f32 %v273, %v2627
        %v2629 = vpop.f32.mrb[0].mxu0
        %v2630 = vadd.f32 %v273, %v2629
        %v2631 = vpop.f32.mrb[0].mxu0
        %v2632 = vadd.f32 %v278, %v2631
        %v2633 = vpop.f32.mrb[0].mxu0
        %v2634 = vadd.f32 %v278, %v2633
        %2635 = vdwg.mxu0
        %2636 = vmatprep.subr.bf16.mxu0 %v912
        %2637 = vmatpush1.bf16.msra.mxu0 %v909
        %2638 = vmatprep.subr.bf16.mxu0 0
        %2639 = vmatpush1.bf16.msra.mxu0 0
        %2640 = vmatprep.subr.bf16.mxu0 0
        %2641 = vmatpush1.bf16.msra.mxu0 0
        %2642 = vmatprep.subr.bf16.mxu0 0
        %2643 = vmatpush1.bf16.msra.mxu0 0
        %2644 = vmatprep.subr.bf16.mxu0 0
        %2645 = vmatpush1.bf16.msra.mxu0 0
        %2646 = vmatprep.subr.bf16.mxu0 0
        %2647 = vmatpush1.bf16.msra.mxu0 0
        %2648 = vmatprep.subr.bf16.mxu0 0
        %2649 = vmatpush1.bf16.msra.mxu0 0
        %2650 = vmatprep.subr.bf16.mxu0 0
        %2651 = vmatpush1.bf16.msra.mxu0 0
        %2652 = vmatprep.subr.bf16.mxu0 0
        %2653 = vmatpush1.bf16.msra.mxu0 0
        %2654 = vmatprep.subr.bf16.mxu0 0
        %2655 = vmatpush1.bf16.msra.mxu0 0
        %2656 = vmatprep.subr.bf16.mxu0 0
        %2657 = vmatpush1.bf16.msra.mxu0 0
        %2658 = vmatprep.subr.bf16.mxu0 0
        %2659 = vmatpush1.bf16.msra.mxu0 0
        %2660 = vmatprep.subr.bf16.mxu0 0
        %2661 = vmatpush1.bf16.msra.mxu0 0
        %2662 = vmatprep.subr.bf16.mxu0 0
        %2663 = vmatpush1.bf16.msra.mxu0 0
        %2664 = vmatprep.subr.bf16.mxu0 0
        %2665 = vmatpush1.bf16.msra.mxu0 0
        %2666 = vmatprep.subr.bf16.mxu0 0
        %2667 = vmatpush1.bf16.msra.mxu0 0
        %2668 = vmatprep.mubr.bf16.mxu0 0
        %2669 = vmatmul.mubr.bf16.gmra.mrb[0].mxu0 %v668
        %v2670 = vpop.f32.mrb[0].mxu0
        %v2671 = vadd.f32 %v273, %v2670
        %v2672 = vpop.f32.mrb[0].mxu0
        %v2673 = vadd.f32 %v273, %v2672
        %v2674 = vpop.f32.mrb[0].mxu0
        %v2675 = vadd.f32 %v278, %v2674
        %v2676 = vpop.f32.mrb[0].mxu0
        %v2677 = vadd.f32 %v278, %v2676
        %2678 = vdwg.mxu0
        %2679 = vmatprep.subr.bf16.mxu0 %v918
        %2680 = vmatpush1.bf16.msra.mxu0 %v915
        %2681 = vmatprep.subr.bf16.mxu0 0
        %2682 = vmatpush1.bf16.msra.mxu0 0
        %2683 = vmatprep.subr.bf16.mxu0 0
        %2684 = vmatpush1.bf16.msra.mxu0 0
        %2685 = vmatprep.subr.bf16.mxu0 0
        %2686 = vmatpush1.bf16.msra.mxu0 0
        %2687 = vmatprep.subr.bf16.mxu0 0
        %2688 = vmatpush1.bf16.msra.mxu0 0
        %2689 = vmatprep.subr.bf16.mxu0 0
        %2690 = vmatpush1.bf16.msra.mxu0 0
        %2691 = vmatprep.subr.bf16.mxu0 0
        %2692 = vmatpush1.bf16.msra.mxu0 0
        %2693 = vmatprep.subr.bf16.mxu0 0
        %2694 = vmatpush1.bf16.msra.mxu0 0
        %2695 = vmatprep.subr.bf16.mxu0 0
        %2696 = vmatpush1.bf16.msra.mxu0 0
        %2697 = vmatprep.subr.bf16.mxu0 0
        %2698 = vmatpush1.bf16.msra.mxu0 0
        %2699 = vmatprep.subr.bf16.mxu0 0
        %2700 = vmatpush1.bf16.msra.mxu0 0
        %2701 = vmatprep.subr.bf16.mxu0 0
        %2702 = vmatpush1.bf16.msra.mxu0 0
        %2703 = vmatprep.subr.bf16.mxu0 0
        %2704 = vmatpush1.bf16.msra.mxu0 0
        %2705 = vmatprep.subr.bf16.mxu0 0
        %2706 = vmatpush1.bf16.msra.mxu0 0
        %2707 = vmatprep.subr.bf16.mxu0 0
        %2708 = vmatpush1.bf16.msra.mxu0 0
        %2709 = vmatprep.subr.bf16.mxu0 0
        %2710 = vmatpush1.bf16.msra.mxu0 0
        %2711 = vmatprep.mubr.bf16.mxu0 0
        %2712 = vmatmul.mubr.bf16.gmra.mrb[0].mxu0 %v668
        %v2713 = vpop.f32.mrb[0].mxu0
        %v2714 = vadd.f32 %v273, %v2713
        %v2715 = vpop.f32.mrb[0].mxu0
        %v2716 = vadd.f32 %v273, %v2715
        %v2717 = vpop.f32.mrb[0].mxu0
        %v2718 = vadd.f32 %v278, %v2717
        %v2719 = vpop.f32.mrb[0].mxu0
        %v2720 = vadd.f32 %v278, %v2719
        %2721 = vdwg.mxu0
        %2722 = vmatprep.subr.bf16.mxu0 %v924
        %2723 = vmatpush1.bf16.msra.mxu0 %v921
        %2724 = vmatprep.subr.bf16.mxu0 0
        %2725 = vmatpush1.bf16.msra.mxu0 0
        %2726 = vmatprep.subr.bf16.mxu0 0
        %2727 = vmatpush1.bf16.msra.mxu0 0
        %2728 = vmatprep.subr.bf16.mxu0 0
        %2729 = vmatpush1.bf16.msra.mxu0 0
        %2730 = vmatprep.subr.bf16.mxu0 0
        %2731 = vmatpush1.bf16.msra.mxu0 0
        %2732 = vmatprep.subr.bf16.mxu0 0
        %2733 = vmatpush1.bf16.msra.mxu0 0
        %2734 = vmatprep.subr.bf16.mxu0 0
        %2735 = vmatpush1.bf16.msra.mxu0 0
        %2736 = vmatprep.subr.bf16.mxu0 0
        %2737 = vmatpush1.bf16.msra.mxu0 0
        %2738 = vmatprep.subr.bf16.mxu0 0
        %2739 = vmatpush1.bf16.msra.mxu0 0
        %2740 = vmatprep.subr.bf16.mxu0 0
        %2741 = vmatpush1.bf16.msra.mxu0 0
        %2742 = vmatprep.subr.bf16.mxu0 0
        %2743 = vmatpush1.bf16.msra.mxu0 0
        %2744 = vmatprep.subr.bf16.mxu0 0
        %2745 = vmatpush1.bf16.msra.mxu0 0
        %2746 = vmatprep.subr.bf16.mxu0 0
        %2747 = vmatpush1.bf16.msra.mxu0 0
        %2748 = vmatprep.subr.bf16.mxu0 0
        %2749 = vmatpush1.bf16.msra.mxu0 0
        %2750 = vmatprep.subr.bf16.mxu0 0
        %2751 = vmatpush1.bf16.msra.mxu0 0
        %2752 = vmatprep.subr.bf16.mxu0 0
        %2753 = vmatpush1.bf16.msra.mxu0 0
        %2754 = vmatprep.mubr.bf16.mxu0 0
        %2755 = vmatmul.mubr.bf16.gmra.mrb[0].mxu0 %v668
        %v2756 = vpop.f32.mrb[0].mxu0
        %v2757 = vadd.f32 %v273, %v2756
        %v2758 = vpop.f32.mrb[0].mxu0
        %v2759 = vadd.f32 %v273, %v2758
        %v2760 = vpop.f32.mrb[0].mxu0
        %v2761 = vadd.f32 %v278, %v2760
        %v2762 = vpop.f32.mrb[0].mxu0
        %v2763 = vadd.f32 %v278, %v2762
        %2764 = vdwg.mxu0
        %2765 = vmatprep.subr.bf16.mxu0 %v930
        %2766 = vmatpush1.bf16.msra.mxu0 %v927
        %2767 = vmatprep.subr.bf16.mxu0 0
        %2768 = vmatpush1.bf16.msra.mxu0 0
        %2769 = vmatprep.subr.bf16.mxu0 0
        %2770 = vmatpush1.bf16.msra.mxu0 0
        %2771 = vmatprep.subr.bf16.mxu0 0
        %2772 = vmatpush1.bf16.msra.mxu0 0
        %2773 = vmatprep.subr.bf16.mxu0 0
        %2774 = vmatpush1.bf16.msra.mxu0 0
        %2775 = vmatprep.subr.bf16.mxu0 0
        %2776 = vmatpush1.bf16.msra.mxu0 0
        %2777 = vmatprep.subr.bf16.mxu0 0
        %2778 = vmatpush1.bf16.msra.mxu0 0
        %2779 = vmatprep.subr.bf16.mxu0 0
        %2780 = vmatpush1.bf16.msra.mxu0 0
        %2781 = vmatprep.subr.bf16.mxu0 0
        %2782 = vmatpush1.bf16.msra.mxu0 0
        %2783 = vmatprep.subr.bf16.mxu0 0
        %2784 = vmatpush1.bf16.msra.mxu0 0
        %2785 = vmatprep.subr.bf16.mxu0 0
        %2786 = vmatpush1.bf16.msra.mxu0 0
        %2787 = vmatprep.subr.bf16.mxu0 0
        %2788 = vmatpush1.bf16.msra.mxu0 0
        %2789 = vmatprep.subr.bf16.mxu0 0
        %2790 = vmatpush1.bf16.msra.mxu0 0
        %2791 = vmatprep.subr.bf16.mxu0 0
        %2792 = vmatpush1.bf16.msra.mxu0 0
        %2793 = vmatprep.subr.bf16.mxu0 0
        %2794 = vmatpush1.bf16.msra.mxu0 0
        %2795 = vmatprep.subr.bf16.mxu0 0
        %2796 = vmatpush1.bf16.msra.mxu0 0
        %2797 = vmatprep.mubr.bf16.mxu0 0
        %2798 = vmatmul.mubr.bf16.gmra.mrb[0].mxu0 %v668
        %v2799 = vpop.f32.mrb[0].mxu0
        %v2800 = vadd.f32 %v273, %v2799
        %v2801 = vpop.f32.mrb[0].mxu0
        %v2802 = vadd.f32 %v273, %v2801
        %v2803 = vpop.f32.mrb[0].mxu0
        %v2804 = vadd.f32 %v278, %v2803
        %v2805 = vpop.f32.mrb[0].mxu0
        %v2806 = vadd.f32 %v278, %v2805
        %2807 = vdwg.mxu0
        %2808 = vmatprep.subr.bf16.mxu0 %v936
        %2809 = vmatpush1.bf16.msra.mxu0 %v933
        %2810 = vmatprep.subr.bf16.mxu0 0
        %2811 = vmatpush1.bf16.msra.mxu0 0
        %2812 = vmatprep.subr.bf16.mxu0 0
        %2813 = vmatpush1.bf16.msra.mxu0 0
        %2814 = vmatprep.subr.bf16.mxu0 0
        %2815 = vmatpush1.bf16.msra.mxu0 0
        %2816 = vmatprep.subr.bf16.mxu0 0
        %2817 = vmatpush1.bf16.msra.mxu0 0
        %2818 = vmatprep.subr.bf16.mxu0 0
        %2819 = vmatpush1.bf16.msra.mxu0 0
        %2820 = vmatprep.subr.bf16.mxu0 0
        %2821 = vmatpush1.bf16.msra.mxu0 0
        %2822 = vmatprep.subr.bf16.mxu0 0
        %2823 = vmatpush1.bf16.msra.mxu0 0
        %2824 = vmatprep.subr.bf16.mxu0 0
        %2825 = vmatpush1.bf16.msra.mxu0 0
        %2826 = vmatprep.subr.bf16.mxu0 0
        %2827 = vmatpush1.bf16.msra.mxu0 0
        %2828 = vmatprep.subr.bf16.mxu0 0
        %2829 = vmatpush1.bf16.msra.mxu0 0
        %2830 = vmatprep.subr.bf16.mxu0 0
        %2831 = vmatpush1.bf16.msra.mxu0 0
        %2832 = vmatprep.subr.bf16.mxu0 0
        %2833 = vmatpush1.bf16.msra.mxu0 0
        %2834 = vmatprep.subr.bf16.mxu0 0
        %2835 = vmatpush1.bf16.msra.mxu0 0
        %2836 = vmatprep.subr.bf16.mxu0 0
        %2837 = vmatpush1.bf16.msra.mxu0 0
        %2838 = vmatprep.subr.bf16.mxu0 0
        %2839 = vmatpush1.bf16.msra.mxu0 0
        %2840 = vmatprep.mubr.bf16.mxu0 0
        %2841 = vmatmul.mubr.bf16.gmra.mrb[0].mxu0 %v668
        %v2842 = vpop.f32.mrb[0].mxu0
        %v2843 = vadd.f32 %v273, %v2842
        %v2844 = vpop.f32.mrb[0].mxu0
        %v2845 = vadd.f32 %v273, %v2844
        %v2846 = vpop.f32.mrb[0].mxu0
        %v2847 = vadd.f32 %v278, %v2846
        %v2848 = vpop.f32.mrb[0].mxu0
        %v2849 = vadd.f32 %v278, %v2848
        %2850 = vdwg.mxu0
        %2851 = vmatprep.subr.bf16.mxu0 %v942
        %2852 = vmatpush1.bf16.msra.mxu0 %v939
        %2853 = vmatprep.subr.bf16.mxu0 0
        %2854 = vmatpush1.bf16.msra.mxu0 0
        %2855 = vmatprep.subr.bf16.mxu0 0
        %2856 = vmatpush1.bf16.msra.mxu0 0
        %2857 = vmatprep.subr.bf16.mxu0 0
        %2858 = vmatpush1.bf16.msra.mxu0 0
        %2859 = vmatprep.subr.bf16.mxu0 0
        %2860 = vmatpush1.bf16.msra.mxu0 0
        %2861 = vmatprep.subr.bf16.mxu0 0
        %2862 = vmatpush1.bf16.msra.mxu0 0
        %2863 = vmatprep.subr.bf16.mxu0 0
        %2864 = vmatpush1.bf16.msra.mxu0 0
        %2865 = vmatprep.subr.bf16.mxu0 0
        %2866 = vmatpush1.bf16.msra.mxu0 0
        %2867 = vmatprep.subr.bf16.mxu0 0
        %2868 = vmatpush1.bf16.msra.mxu0 0
        %2869 = vmatprep.subr.bf16.mxu0 0
        %2870 = vmatpush1.bf16.msra.mxu0 0
        %2871 = vmatprep.subr.bf16.mxu0 0
        %2872 = vmatpush1.bf16.msra.mxu0 0
        %2873 = vmatprep.subr.bf16.mxu0 0
        %2874 = vmatpush1.bf16.msra.mxu0 0
        %2875 = vmatprep.subr.bf16.mxu0 0
        %2876 = vmatpush1.bf16.msra.mxu0 0
        %2877 = vmatprep.subr.bf16.mxu0 0
        %2878 = vmatpush1.bf16.msra.mxu0 0
        %2879 = vmatprep.subr.bf16.mxu0 0
        %2880 = vmatpush1.bf16.msra.mxu0 0
        %2881 = vmatprep.subr.bf16.mxu0 0
        %2882 = vmatpush1.bf16.msra.mxu0 0
        %2883 = vmatprep.mubr.bf16.mxu0 0
        %2884 = vmatmul.mubr.bf16.gmra.mrb[0].mxu0 %v668
        %v2885 = vpop.f32.mrb[0].mxu0
        %v2886 = vadd.f32 %v273, %v2885
        %v2887 = vpop.f32.mrb[0].mxu0
        %v2888 = vadd.f32 %v273, %v2887
        %v2889 = vpop.f32.mrb[0].mxu0
        %v2890 = vadd.f32 %v278, %v2889
        %v2891 = vpop.f32.mrb[0].mxu0
        %v2892 = vadd.f32 %v278, %v2891
        %2893 = vdwg.mxu0
        %2894 = vmatprep.subr.bf16.mxu0 %v948
        %2895 = vmatpush1.bf16.msra.mxu0 %v945
        %2896 = vmatprep.subr.bf16.mxu0 0
        %2897 = vmatpush1.bf16.msra.mxu0 0
        %2898 = vmatprep.subr.bf16.mxu0 0
        %2899 = vmatpush1.bf16.msra.mxu0 0
        %2900 = vmatprep.subr.bf16.mxu0 0
        %2901 = vmatpush1.bf16.msra.mxu0 0
        %2902 = vmatprep.subr.bf16.mxu0 0
        %2903 = vmatpush1.bf16.msra.mxu0 0
        %2904 = vmatprep.subr.bf16.mxu0 0
        %2905 = vmatpush1.bf16.msra.mxu0 0
        %2906 = vmatprep.subr.bf16.mxu0 0
        %2907 = vmatpush1.bf16.msra.mxu0 0
        %2908 = vmatprep.subr.bf16.mxu0 0
        %2909 = vmatpush1.bf16.msra.mxu0 0
        %2910 = vmatprep.subr.bf16.mxu0 0
        %2911 = vmatpush1.bf16.msra.mxu0 0
        %2912 = vmatprep.subr.bf16.mxu0 0
        %2913 = vmatpush1.bf16.msra.mxu0 0
        %2914 = vmatprep.subr.bf16.mxu0 0
        %2915 = vmatpush1.bf16.msra.mxu0 0
        %2916 = vmatprep.subr.bf16.mxu0 0
        %2917 = vmatpush1.bf16.msra.mxu0 0
        %2918 = vmatprep.subr.bf16.mxu0 0
        %2919 = vmatpush1.bf16.msra.mxu0 0
        %2920 = vmatprep.subr.bf16.mxu0 0
        %2921 = vmatpush1.bf16.msra.mxu0 0
        %2922 = vmatprep.subr.bf16.mxu0 0
        %2923 = vmatpush1.bf16.msra.mxu0 0
        %2924 = vmatprep.subr.bf16.mxu0 0
        %2925 = vmatpush1.bf16.msra.mxu0 0
        %2926 = vmatprep.mubr.bf16.mxu0 0
        %2927 = vmatmul.mubr.bf16.gmra.mrb[0].mxu0 %v668
        %v2928 = vpop.f32.mrb[0].mxu0
        %v2929 = vadd.f32 %v273, %v2928
        %v2930 = vpop.f32.mrb[0].mxu0
        %v2931 = vadd.f32 %v273, %v2930
        %v2932 = vpop.f32.mrb[0].mxu0
        %v2933 = vadd.f32 %v278, %v2932
        %v2934 = vpop.f32.mrb[0].mxu0
        %v2935 = vadd.f32 %v278, %v2934
        %2936 = vdwg.mxu0
        %2937 = vmatprep.subr.bf16.mxu0 %v954
        %2938 = vmatpush1.bf16.msra.mxu0 %v951
        %2939 = vmatprep.subr.bf16.mxu0 0
        %2940 = vmatpush1.bf16.msra.mxu0 0
        %2941 = vmatprep.subr.bf16.mxu0 0
        %2942 = vmatpush1.bf16.msra.mxu0 0
        %2943 = vmatprep.subr.bf16.mxu0 0
        %2944 = vmatpush1.bf16.msra.mxu0 0
        %2945 = vmatprep.subr.bf16.mxu0 0
        %2946 = vmatpush1.bf16.msra.mxu0 0
        %2947 = vmatprep.subr.bf16.mxu0 0
        %2948 = vmatpush1.bf16.msra.mxu0 0
        %2949 = vmatprep.subr.bf16.mxu0 0
        %2950 = vmatpush1.bf16.msra.mxu0 0
        %2951 = vmatprep.subr.bf16.mxu0 0
        %2952 = vmatpush1.bf16.msra.mxu0 0
        %2953 = vmatprep.subr.bf16.mxu0 0
        %2954 = vmatpush1.bf16.msra.mxu0 0
        %2955 = vmatprep.subr.bf16.mxu0 0
        %2956 = vmatpush1.bf16.msra.mxu0 0
        %2957 = vmatprep.subr.bf16.mxu0 0
        %2958 = vmatpush1.bf16.msra.mxu0 0
        %2959 = vmatprep.subr.bf16.mxu0 0
        %2960 = vmatpush1.bf16.msra.mxu0 0
        %2961 = vmatprep.subr.bf16.mxu0 0
        %2962 = vmatpush1.bf16.msra.mxu0 0
        %2963 = vmatprep.subr.bf16.mxu0 0
        %2964 = vmatpush1.bf16.msra.mxu0 0
        %2965 = vmatprep.subr.bf16.mxu0 0
        %2966 = vmatpush1.bf16.msra.mxu0 0
        %2967 = vmatprep.subr.bf16.mxu0 0
        %2968 = vmatpush1.bf16.msra.mxu0 0
        %2969 = vmatprep.mubr.bf16.mxu0 0
        %2970 = vmatmul.mubr.bf16.gmra.mrb[0].mxu0 %v668
        %v2971 = vpop.f32.mrb[0].mxu0
        %v2972 = vadd.f32 %v273, %v2971
        %v2973 = vpop.f32.mrb[0].mxu0
        %v2974 = vadd.f32 %v273, %v2973
        %v2975 = vpop.f32.mrb[0].mxu0
        %v2976 = vadd.f32 %v278, %v2975
        %v2977 = vpop.f32.mrb[0].mxu0
        %v2978 = vadd.f32 %v278, %v2977
        %2979 = vdwg.mxu0
        %2980 = vmatprep.subr.bf16.mxu0 0
        %2981 = vmatpush1.bf16.msra.mxu0 %v957
        %2982 = vmatprep.subr.bf16.mxu0 0
        %2983 = vmatpush1.bf16.msra.mxu0 0
        %2984 = vmatprep.subr.bf16.mxu0 0
        %2985 = vmatpush1.bf16.msra.mxu0 0
        %2986 = vmatprep.subr.bf16.mxu0 0
        %2987 = vmatpush1.bf16.msra.mxu0 0
        %2988 = vmatprep.subr.bf16.mxu0 0
        %2989 = vmatpush1.bf16.msra.mxu0 0
        %2990 = vmatprep.subr.bf16.mxu0 0
        %2991 = vmatpush1.bf16.msra.mxu0 0
        %2992 = vmatprep.subr.bf16.mxu0 0
        %2993 = vmatpush1.bf16.msra.mxu0 0
        %2994 = vmatprep.subr.bf16.mxu0 0
        %2995 = vmatpush1.bf16.msra.mxu0 0
        %2996 = vmatprep.subr.bf16.mxu0 0
        %2997 = vmatpush1.bf16.msra.mxu0 0
        %2998 = vmatprep.subr.bf16.mxu0 0
        %2999 = vmatpush1.bf16.msra.mxu0 0
        %3000 = vmatprep.subr.bf16.mxu0 0
        %3001 = vmatpush1.bf16.msra.mxu0 0
        %3002 = vmatprep.subr.bf16.mxu0 0
        %3003 = vmatpush1.bf16.msra.mxu0 0
        %3004 = vmatprep.subr.bf16.mxu0 0
        %3005 = vmatpush1.bf16.msra.mxu0 0
        %3006 = vmatprep.subr.bf16.mxu0 0
        %3007 = vmatpush1.bf16.msra.mxu0 0
        %3008 = vmatprep.subr.bf16.mxu0 0
        %3009 = vmatpush1.bf16.msra.mxu0 0
        %3010 = vmatprep.subr.bf16.mxu0 0
        %3011 = vmatpush1.bf16.msra.mxu0 0
        %3012 = vmatprep.mubr.bf16.mxu0 0
        %3013 = vmatmul.mubr.bf16.gmra.mrb[0].mxu0 %v668
        %v3014 = vpop.f32.mrb[0].mxu0
        %v3015 = vadd.f32 %v273, %v3014
        %v3016 = vpop.f32.mrb[0].mxu0
        %v3017 = vpop.f32.mrb[0].mxu0
        %v3018 = vadd.f32 %v278, %v3017
        %v3019 = vpop.f32.mrb[0].mxu0
        %3020 = vdwg.mxu0
        %v3021 = vmax.f32 %v994, 0.0
        %v3022 = vmax.f32 %v996, 0.0
        %v3023 = vmax.f32 %v1037, 0.0
        %v3024 = vmax.f32 %v1039, 0.0
        %v3025 = vmax.f32 %v1080, 0.0
        %v3026 = vmax.f32 %v1082, 0.0
        %v3027 = vmax.f32 %v1123, 0.0
        %v3028 = vmax.f32 %v1125, 0.0
        %v3029 = vmax.f32 %v1166, 0.0
        %v3030 = vmax.f32 %v1168, 0.0
        %v3031 = vmax.f32 %v1209, 0.0
        %v3032 = vmax.f32 %v1211, 0.0
        %v3033 = vmax.f32 %v1252, 0.0
        %v3034 = vmax.f32 %v1254, 0.0
        %v3035 = vmax.f32 %v1295, 0.0
        %v3036 = vmax.f32 %v1297, 0.0
        %v3037 = vmax.f32 %v1338, 0.0
        %v3038 = vmax.f32 %v1340, 0.0
        %v3039 = vmax.f32 %v1381, 0.0
        %v3040 = vmax.f32 %v1383, 0.0
        %v3041 = vmax.f32 %v1424, 0.0
        %v3042 = vmax.f32 %v1426, 0.0
        %v3043 = vmax.f32 %v1467, 0.0
        %v3044 = vmax.f32 %v1469, 0.0
        %v3045 = vmax.f32 %v1510, 0.0
        %v3046 = vmax.f32 %v1512, 0.0
        %v3047 = vmax.f32 %v1553, 0.0
        %v3048 = vmax.f32 %v1555, 0.0
        %v3049 = vmax.f32 %v1596, 0.0
        %v3050 = vmax.f32 %v1598, 0.0
        %v3051 = vmax.f32 %v1639, 0.0
        %v3052 = vmax.f32 %v1641, 0.0
        %v3053 = vmax.f32 %v1682, 0.0
        %v3054 = vmax.f32 %v1684, 0.0
        %v3055 = vmax.f32 %v1725, 0.0
        %v3056 = vmax.f32 %v1727, 0.0
        %v3057 = vmax.f32 %v1768, 0.0
        %v3058 = vmax.f32 %v1770, 0.0
        %v3059 = vmax.f32 %v1811, 0.0
        %v3060 = vmax.f32 %v1813, 0.0
        %v3061 = vmax.f32 %v1854, 0.0
        %v3062 = vmax.f32 %v1856, 0.0
        %v3063 = vmax.f32 %v1897, 0.0
        %v3064 = vmax.f32 %v1899, 0.0
        %v3065 = vmax.f32 %v1940, 0.0
        %v3066 = vmax.f32 %v1942, 0.0
        %v3067 = vmax.f32 %v1983, 0.0
        %v3068 = vmax.f32 %v1985, 0.0
        %v3069 = vmax.f32 %v2026, 0.0
        %v3070 = vmax.f32 %v2028, 0.0
        %v3071 = vmax.f32 %v2069, 0.0
        %v3072 = vmax.f32 %v2071, 0.0
        %v3073 = vmax.f32 %v2112, 0.0
        %v3074 = vmax.f32 %v2114, 0.0
        %v3075 = vmax.f32 %v2155, 0.0
        %v3076 = vmax.f32 %v2157, 0.0
        %v3077 = vmax.f32 %v2198, 0.0
        %v3078 = vmax.f32 %v2200, 0.0
        %v3079 = vmax.f32 %v2241, 0.0
        %v3080 = vmax.f32 %v2243, 0.0
        %v3081 = vmax.f32 %v2284, 0.0
        %v3082 = vmax.f32 %v2286, 0.0
        %v3083 = vmax.f32 %v2327, 0.0
        %v3084 = vmax.f32 %v2329, 0.0
        %v3085 = vmax.f32 %v2370, 0.0
        %v3086 = vmax.f32 %v2372, 0.0
        %v3087 = vmax.f32 %v2413, 0.0
        %v3088 = vmax.f32 %v2415, 0.0
        %v3089 = vmax.f32 %v2456, 0.0
        %v3090 = vmax.f32 %v2458, 0.0
        %v3091 = vmax.f32 %v2499, 0.0
        %v3092 = vmax.f32 %v2501, 0.0
        %v3093 = vmax.f32 %v2542, 0.0
        %v3094 = vmax.f32 %v2544, 0.0
        %v3095 = vmax.f32 %v2585, 0.0
        %v3096 = vmax.f32 %v2587, 0.0
        %v3097 = vmax.f32 %v2628, 0.0
        %v3098 = vmax.f32 %v2630, 0.0
        %v3099 = vmax.f32 %v2671, 0.0
        %v3100 = vmax.f32 %v2673, 0.0
        %v3101 = vmax.f32 %v2714, 0.0
        %v3102 = vmax.f32 %v2716, 0.0
        %v3103 = vmax.f32 %v2757, 0.0
        %v3104 = vmax.f32 %v2759, 0.0
        %v3105 = vmax.f32 %v2800, 0.0
        %v3106 = vmax.f32 %v2802, 0.0
        %v3107 = vmax.f32 %v2843, 0.0
        %v3108 = vmax.f32 %v2845, 0.0
        %v3109 = vmax.f32 %v2886, 0.0
        %v3110 = vmax.f32 %v2888, 0.0
        %v3111 = vmax.f32 %v2929, 0.0
        %v3112 = vmax.f32 %v2931, 0.0
        %v3113 = vmax.f32 %v2972, 0.0
        %v3114 = vmax.f32 %v2974, 0.0
        %v3115 = vmax.f32 %v3015, 0.0
        %v3116 = vmax.f32 %v998, 0.0
        %v3117 = vmax.f32 %v1000, 0.0
        %v3118 = vmax.f32 %v1041, 0.0
        %v3119 = vmax.f32 %v1043, 0.0
        %v3120 = vmax.f32 %v1084, 0.0
        %v3121 = vmax.f32 %v1086, 0.0
        %v3122 = vmax.f32 %v1127, 0.0
        %v3123 = vmax.f32 %v1129, 0.0
        %v3124 = vmax.f32 %v1170, 0.0
        %v3125 = vmax.f32 %v1172, 0.0
        %v3126 = vmax.f32 %v1213, 0.0
        %v3127 = vmax.f32 %v1215, 0.0
        %v3128 = vmax.f32 %v1256, 0.0
        %v3129 = vmax.f32 %v1258, 0.0
        %v3130 = vmax.f32 %v1299, 0.0
        %v3131 = vmax.f32 %v1301, 0.0
        %v3132 = vmax.f32 %v1342, 0.0
        %v3133 = vmax.f32 %v1344, 0.0
        %v3134 = vmax.f32 %v1385, 0.0
        %v3135 = vmax.f32 %v1387, 0.0
        %v3136 = vmax.f32 %v1428, 0.0
        %v3137 = vmax.f32 %v1430, 0.0
        %v3138 = vmax.f32 %v1471, 0.0
        %v3139 = vmax.f32 %v1473, 0.0
        %v3140 = vmax.f32 %v1514, 0.0
        %v3141 = vmax.f32 %v1516, 0.0
        %v3142 = vmax.f32 %v1557, 0.0
        %v3143 = vmax.f32 %v1559, 0.0
        %v3144 = vmax.f32 %v1600, 0.0
        %v3145 = vmax.f32 %v1602, 0.0
        %v3146 = vmax.f32 %v1643, 0.0
        %v3147 = vmax.f32 %v1645, 0.0
        %v3148 = vmax.f32 %v1686, 0.0
        %v3149 = vmax.f32 %v1688, 0.0
        %v3150 = vmax.f32 %v1729, 0.0
        %v3151 = vmax.f32 %v1731, 0.0
        %v3152 = vmax.f32 %v1772, 0.0
        %v3153 = vmax.f32 %v1774, 0.0
        %v3154 = vmax.f32 %v1815, 0.0
        %v3155 = vmax.f32 %v1817, 0.0
        %v3156 = vmax.f32 %v1858, 0.0
        %v3157 = vmax.f32 %v1860, 0.0
        %v3158 = vmax.f32 %v1901, 0.0
        %v3159 = vmax.f32 %v1903, 0.0
        %v3160 = vmax.f32 %v1944, 0.0
        %v3161 = vmax.f32 %v1946, 0.0
        %v3162 = vmax.f32 %v1987, 0.0
        %v3163 = vmax.f32 %v1989, 0.0
        %v3164 = vmax.f32 %v2030, 0.0
        %v3165 = vmax.f32 %v2032, 0.0
        %v3166 = vmax.f32 %v2073, 0.0
        %v3167 = vmax.f32 %v2075, 0.0
        %v3168 = vmax.f32 %v2116, 0.0
        %v3169 = vmax.f32 %v2118, 0.0
        %v3170 = vmax.f32 %v2159, 0.0
        %v3171 = vmax.f32 %v2161, 0.0
        %v3172 = vmax.f32 %v2202, 0.0
        %v3173 = vmax.f32 %v2204, 0.0
        %v3174 = vmax.f32 %v2245, 0.0
        %v3175 = vmax.f32 %v2247, 0.0
        %v3176 = vmax.f32 %v2288, 0.0
        %v3177 = vmax.f32 %v2290, 0.0
        %v3178 = vmax.f32 %v2331, 0.0
        %v3179 = vmax.f32 %v2333, 0.0
        %v3180 = vmax.f32 %v2374, 0.0
        %v3181 = vmax.f32 %v2376, 0.0
        %v3182 = vmax.f32 %v2417, 0.0
        %v3183 = vmax.f32 %v2419, 0.0
        %v3184 = vmax.f32 %v2460, 0.0
        %v3185 = vmax.f32 %v2462, 0.0
        %v3186 = vmax.f32 %v2503, 0.0
        %v3187 = vmax.f32 %v2505, 0.0
        %v3188 = vmax.f32 %v2546, 0.0
        %v3189 = vmax.f32 %v2548, 0.0
        %v3190 = vmax.f32 %v2589, 0.0
        %v3191 = vmax.f32 %v2591, 0.0
        %v3192 = vmax.f32 %v2632, 0.0
        %v3193 = vmax.f32 %v2634, 0.0
        %v3194 = vmax.f32 %v2675, 0.0
        %v3195 = vmax.f32 %v2677, 0.0
        %v3196 = vmax.f32 %v2718, 0.0
        %v3197 = vmax.f32 %v2720, 0.0
        %v3198 = vmax.f32 %v2761, 0.0
        %v3199 = vmax.f32 %v2763, 0.0
        %v3200 = vmax.f32 %v2804, 0.0
        %v3201 = vmax.f32 %v2806, 0.0
        %v3202 = vmax.f32 %v2847, 0.0
        %v3203 = vmax.f32 %v2849, 0.0
        %v3204 = vmax.f32 %v2890, 0.0
        %v3205 = vmax.f32 %v2892, 0.0
        %v3206 = vmax.f32 %v2933, 0.0
        %v3207 = vmax.f32 %v2935, 0.0
        %v3208 = vmax.f32 %v2976, 0.0
        %v3209 = vmax.f32 %v2978, 0.0
        %v3210 = vmax.f32 %v3018, 0.0
        %v3211 = vpack.c.bf16 %v3116, %v3021
        %v3212 = vpack.c.bf16 %v3117, %v3022
        %v3213 = vpack.c.bf16 %v3118, %v3023
        %v3214 = vpack.c.bf16 %v3119, %v3024
        %v3215 = vpack.c.bf16 %v3120, %v3025
        %v3216 = vpack.c.bf16 %v3121, %v3026
        %v3217 = vpack.c.bf16 %v3122, %v3027
        %v3218 = vpack.c.bf16 %v3123, %v3028
        %v3219 = vpack.c.bf16 %v3124, %v3029
        %v3220 = vpack.c.bf16 %v3125, %v3030
        %v3221 = vpack.c.bf16 %v3126, %v3031
        %v3222 = vpack.c.bf16 %v3127, %v3032
        %v3223 = vpack.c.bf16 %v3128, %v3033
        %v3224 = vpack.c.bf16 %v3129, %v3034
        %v3225 = vpack.c.bf16 %v3130, %v3035
        %v3226 = vpack.c.bf16 %v3131, %v3036
        %v3227 = vpack.c.bf16 %v3132, %v3037
        %v3228 = vpack.c.bf16 %v3133, %v3038
        %v3229 = vpack.c.bf16 %v3134, %v3039
        %v3230 = vpack.c.bf16 %v3135, %v3040
        %v3231 = vpack.c.bf16 %v3136, %v3041
        %v3232 = vpack.c.bf16 %v3137, %v3042
        %v3233 = vpack.c.bf16 %v3138, %v3043
        %v3234 = vpack.c.bf16 %v3139, %v3044
        %v3235 = vpack.c.bf16 %v3140, %v3045
        %v3236 = vpack.c.bf16 %v3141, %v3046
        %v3237 = vpack.c.bf16 %v3142, %v3047
        %v3238 = vpack.c.bf16 %v3143, %v3048
        %v3239 = vpack.c.bf16 %v3144, %v3049
        %v3240 = vpack.c.bf16 %v3145, %v3050
        %v3241 = vpack.c.bf16 %v3146, %v3051
        %v3242 = vpack.c.bf16 %v3147, %v3052
        %v3243 = vpack.c.bf16 %v3148, %v3053
        %v3244 = vpack.c.bf16 %v3149, %v3054
        %v3245 = vpack.c.bf16 %v3150, %v3055
        %v3246 = vpack.c.bf16 %v3151, %v3056
        %v3247 = vpack.c.bf16 %v3152, %v3057
        %v3248 = vpack.c.bf16 %v3153, %v3058
        %v3249 = vpack.c.bf16 %v3154, %v3059
        %v3250 = vpack.c.bf16 %v3155, %v3060
        %v3251 = vpack.c.bf16 %v3156, %v3061
        %v3252 = vpack.c.bf16 %v3157, %v3062
        %v3253 = vpack.c.bf16 %v3158, %v3063
        %v3254 = vpack.c.bf16 %v3159, %v3064
        %v3255 = vpack.c.bf16 %v3160, %v3065
        %v3256 = vpack.c.bf16 %v3161, %v3066
        %v3257 = vpack.c.bf16 %v3162, %v3067
        %v3258 = vpack.c.bf16 %v3163, %v3068
        %v3259 = vpack.c.bf16 %v3164, %v3069
        %v3260 = vpack.c.bf16 %v3165, %v3070
        %v3261 = vpack.c.bf16 %v3166, %v3071
        %v3262 = vpack.c.bf16 %v3167, %v3072
        %v3263 = vpack.c.bf16 %v3168, %v3073
        %v3264 = vpack.c.bf16 %v3169, %v3074
        %v3265 = vpack.c.bf16 %v3170, %v3075
        %v3266 = vpack.c.bf16 %v3171, %v3076
        %v3267 = vpack.c.bf16 %v3172, %v3077
        %v3268 = vpack.c.bf16 %v3173, %v3078
        %v3269 = vpack.c.bf16 %v3174, %v3079
        %v3270 = vpack.c.bf16 %v3175, %v3080
        %v3271 = vpack.c.bf16 %v3176, %v3081
        %v3272 = vpack.c.bf16 %v3177, %v3082
        %v3273 = vpack.c.bf16 %v3178, %v3083
        %v3274 = vpack.c.bf16 %v3179, %v3084
        %v3275 = vpack.c.bf16 %v3180, %v3085
        %v3276 = vpack.c.bf16 %v3181, %v3086
        %v3277 = vpack.c.bf16 %v3182, %v3087
        %v3278 = vpack.c.bf16 %v3183, %v3088
        %v3279 = vpack.c.bf16 %v3184, %v3089
        %v3280 = vpack.c.bf16 %v3185, %v3090
        %v3281 = vpack.c.bf16 %v3186, %v3091
        %v3282 = vpack.c.bf16 %v3187, %v3092
        %v3283 = vpack.c.bf16 %v3188, %v3093
        %v3284 = vpack.c.bf16 %v3189, %v3094
        %v3285 = vpack.c.bf16 %v3190, %v3095
        %v3286 = vpack.c.bf16 %v3191, %v3096
        %v3287 = vpack.c.bf16 %v3192, %v3097
        %v3288 = vpack.c.bf16 %v3193, %v3098
        %v3289 = vpack.c.bf16 %v3194, %v3099
        %v3290 = vpack.c.bf16 %v3195, %v3100
        %v3291 = vpack.c.bf16 %v3196, %v3101
        %v3292 = vpack.c.bf16 %v3197, %v3102
        %v3293 = vpack.c.bf16 %v3198, %v3103
        %v3294 = vpack.c.bf16 %v3199, %v3104
        %v3295 = vpack.c.bf16 %v3200, %v3105
        %v3296 = vpack.c.bf16 %v3201, %v3106
        %v3297 = vpack.c.bf16 %v3202, %v3107
        %v3298 = vpack.c.bf16 %v3203, %v3108
        %v3299 = vpack.c.bf16 %v3204, %v3109
        %v3300 = vpack.c.bf16 %v3205, %v3110
        %v3301 = vpack.c.bf16 %v3206, %v3111
        %v3302 = vpack.c.bf16 %v3207, %v3112
        %v3303 = vpack.c.bf16 %v3208, %v3113
        %v3304 = vpack.c.bf16 %v3209, %v3114
        %v3305 = vpack.c.bf16 %v3210, %v3115
        %v3401 = vunpack.c.l.b16 %v3211
        %v3402 = vunpack.c.l.b16 %v3212
        %v3403 = vunpack.c.l.b16 %v3213
        %v3404 = vunpack.c.l.b16 %v3214
        %v3405 = vunpack.c.l.b16 %v3215
        %v3406 = vunpack.c.l.b16 %v3216
        %v3407 = vunpack.c.l.b16 %v3217
        %v3408 = vunpack.c.l.b16 %v3218
        %v3409 = vunpack.c.l.b16 %v3219
        %v3410 = vunpack.c.l.b16 %v3220
        %v3411 = vunpack.c.l.b16 %v3221
        %v3412 = vunpack.c.l.b16 %v3222
        %v3413 = vunpack.c.l.b16 %v3223
        %v3414 = vunpack.c.l.b16 %v3224
        %v3415 = vunpack.c.l.b16 %v3225
        %v3416 = vunpack.c.l.b16 %v3226
        %v3417 = vunpack.c.l.b16 %v3227
        %v3418 = vunpack.c.l.b16 %v3228
        %v3419 = vunpack.c.l.b16 %v3229
        %v3420 = vunpack.c.l.b16 %v3230
        %v3421 = vunpack.c.l.b16 %v3231
        %v3422 = vunpack.c.l.b16 %v3232
        %v3423 = vunpack.c.l.b16 %v3233
        %v3424 = vunpack.c.l.b16 %v3234
        %v3425 = vunpack.c.l.b16 %v3235
        %v3426 = vunpack.c.l.b16 %v3236
        %v3427 = vunpack.c.l.b16 %v3237
        %v3428 = vunpack.c.l.b16 %v3238
        %v3429 = vunpack.c.l.b16 %v3239
        %v3430 = vunpack.c.l.b16 %v3240
        %v3431 = vunpack.c.l.b16 %v3241
        %v3432 = vunpack.c.l.b16 %v3242
        %v3433 = vunpack.c.l.b16 %v3243
        %v3434 = vunpack.c.l.b16 %v3244
        %v3435 = vunpack.c.l.b16 %v3245
        %v3436 = vunpack.c.l.b16 %v3246
        %v3437 = vunpack.c.l.b16 %v3247
        %v3438 = vunpack.c.l.b16 %v3248
        %v3439 = vunpack.c.l.b16 %v3249
        %v3440 = vunpack.c.l.b16 %v3250
        %v3441 = vunpack.c.l.b16 %v3251
        %v3442 = vunpack.c.l.b16 %v3252
        %v3443 = vunpack.c.l.b16 %v3253
        %v3444 = vunpack.c.l.b16 %v3254
        %v3445 = vunpack.c.l.b16 %v3255
        %v3446 = vunpack.c.l.b16 %v3256
        %v3447 = vunpack.c.l.b16 %v3257
        %v3448 = vunpack.c.l.b16 %v3258
        %v3449 = vunpack.c.l.b16 %v3259
        %v3450 = vunpack.c.l.b16 %v3260
        %v3451 = vunpack.c.l.b16 %v3261
        %v3452 = vunpack.c.l.b16 %v3262
        %v3453 = vunpack.c.l.b16 %v3263
        %v3454 = vunpack.c.l.b16 %v3264
        %v3455 = vunpack.c.l.b16 %v3265
        %v3456 = vunpack.c.l.b16 %v3266
        %v3457 = vunpack.c.l.b16 %v3267
        %v3458 = vunpack.c.l.b16 %v3268
        %v3459 = vunpack.c.l.b16 %v3269
        %v3460 = vunpack.c.l.b16 %v3270
        %v3461 = vunpack.c.l.b16 %v3271
        %v3462 = vunpack.c.l.b16 %v3272
        %v3463 = vunpack.c.l.b16 %v3273
        %v3464 = vunpack.c.l.b16 %v3274
        %v3465 = vunpack.c.l.b16 %v3275
        %v3466 = vunpack.c.l.b16 %v3276
        %v3467 = vunpack.c.l.b16 %v3277
        %v3468 = vunpack.c.l.b16 %v3278
        %v3469 = vunpack.c.l.b16 %v3279
        %v3470 = vunpack.c.l.b16 %v3280
        %v3471 = vunpack.c.l.b16 %v3281
        %v3472 = vunpack.c.l.b16 %v3282
        %v3473 = vunpack.c.l.b16 %v3283
        %v3474 = vunpack.c.l.b16 %v3284
        %v3475 = vunpack.c.l.b16 %v3285
        %v3476 = vunpack.c.l.b16 %v3286
        %v3477 = vunpack.c.l.b16 %v3287
        %v3478 = vunpack.c.l.b16 %v3288
        %v3479 = vunpack.c.l.b16 %v3289
        %v3480 = vunpack.c.l.b16 %v3290
        %v3481 = vunpack.c.l.b16 %v3291
        %v3482 = vunpack.c.l.b16 %v3292
        %v3483 = vunpack.c.l.b16 %v3293
        %v3484 = vunpack.c.l.b16 %v3294
        %v3485 = vunpack.c.l.b16 %v3295
        %v3486 = vunpack.c.l.b16 %v3296
        %v3487 = vunpack.c.l.b16 %v3297
        %v3488 = vunpack.c.l.b16 %v3298
        %v3489 = vunpack.c.l.b16 %v3299
        %v3490 = vunpack.c.l.b16 %v3300
        %v3491 = vunpack.c.l.b16 %v3301
        %v3492 = vunpack.c.l.b16 %v3302
        %v3493 = vunpack.c.l.b16 %v3303
        %v3494 = vunpack.c.l.b16 %v3304
        %v3495 = vunpack.c.l.b16 %v3305
        %v3496 = vunpack.c.h.b16 %v3211
        %v3497 = vunpack.c.h.b16 %v3212
        %v3498 = vunpack.c.h.b16 %v3213
        %v3499 = vunpack.c.h.b16 %v3214
        %v3500 = vunpack.c.h.b16 %v3215
        %v3501 = vunpack.c.h.b16 %v3216
        %v3502 = vunpack.c.h.b16 %v3217
        %v3503 = vunpack.c.h.b16 %v3218
        %v3504 = vunpack.c.h.b16 %v3219
        %v3505 = vunpack.c.h.b16 %v3220
        %v3506 = vunpack.c.h.b16 %v3221
        %v3507 = vunpack.c.h.b16 %v3222
        %v3508 = vunpack.c.h.b16 %v3223
        %v3509 = vunpack.c.h.b16 %v3224
        %v3510 = vunpack.c.h.b16 %v3225
        %v3511 = vunpack.c.h.b16 %v3226
        %v3512 = vunpack.c.h.b16 %v3227
        %v3513 = vunpack.c.h.b16 %v3228
        %v3514 = vunpack.c.h.b16 %v3229
        %v3515 = vunpack.c.h.b16 %v3230
        %v3516 = vunpack.c.h.b16 %v3231
        %v3517 = vunpack.c.h.b16 %v3232
        %v3518 = vunpack.c.h.b16 %v3233
        %v3519 = vunpack.c.h.b16 %v3234
        %v3520 = vunpack.c.h.b16 %v3235
        %v3521 = vunpack.c.h.b16 %v3236
        %v3522 = vunpack.c.h.b16 %v3237
        %v3523 = vunpack.c.h.b16 %v3238
        %v3524 = vunpack.c.h.b16 %v3239
        %v3525 = vunpack.c.h.b16 %v3240
        %v3526 = vunpack.c.h.b16 %v3241
        %v3527 = vunpack.c.h.b16 %v3242
        %v3528 = vunpack.c.h.b16 %v3243
        %v3529 = vunpack.c.h.b16 %v3244
        %v3530 = vunpack.c.h.b16 %v3245
        %v3531 = vunpack.c.h.b16 %v3246
        %v3532 = vunpack.c.h.b16 %v3247
        %v3533 = vunpack.c.h.b16 %v3248
        %v3534 = vunpack.c.h.b16 %v3249
        %v3535 = vunpack.c.h.b16 %v3250
        %v3536 = vunpack.c.h.b16 %v3251
        %v3537 = vunpack.c.h.b16 %v3252
        %v3538 = vunpack.c.h.b16 %v3253
        %v3539 = vunpack.c.h.b16 %v3254
        %v3540 = vunpack.c.h.b16 %v3255
        %v3541 = vunpack.c.h.b16 %v3256
        %v3542 = vunpack.c.h.b16 %v3257
        %v3543 = vunpack.c.h.b16 %v3258
        %v3544 = vunpack.c.h.b16 %v3259
        %v3545 = vunpack.c.h.b16 %v3260
        %v3546 = vunpack.c.h.b16 %v3261
        %v3547 = vunpack.c.h.b16 %v3262
        %v3548 = vunpack.c.h.b16 %v3263
        %v3549 = vunpack.c.h.b16 %v3264
        %v3550 = vunpack.c.h.b16 %v3265
        %v3551 = vunpack.c.h.b16 %v3266
        %v3552 = vunpack.c.h.b16 %v3267
        %v3553 = vunpack.c.h.b16 %v3268
        %v3554 = vunpack.c.h.b16 %v3269
        %v3555 = vunpack.c.h.b16 %v3270
        %v3556 = vunpack.c.h.b16 %v3271
        %v3557 = vunpack.c.h.b16 %v3272
        %v3558 = vunpack.c.h.b16 %v3273
        %v3559 = vunpack.c.h.b16 %v3274
        %v3560 = vunpack.c.h.b16 %v3275
        %v3561 = vunpack.c.h.b16 %v3276
        %v3562 = vunpack.c.h.b16 %v3277
        %v3563 = vunpack.c.h.b16 %v3278
        %v3564 = vunpack.c.h.b16 %v3279
        %v3565 = vunpack.c.h.b16 %v3280
        %v3566 = vunpack.c.h.b16 %v3281
        %v3567 = vunpack.c.h.b16 %v3282
        %v3568 = vunpack.c.h.b16 %v3283
        %v3569 = vunpack.c.h.b16 %v3284
        %v3570 = vunpack.c.h.b16 %v3285
        %v3571 = vunpack.c.h.b16 %v3286
        %v3572 = vunpack.c.h.b16 %v3287
        %v3573 = vunpack.c.h.b16 %v3288
        %v3574 = vunpack.c.h.b16 %v3289
        %v3575 = vunpack.c.h.b16 %v3290
        %v3576 = vunpack.c.h.b16 %v3291
        %v3577 = vunpack.c.h.b16 %v3292
        %v3578 = vunpack.c.h.b16 %v3293
        %v3579 = vunpack.c.h.b16 %v3294
        %v3580 = vunpack.c.h.b16 %v3295
        %v3581 = vunpack.c.h.b16 %v3296
        %v3582 = vunpack.c.h.b16 %v3297
        %v3583 = vunpack.c.h.b16 %v3298
        %v3584 = vunpack.c.h.b16 %v3299
        %v3585 = vunpack.c.h.b16 %v3300
        %v3586 = vunpack.c.h.b16 %v3301
        %v3587 = vunpack.c.h.b16 %v3302
        %v3588 = vunpack.c.h.b16 %v3303
        %v3589 = vunpack.c.h.b16 %v3304
        %v3590 = vunpack.c.h.b16 %v3305
        %v3591 = vpack.c.b16 %v3402, %v3401
        %v3592 = vpack.c.b16 %v3404, %v3403
        %v3593 = vpack.c.b16 %v3406, %v3405
        %v3594 = vpack.c.b16 %v3408, %v3407
        %v3595 = vpack.c.b16 %v3410, %v3409
        %v3596 = vpack.c.b16 %v3412, %v3411
        %v3597 = vpack.c.b16 %v3414, %v3413
        %v3598 = vpack.c.b16 %v3416, %v3415
        %v3599 = vpack.c.b16 %v3418, %v3417
        %v3600 = vpack.c.b16 %v3420, %v3419
        %v3601 = vpack.c.b16 %v3422, %v3421
        %v3602 = vpack.c.b16 %v3424, %v3423
        %v3603 = vpack.c.b16 %v3426, %v3425
        %v3604 = vpack.c.b16 %v3428, %v3427
        %v3605 = vpack.c.b16 %v3430, %v3429
        %v3606 = vpack.c.b16 %v3432, %v3431
        %v3607 = vpack.c.b16 %v3434, %v3433
        %v3608 = vpack.c.b16 %v3436, %v3435
        %v3609 = vpack.c.b16 %v3438, %v3437
        %v3610 = vpack.c.b16 %v3440, %v3439
        %v3611 = vpack.c.b16 %v3442, %v3441
        %v3612 = vpack.c.b16 %v3444, %v3443
        %v3613 = vpack.c.b16 %v3446, %v3445
        %v3614 = vpack.c.b16 %v3448, %v3447
        %v3615 = vpack.c.b16 %v3450, %v3449
        %v3616 = vpack.c.b16 %v3452, %v3451
        %v3617 = vpack.c.b16 %v3454, %v3453
        %v3618 = vpack.c.b16 %v3456, %v3455
        %v3619 = vpack.c.b16 %v3458, %v3457
        %v3620 = vpack.c.b16 %v3460, %v3459
        %v3621 = vpack.c.b16 %v3462, %v3461
        %v3622 = vpack.c.b16 %v3464, %v3463
        %v3623 = vpack.c.b16 %v3466, %v3465
        %v3624 = vpack.c.b16 %v3468, %v3467
        %v3625 = vpack.c.b16 %v3470, %v3469
        %v3626 = vpack.c.b16 %v3472, %v3471
        %v3627 = vpack.c.b16 %v3474, %v3473
        %v3628 = vpack.c.b16 %v3476, %v3475
        %v3629 = vpack.c.b16 %v3478, %v3477
        %v3630 = vpack.c.b16 %v3480, %v3479
        %v3631 = vpack.c.b16 %v3482, %v3481
        %v3632 = vpack.c.b16 %v3484, %v3483
        %v3633 = vpack.c.b16 %v3486, %v3485
        %v3634 = vpack.c.b16 %v3488, %v3487
        %v3635 = vpack.c.b16 %v3490, %v3489
        %v3636 = vpack.c.b16 %v3492, %v3491
        %v3637 = vpack.c.b16 %v3494, %v3493
        %v3638 = vpack.c.b16 %v3495, %v3495
        %v3639 = vpack.c.b16 %v3497, %v3496
        %v3640 = vpack.c.b16 %v3499, %v3498
        %v3641 = vpack.c.b16 %v3501, %v3500
        %v3642 = vpack.c.b16 %v3503, %v3502
        %v3643 = vpack.c.b16 %v3505, %v3504
        %v3644 = vpack.c.b16 %v3507, %v3506
        %v3645 = vpack.c.b16 %v3509, %v3508
        %v3646 = vpack.c.b16 %v3511, %v3510
        %v3647 = vpack.c.b16 %v3513, %v3512
        %v3648 = vpack.c.b16 %v3515, %v3514
        %v3649 = vpack.c.b16 %v3517, %v3516
        %v3650 = vpack.c.b16 %v3519, %v3518
        %v3651 = vpack.c.b16 %v3521, %v3520
        %v3652 = vpack.c.b16 %v3523, %v3522
        %v3653 = vpack.c.b16 %v3525, %v3524
        %v3654 = vpack.c.b16 %v3527, %v3526
        %v3655 = vpack.c.b16 %v3529, %v3528
        %v3656 = vpack.c.b16 %v3531, %v3530
        %v3657 = vpack.c.b16 %v3533, %v3532
        %v3658 = vpack.c.b16 %v3535, %v3534
        %v3659 = vpack.c.b16 %v3537, %v3536
        %v3660 = vpack.c.b16 %v3539, %v3538
        %v3661 = vpack.c.b16 %v3541, %v3540
        %v3662 = vpack.c.b16 %v3543, %v3542
        %v3663 = vpack.c.b16 %v3545, %v3544
        %v3664 = vpack.c.b16 %v3547, %v3546
        %v3665 = vpack.c.b16 %v3549, %v3548
        %v3666 = vpack.c.b16 %v3551, %v3550
        %v3667 = vpack.c.b16 %v3553, %v3552
        %v3668 = vpack.c.b16 %v3555, %v3554
        %v3669 = vpack.c.b16 %v3557, %v3556
        %v3670 = vpack.c.b16 %v3559, %v3558
        %v3671 = vpack.c.b16 %v3561, %v3560
        %v3672 = vpack.c.b16 %v3563, %v3562
        %v3673 = vpack.c.b16 %v3565, %v3564
        %v3674 = vpack.c.b16 %v3567, %v3566
        %v3675 = vpack.c.b16 %v3569, %v3568
        %v3676 = vpack.c.b16 %v3571, %v3570
        %v3677 = vpack.c.b16 %v3573, %v3572
        %v3678 = vpack.c.b16 %v3575, %v3574
        %v3679 = vpack.c.b16 %v3577, %v3576
        %v3680 = vpack.c.b16 %v3579, %v3578
        %v3681 = vpack.c.b16 %v3581, %v3580
        %v3682 = vpack.c.b16 %v3583, %v3582
        %v3683 = vpack.c.b16 %v3585, %v3584
        %v3684 = vpack.c.b16 %v3587, %v3586
        %v3685 = vpack.c.b16 %v3589, %v3588
        %v3686 = vpack.c.b16 %v3590, %v3590
        %3783 = vst [vmem:[%s163] sm:$0xff] %v3591
        %3784 = vst [vmem:[%s163 + $0x8] sm:$0xff] %v3592
        %3785 = vst [vmem:[%s163 + $0x10] sm:$0xff] %v3593
        %3786 = vst [vmem:[%s163 + $0x18] sm:$0xff] %v3594
        %3787 = vst [vmem:[%s163 + $0x20] sm:$0xff] %v3595
        %3788 = vst [vmem:[%s163 + $0x28] sm:$0xff] %v3596
        %3789 = vst [vmem:[%s163 + $0x30] sm:$0xff] %v3597
        %3790 = vst [vmem:[%s163 + $0x38] sm:$0xff] %v3598
        %3791 = vst [vmem:[%s163 + $0x40] sm:$0xff] %v3599
        %3792 = vst [vmem:[%s163 + $0x48] sm:$0xff] %v3600
        %3793 = vst [vmem:[%s163 + $0x50] sm:$0xff] %v3601
        %3794 = vst [vmem:[%s163 + $0x58] sm:$0xff] %v3602
        %3795 = vst [vmem:[%s163 + $0x60] sm:$0xff] %v3603
        %3796 = vst [vmem:[%s163 + $0x68] sm:$0xff] %v3604
        %3797 = vst [vmem:[%s163 + $0x70] sm:$0xff] %v3605
        %3798 = vst [vmem:[%s163 + $0x78] sm:$0xff] %v3606
        %3799 = vst [vmem:[%s163 + $0x80] sm:$0xff] %v3607
        %3800 = vst [vmem:[%s163 + $0x88] sm:$0xff] %v3608
        %3801 = vst [vmem:[%s163 + $0x90] sm:$0xff] %v3609
        %3802 = vst [vmem:[%s163 + $0x98] sm:$0xff] %v3610
        %3803 = vst [vmem:[%s163 + $0xa0] sm:$0xff] %v3611
        %3804 = vst [vmem:[%s163 + $0xa8] sm:$0xff] %v3612
        %3805 = vst [vmem:[%s163 + $0xb0] sm:$0xff] %v3613
        %3806 = vst [vmem:[%s163 + $0xb8] sm:$0xff] %v3614
        %3807 = vst [vmem:[%s163 + $0xc0] sm:$0xff] %v3615
        %3808 = vst [vmem:[%s163 + $0xc8] sm:$0xff] %v3616
        %3809 = vst [vmem:[%s163 + $0xd0] sm:$0xff] %v3617
        %3810 = vst [vmem:[%s163 + $0xd8] sm:$0xff] %v3618
        %3811 = vst [vmem:[%s163 + $0xe0] sm:$0xff] %v3619
        %3812 = vst [vmem:[%s163 + $0xe8] sm:$0xff] %v3620
        %3813 = vst [vmem:[%s163 + $0xf0] sm:$0xff] %v3621
        %3814 = vst [vmem:[%s163 + $0xf8] sm:$0xff] %v3622
        %3815 = vst [vmem:[%s163 + $0x100] sm:$0xff] %v3623
        %3816 = vst [vmem:[%s163 + $0x108] sm:$0xff] %v3624
        %3817 = vst [vmem:[%s163 + $0x110] sm:$0xff] %v3625
        %3818 = vst [vmem:[%s163 + $0x118] sm:$0xff] %v3626
        %3819 = vst [vmem:[%s163 + $0x120] sm:$0xff] %v3627
        %3820 = vst [vmem:[%s163 + $0x128] sm:$0xff] %v3628
        %3821 = vst [vmem:[%s163 + $0x130] sm:$0xff] %v3629
        %3822 = vst [vmem:[%s163 + $0x138] sm:$0xff] %v3630
        %3823 = vst [vmem:[%s163 + $0x140] sm:$0xff] %v3631
        %3824 = vst [vmem:[%s163 + $0x148] sm:$0xff] %v3632
        %3825 = vst [vmem:[%s163 + $0x150] sm:$0xff] %v3633
        %3826 = vst [vmem:[%s163 + $0x158] sm:$0xff] %v3634
        %3827 = vst [vmem:[%s163 + $0x160] sm:$0xff] %v3635
        %3828 = vst [vmem:[%s163 + $0x168] sm:$0xff] %v3636
        %3829 = vst [vmem:[%s163 + $0x170] sm:$0xff] %v3637
        %vm3830 = vcmask 551936
        %3831 = vst.msk [vmem:[%s163 + $0x178] sm:$0xf] %vm3830, %v3638
        %3832 = vst [vmem:[%s163 + $0x17c] sm:$0xff] %v3639
        %3833 = vst [vmem:[%s163 + $0x184] sm:$0xff] %v3640
        %3834 = vst [vmem:[%s163 + $0x18c] sm:$0xff] %v3641
        %3835 = vst [vmem:[%s163 + $0x194] sm:$0xff] %v3642
        %3836 = vst [vmem:[%s163 + $0x19c] sm:$0xff] %v3643
        %3837 = vst [vmem:[%s163 + $0x1a4] sm:$0xff] %v3644
        %3838 = vst [vmem:[%s163 + $0x1ac] sm:$0xff] %v3645
        %3839 = vst [vmem:[%s163 + $0x1b4] sm:$0xff] %v3646
        %3840 = vst [vmem:[%s163 + $0x1bc] sm:$0xff] %v3647
        %3841 = vst [vmem:[%s163 + $0x1c4] sm:$0xff] %v3648
        %3842 = vst [vmem:[%s163 + $0x1cc] sm:$0xff] %v3649
        %3843 = vst [vmem:[%s163 + $0x1d4] sm:$0xff] %v3650
        %3844 = vst [vmem:[%s163 + $0x1dc] sm:$0xff] %v3651
        %3845 = vst [vmem:[%s163 + $0x1e4] sm:$0xff] %v3652
        %3846 = vst [vmem:[%s163 + $0x1ec] sm:$0xff] %v3653
        %3847 = vst [vmem:[%s163 + $0x1f4] sm:$0xff] %v3654
        %3848 = vst [vmem:[%s163 + $0x1fc] sm:$0xff] %v3655
        %3849 = vst [vmem:[%s163 + $0x204] sm:$0xff] %v3656
        %3850 = vst [vmem:[%s163 + $0x20c] sm:$0xff] %v3657
        %3851 = vst [vmem:[%s163 + $0x214] sm:$0xff] %v3658
        %3852 = vst [vmem:[%s163 + $0x21c] sm:$0xff] %v3659
        %3853 = vst [vmem:[%s163 + $0x224] sm:$0xff] %v3660
        %3854 = vst [vmem:[%s163 + $0x22c] sm:$0xff] %v3661
        %3855 = vst [vmem:[%s163 + $0x234] sm:$0xff] %v3662
        %3856 = vst [vmem:[%s163 + $0x23c] sm:$0xff] %v3663
        %3857 = vst [vmem:[%s163 + $0x244] sm:$0xff] %v3664
        %3858 = vst [vmem:[%s163 + $0x24c] sm:$0xff] %v3665
        %3859 = vst [vmem:[%s163 + $0x254] sm:$0xff] %v3666
        %3860 = vst [vmem:[%s163 + $0x25c] sm:$0xff] %v3667
        %3861 = vst [vmem:[%s163 + $0x264] sm:$0xff] %v3668
        %3862 = vst [vmem:[%s163 + $0x26c] sm:$0xff] %v3669
        %3863 = vst [vmem:[%s163 + $0x274] sm:$0xff] %v3670
        %3864 = vst [vmem:[%s163 + $0x27c] sm:$0xff] %v3671
        %3865 = vst [vmem:[%s163 + $0x284] sm:$0xff] %v3672
        %3866 = vst [vmem:[%s163 + $0x28c] sm:$0xff] %v3673
        %3867 = vst [vmem:[%s163 + $0x294] sm:$0xff] %v3674
        %3868 = vst [vmem:[%s163 + $0x29c] sm:$0xff] %v3675
        %3869 = vst [vmem:[%s163 + $0x2a4] sm:$0xff] %v3676
        %3870 = vst [vmem:[%s163 + $0x2ac] sm:$0xff] %v3677
        %3871 = vst [vmem:[%s163 + $0x2b4] sm:$0xff] %v3678
        %3872 = vst [vmem:[%s163 + $0x2bc] sm:$0xff] %v3679
        %3873 = vst [vmem:[%s163 + $0x2c4] sm:$0xff] %v3680
        %3874 = vst [vmem:[%s163 + $0x2cc] sm:$0xff] %v3681
        %3875 = vst [vmem:[%s163 + $0x2d4] sm:$0xff] %v3682
        %3876 = vst [vmem:[%s163 + $0x2dc] sm:$0xff] %v3683
        %3877 = vst [vmem:[%s163 + $0x2e4] sm:$0xff] %v3684
        %3878 = vst [vmem:[%s163 + $0x2ec] sm:$0xff] %v3685
        %3879 = vst.msk [vmem:[%s163 + $0x2f4] sm:$0xf] %vm3830, %v3686
        %s3880 = sand.u32 %s93, 1
        %s3881 = scalar_lea.sflag [#allocation3], %s3880
        %s3882 = sand.u32 %s93, 1
        %s3883 = smul.addr %s3882, 760
        %s3884 = scalar_lea.vmem [#allocation2], %s3883
        // Predicated region
        $region33: #{tpu_custom_call.1} parent=31 // pred_check
          %p3885 = pneg %p103
        $region34: #{tpu_custom_call.1} parent=31 // pred_check_branch
          %3887 = sbr.rel (%p3885) target = $region36
        $region35: #{tpu_custom_call.1} parent=31 // pred_region
          %s3889 = ssub.s32 12160, 12160
          %3890 = vsyncadd %s3881, %s3889
          %s3891 = smul.addr %s17, 190
          %s3892 = smul.addr %s3891, 64
          %s3893 = scalar_lea.hbm %s3, %s3892
          %s3894 = sshll.u32 %s3884, 4
          %s3895 = int_to_ptr.vmem [resolvable:$true] %s3894
          %3900 = dma.vmem_to_hbm [thread:$0]  %s3895, 12160, %s3893, %s3881, 6080, 6080, 380
        $region36: #{tpu_custom_call.1} parent=31 // pred_fallthru
          _
      $region32: #{tpu_custom_call.1} parent=5 // pred_fallthru
        _
      %p3901 = scmp.le.s32.totalorder 2, %s12
      // Predicated region
      $region37: #{tpu_custom_call.1} parent=5 // pred_check
        %p3902 = pneg %p3901
      $region38: #{tpu_custom_call.1} parent=5 // pred_check_branch
        %3904 = sbr.rel (%p3902) target = $region40
      $region39: #{tpu_custom_call.1} parent=5 // pred_region
        %s3905 = ssub.s32 %s12, 2
        // Predicated region
        $region41: #{tpu_custom_call.1} parent=39 // pred_check
          %p3906 = pneg %p109
        $region42: #{tpu_custom_call.1} parent=39 // pred_check_branch
          %3908 = sbr.rel (%p3906) target = $region44
        $region43: #{tpu_custom_call.1} parent=39 // pred_region
          %s3909 = sand.u32 %s94, 1
          %s3910 = scalar_lea.sflag [#allocation3], %s3909
          %s3911 = sand.u32 %s94, 1
          %s3912 = smul.addr %s3911, 760
          %s3913 = scalar_lea.vmem [#allocation2], %s3912
          %3914 = dma.done %s3910, 12160
        $region44: #{tpu_custom_call.1} parent=39 // pred_fallthru
          _
      $region40: #{tpu_custom_call.1} parent=5 // pred_fallthru
        _
    $region6: #{tpu_custom_call.1} parent=1 // loop_footer
      %s16 = sadd.s32 1, %s12
    $region7: #{tpu_custom_call.1} parent=1 // loop_footer_branch
      %11 = sbr.rel target = $region3
    $region8: #{tpu_custom_call.1} parent=1 // loop_exit
      _
    %3915 = vsyncpa [#allocation3], 1
    %s3916 = scalar_lea.sflag [#allocation3], 1
    %3917 = vsyncpa %s3916, 1

</llo_original>
